<compile_context>
chip_gen: v7x
topology: tpu7x:2x2x1
jax: 0.10.0
libtpu: 0.0.40
codegen_flags: <defaults>
</compile_context>

<pallas_src>
import jax
import jax.numpy as jnp
from jax import lax
from jax.experimental import pallas as pl
from jax.experimental.pallas import tpu as pltpu

# ---------------- small synthetic CLIP-ViT config ----------------
IMAGE_SIZE = 16
PATCH_SIZE = 8
IN_CHANNELS = 3
HIDDEN = 64
NUM_HEADS = 4
HEAD_DIM = HIDDEN // NUM_HEADS
INTERMEDIATE = 128
NUM_LAYERS = 3
NUM_PATCHES = (IMAGE_SIZE // PATCH_SIZE) ** 2   # 4
SEQ = NUM_PATCHES + 1                           # CLS + patches = 5
CKK = IN_CHANNELS * PATCH_SIZE * PATCH_SIZE     # 192
LN_EPS = 1e-5
SELECT_LAYER = -2
SELECT_FEATURE = "patch"

if SELECT_FEATURE == "patch":
    OUT_TOKENS, TOK_OFF = NUM_PATCHES, 1        # drop CLS inside the kernel
elif SELECT_FEATURE == "cls_patch":
    OUT_TOKENS, TOK_OFF = SEQ, 0
else:
    raise ValueError(f"Unexpected select feature: {SELECT_FEATURE}")


# ---------------- in-kernel helpers ----------------
def _layernorm(x, g, b):
    x = x.astype(jnp.float32)
    mean = jnp.mean(x, axis=-1, keepdims=True)
    var = jnp.mean(jnp.square(x - mean), axis=-1, keepdims=True)
    return (x - mean) * lax.rsqrt(var + LN_EPS) * g + b


# ---------------- fused tower kernel (one grid step per image) ----------------
def _tower_kernel(patches_ref, pw_ref, cls_ref, pos_ref, plg_ref, plb_ref,
                  ln1g_ref, ln1b_ref, qw_ref, qb_ref, kw_ref, kb_ref,
                  vw_ref, vb_ref, ow_ref, ob_ref, ln2g_ref, ln2b_ref,
                  f1w_ref, f1b_ref, f2w_ref, f2b_ref, o_ref):
    num_layers = ln1g_ref.shape[0]              # static (trace-time) int

    # --- embeddings: conv-as-matmul (no bias) + CLS token + pos-emb + pre-LN.
    pe = jnp.dot(patches_ref[0], pw_ref[...],
                 preferred_element_type=jnp.float32)                    # [P, D]
    emb = jnp.concatenate([cls_ref[...], pe], axis=0) + pos_ref[...]    # [S, D]
    x = _layernorm(emb, plg_ref[...], plb_ref[...])                     # f32 residual

    # --- encoder layers: statically unrolled, weights resident in VMEM.
    for l in range(num_layers):
        # self-attention block (per-head weight tiles, no lane slicing/concat)
        h = _layernorm(x, ln1g_ref[l], ln1b_ref[l]).astype(jnp.bfloat16)
        attn = jnp.zeros((SEQ, HIDDEN), jnp.float32)
        for hh in range(NUM_HEADS):
            q = (jnp.dot(h, qw_ref[l, hh],                              # scale folded in
                         preferred_element_type=jnp.float32)
                 + qb_ref[l, hh]).astype(jnp.bfloat16)                  # [S, dh]
            k = (jnp.dot(h, kw_ref[l, hh],
                         preferred_element_type=jnp.float32)
                 + kb_ref[l, hh]).astype(jnp.bfloat16)
            v = (jnp.dot(h, vw_ref[l, hh],
                         preferred_element_type=jnp.float32)
                 + vb_ref[l, hh]).astype(jnp.bfloat16)
            s = lax.dot_general(q, k, (((1,), (1,)), ((), ())),
                                preferred_element_type=jnp.float32)     # [S, S]
            s = s - jnp.max(s, axis=-1, keepdims=True)
            p = jnp.exp(s)
            p = p * pl.reciprocal(jnp.sum(p, axis=-1, keepdims=True),
                                  approx=True)
            pv = jnp.dot(p.astype(jnp.bfloat16), v,
                         preferred_element_type=jnp.float32)            # [S, dh]
            # sum per-head partial product against this head's rows of o_w
            attn = attn + jnp.dot(pv.astype(jnp.bfloat16), ow_ref[l, hh],
                                  preferred_element_type=jnp.float32)   # [S, D]
        x = x + attn + ob_ref[l]

        # MLP block: LN2 + fc1 + QuickGELU + fc2 + residual
        h2 = _layernorm(x, ln2g_ref[l], ln2b_ref[l]).astype(jnp.bfloat16)
        f = jnp.dot(h2, f1w_ref[l],
                    preferred_element_type=jnp.float32) + f1b_ref[l]    # [S, I]
        f = f * jax.nn.sigmoid(1.702 * f)                               # QuickGELU (EUP)
        x = x + jnp.dot(f.astype(jnp.bfloat16), f2w_ref[l],
                        preferred_element_type=jnp.float32) + f2b_ref[l]

    # write only the selected tokens (patch tokens for select_feature='patch')
    o_ref[0] = x[TOK_OFF:TOK_OFF + OUT_TOKENS]


# ---------------- parameter init (deterministic, synthetic) ----------------
def init_params(key):
    def nrm(k, shape, scale=0.02):
        return jax.random.normal(k, shape, jnp.float32) * scale

    keys = iter(jax.random.split(key, 16))
    L, D, I, S = NUM_LAYERS, HIDDEN, INTERMEDIATE, SEQ
    H, dh = NUM_HEADS, HEAD_DIM

    conv_w = nrm(next(keys), (D, IN_CHANNELS, PATCH_SIZE, PATCH_SIZE))
    patch_wt = conv_w.reshape(D, CKK).T.astype(jnp.bfloat16)            # [CKK, D]

    attn_scale = dh ** -0.5
    q_w = nrm(next(keys), (L, D, D)) * attn_scale   # 1/sqrt(dh) folded into Q weights
    k_w = nrm(next(keys), (L, D, D))
    v_w = nrm(next(keys), (L, D, D))
    o_w = nrm(next(keys), (L, D, D))

    def per_head_in(w):    # [L, D, D] -> [L, H, D, dh]   (Q/K/V projections)
        return w.reshape(L, D, H, dh).transpose(0, 2, 1, 3).astype(jnp.bfloat16)

    return {
        "patch_wt": patch_wt,
        "class_emb": nrm(next(keys), (1, D)),
        "pos_emb": nrm(next(keys), (S, D)),
        "pre_ln_g": jnp.ones((1, D), jnp.float32),
        "pre_ln_b": jnp.zeros((1, D), jnp.float32),
        "layers": {
            "ln1_g": jnp.ones((L, 1, D), jnp.float32),
            "ln1_b": jnp.zeros((L, 1, D), jnp.float32),
            "q_w": per_head_in(q_w),
            "q_b": jnp.zeros((L, H, 1, dh), jnp.float32),   # (would also be *attn_scale)
            "k_w": per_head_in(k_w),
            "k_b": jnp.zeros((L, H, 1, dh), jnp.float32),
            "v_w": per_head_in(v_w),
            "v_b": jnp.zeros((L, H, 1, dh), jnp.float32),
            "o_w": o_w.reshape(L, H, dh, D).astype(jnp.bfloat16),   # per-head rows
            "o_b": jnp.zeros((L, 1, D), jnp.float32),
            "ln2_g": jnp.ones((L, 1, D), jnp.float32),
            "ln2_b": jnp.zeros((L, 1, D), jnp.float32),
            "fc1_w": nrm(next(keys), (L, D, I)).astype(jnp.bfloat16),
            "fc1_b": jnp.zeros((L, 1, I), jnp.float32),
            "fc2_w": nrm(next(keys), (L, I, D)).astype(jnp.bfloat16),
            "fc2_b": jnp.zeros((L, 1, D), jnp.float32),
        },
    }


def _const_index_map(ndim):
    zeros = (0,) * ndim
    def im(b):
        return zeros
    return im


def _full_spec(a):
    return pl.BlockSpec(a.shape, _const_index_map(a.ndim))


# ---------------- forward pass ----------------
def clip_vision_tower_forward(images, params):
    """images: [B, C, H, W] float32 (NCHW, as in PyTorch)."""
    B, C, H, W = images.shape
    ps = PATCH_SIZE
    nh, nw = H // ps, W // ps
    P = nh * nw
    D = HIDDEN

    # unfold into patch rows (pure layout glue, stays in XLA); bf16 halves DMA
    patches = (images.reshape(B, C, nh, ps, nw, ps)
               .transpose(0, 2, 4, 1, 3, 5)
               .reshape(B, P, C * ps * ps)).astype(jnp.bfloat16)

    # hidden_states has NUM_LAYERS+1 entries; SELECT_LAYER=-2 -> only the
    # output after (NUM_LAYERS-1) layers is consumed. Skip the dead last layer.
    sel = SELECT_LAYER if SELECT_LAYER >= 0 else NUM_LAYERS + 1 + SELECT_LAYER
    num_layers_to_run = sel
    assert 1 <= num_layers_to_run <= NUM_LAYERS

    lp = params["layers"]
    layer_names = ["ln1_g", "ln1_b", "q_w", "q_b", "k_w", "k_b",
                   "v_w", "v_b", "o_w", "o_b", "ln2_g", "ln2_b",
                   "fc1_w", "fc1_b", "fc2_w", "fc2_b"]
    layer_arrs = [lp[n][:num_layers_to_run] for n in layer_names]

    in_specs = ([pl.BlockSpec((1, P, C * ps * ps), lambda b: (b, 0, 0)),   # patches
                 _full_spec(params["patch_wt"]),
                 _full_spec(params["class_emb"]),
                 _full_spec(params["pos_emb"]),
                 _full_spec(params["pre_ln_g"]),
                 _full_spec(params["pre_ln_b"])]
                + [_full_spec(a) for a in layer_arrs])

    feats = pl.pallas_call(
        _tower_kernel,
        out_shape=jax.ShapeDtypeStruct((B, OUT_TOKENS, D), jnp.float32),
        grid=(B,),                       # one image per grid step / TensorCore
        in_specs=in_specs,
        out_specs=pl.BlockSpec((1, OUT_TOKENS, D), lambda b: (b, 0, 0)),
        compiler_params=pltpu.CompilerParams(
            dimension_semantics=("parallel",)),
    )(patches, params["patch_wt"], params["class_emb"], params["pos_emb"],
      params["pre_ln_g"], params["pre_ln_b"], *layer_arrs)

    return feats                         # [B, num_patches, hidden]


if __name__ == "__main__":
    key = jax.random.PRNGKey(0)
    pkey, xkey = jax.random.split(key)
    params = init_params(pkey)
    images = jax.random.normal(
        xkey, (2, IN_CHANNELS, IMAGE_SIZE, IMAGE_SIZE), jnp.float32)

    fwd = jax.jit(clip_vision_tower_forward)
    feats = jax.block_until_ready(fwd(images, params))

    assert feats.shape == (2, NUM_PATCHES, HIDDEN), feats.shape
    assert bool(jnp.all(jnp.isfinite(feats)))
    print("KERNEL_OK")
</pallas_src>

<mosaic_0001>
module attributes {stable_mosaic.version = 11 : i64} {
  func.func @_tower_kernel(%arg0: i32, %arg1: memref<1x4x192xbf16, #tpu.memory_space<vmem>>, %arg2: memref<192x64xbf16, #tpu.memory_space<vmem>>, %arg3: memref<1x64xf32, #tpu.memory_space<vmem>>, %arg4: memref<5x64xf32, #tpu.memory_space<vmem>>, %arg5: memref<1x64xf32, #tpu.memory_space<vmem>>, %arg6: memref<1x64xf32, #tpu.memory_space<vmem>>, %arg7: memref<2x1x64xf32, #tpu.memory_space<vmem>>, %arg8: memref<2x1x64xf32, #tpu.memory_space<vmem>>, %arg9: memref<2x4x64x16xbf16, #tpu.memory_space<vmem>>, %arg10: memref<2x4x1x16xf32, #tpu.memory_space<vmem>>, %arg11: memref<2x4x64x16xbf16, #tpu.memory_space<vmem>>, %arg12: memref<2x4x1x16xf32, #tpu.memory_space<vmem>>, %arg13: memref<2x4x64x16xbf16, #tpu.memory_space<vmem>>, %arg14: memref<2x4x1x16xf32, #tpu.memory_space<vmem>>, %arg15: memref<2x4x16x64xbf16, #tpu.memory_space<vmem>>, %arg16: memref<2x1x64xf32, #tpu.memory_space<vmem>>, %arg17: memref<2x1x64xf32, #tpu.memory_space<vmem>>, %arg18: memref<2x1x64xf32, #tpu.memory_space<vmem>>, %arg19: memref<2x64x128xbf16, #tpu.memory_space<vmem>>, %arg20: memref<2x1x128xf32, #tpu.memory_space<vmem>>, %arg21: memref<2x128x64xbf16, #tpu.memory_space<vmem>>, %arg22: memref<2x1x64xf32, #tpu.memory_space<vmem>>, %arg23: memref<1x4x64xf32, #tpu.memory_space<vmem>>) attributes {dimension_semantics = [#tpu.dimension_semantics<parallel>], iteration_bounds = array<i64: 2>, scalar_prefetch = 0 : i64, scratch_operands = 0 : i64, tpu.core_type = #tpu.core_type<tc>, window_params = [{transform_indices = @transform_0, window_bounds = array<i64: 1, 4, 192>}, {pipeline_mode = #tpu.pipeline_mode<synchronous>, transform_indices = @transform_1, window_bounds = array<i64: 192, 64>}, {pipeline_mode = #tpu.pipeline_mode<synchronous>, transform_indices = @transform_2, window_bounds = array<i64: 1, 64>}, {pipeline_mode = #tpu.pipeline_mode<synchronous>, transform_indices = @transform_3, window_bounds = array<i64: 5, 64>}, {pipeline_mode = #tpu.pipeline_mode<synchronous>, transform_indices = @transform_4, window_bounds = array<i64: 1, 64>}, {pipeline_mode = #tpu.pipeline_mode<synchronous>, transform_indices = @transform_5, window_bounds = array<i64: 1, 64>}, {pipeline_mode = #tpu.pipeline_mode<synchronous>, transform_indices = @transform_6, window_bounds = array<i64: 2, 1, 64>}, {pipeline_mode = #tpu.pipeline_mode<synchronous>, transform_indices = @transform_7, window_bounds = array<i64: 2, 1, 64>}, {pipeline_mode = #tpu.pipeline_mode<synchronous>, transform_indices = @transform_8, window_bounds = array<i64: 2, 4, 64, 16>}, {pipeline_mode = #tpu.pipeline_mode<synchronous>, transform_indices = @transform_9, window_bounds = array<i64: 2, 4, 1, 16>}, {pipeline_mode = #tpu.pipeline_mode<synchronous>, transform_indices = @transform_10, window_bounds = array<i64: 2, 4, 64, 16>}, {pipeline_mode = #tpu.pipeline_mode<synchronous>, transform_indices = @transform_11, window_bounds = array<i64: 2, 4, 1, 16>}, {pipeline_mode = #tpu.pipeline_mode<synchronous>, transform_indices = @transform_12, window_bounds = array<i64: 2, 4, 64, 16>}, {pipeline_mode = #tpu.pipeline_mode<synchronous>, transform_indices = @transform_13, window_bounds = array<i64: 2, 4, 1, 16>}, {pipeline_mode = #tpu.pipeline_mode<synchronous>, transform_indices = @transform_14, window_bounds = array<i64: 2, 4, 16, 64>}, {pipeline_mode = #tpu.pipeline_mode<synchronous>, transform_indices = @transform_15, window_bounds = array<i64: 2, 1, 64>}, {pipeline_mode = #tpu.pipeline_mode<synchronous>, transform_indices = @transform_16, window_bounds = array<i64: 2, 1, 64>}, {pipeline_mode = #tpu.pipeline_mode<synchronous>, transform_indices = @transform_17, window_bounds = array<i64: 2, 1, 64>}, {pipeline_mode = #tpu.pipeline_mode<synchronous>, transform_indices = @transform_18, window_bounds = array<i64: 2, 64, 128>}, {pipeline_mode = #tpu.pipeline_mode<synchronous>, transform_indices = @transform_19, window_bounds = array<i64: 2, 1, 128>}, {pipeline_mode = #tpu.pipeline_mode<synchronous>, transform_indices = @transform_20, window_bounds = array<i64: 2, 128, 64>}, {pipeline_mode = #tpu.pipeline_mode<synchronous>, transform_indices = @transform_21, window_bounds = array<i64: 2, 1, 64>}, {transform_indices = @transform_22, window_bounds = array<i64: 1, 4, 64>}]} {
    %c0 = arith.constant 0 : index
    %c0_0 = arith.constant 0 : index
    %c0_1 = arith.constant 0 : index
    %0 = vector.load %arg1[%c0, %c0_0, %c0_1] : memref<1x4x192xbf16, #tpu.memory_space<vmem>>, vector<1x4x192xbf16>
    %1 = vector.shape_cast %0 : vector<1x4x192xbf16> to vector<4x192xbf16>
    %c0_2 = arith.constant 0 : index
    %c0_3 = arith.constant 0 : index
    %2 = vector.load %arg2[%c0_2, %c0_3] : memref<192x64xbf16, #tpu.memory_space<vmem>>, vector<192x64xbf16>
    %cst = arith.constant dense<0.000000e+00> : vector<4x64xf32>
    %3 = tpu.matmul %1, %2, %cst {dimension_numbers = #tpu.dot_dimension_numbers<[1], [0], [0], [1], [0, 0, 1, 1], [], []>} : vector<4x192xbf16>, vector<192x64xbf16>, vector<4x64xf32> -> vector<4x64xf32>
    %c0_4 = arith.constant 0 : index
    %c0_5 = arith.constant 0 : index
    %4 = vector.load %arg3[%c0_4, %c0_5] : memref<1x64xf32, #tpu.memory_space<vmem>>, vector<1x64xf32>
    %5 = tpu.concatenate %4, %3 in 0 : vector<1x64xf32>, vector<4x64xf32> -> vector<5x64xf32>
    %c0_6 = arith.constant 0 : index
    %c0_7 = arith.constant 0 : index
    %6 = vector.load %arg4[%c0_6, %c0_7] : memref<5x64xf32, #tpu.memory_space<vmem>>, vector<5x64xf32>
    %7 = arith.addf %5, %6 : vector<5x64xf32>
    %c0_8 = arith.constant 0 : index
    %c0_9 = arith.constant 0 : index
    %8 = vector.load %arg5[%c0_8, %c0_9] : memref<1x64xf32, #tpu.memory_space<vmem>>, vector<1x64xf32>
    %c0_10 = arith.constant 0 : index
    %c0_11 = arith.constant 0 : index
    %9 = vector.load %arg6[%c0_10, %c0_11] : memref<1x64xf32, #tpu.memory_space<vmem>>, vector<1x64xf32>
    %cst_12 = arith.constant dense<0.000000e+00> : vector<5xf32>
    %10 = vector.multi_reduction <add>, %7, %cst_12 [1] : vector<5x64xf32> to vector<5xf32>
    %11 = vector.shape_cast %10 : vector<5xf32> to vector<5x1xf32>
    %cst_13 = arith.constant 6.400000e+01 : f32
    %12 = vector.broadcast %cst_13 : f32 to vector<5x1xf32>
    %13 = arith.divf %11, %12 : vector<5x1xf32>
    %14 = vector.broadcast %13 : vector<5x1xf32> to vector<5x64xf32>
    %15 = arith.subf %7, %14 : vector<5x64xf32>
    %16 = arith.mulf %15, %15 : vector<5x64xf32>
    %cst_14 = arith.constant dense<0.000000e+00> : vector<5xf32>
    %17 = vector.multi_reduction <add>, %16, %cst_14 [1] : vector<5x64xf32> to vector<5xf32>
    %18 = vector.shape_cast %17 : vector<5xf32> to vector<5x1xf32>
    %cst_15 = arith.constant 6.400000e+01 : f32
    %19 = vector.broadcast %cst_15 : f32 to vector<5x1xf32>
    %20 = arith.divf %18, %19 : vector<5x1xf32>
    %21 = vector.broadcast %13 : vector<5x1xf32> to vector<5x64xf32>
    %22 = arith.subf %7, %21 : vector<5x64xf32>
    %cst_16 = arith.constant 9.99999974E-6 : f32
    %23 = vector.broadcast %cst_16 : f32 to vector<5x1xf32>
    %24 = arith.addf %20, %23 : vector<5x1xf32>
    %25 = math.rsqrt %24 : vector<5x1xf32>
    %26 = vector.broadcast %25 : vector<5x1xf32> to vector<5x64xf32>
    %27 = arith.mulf %22, %26 : vector<5x64xf32>
    %28 = vector.broadcast %8 : vector<1x64xf32> to vector<5x64xf32>
    %29 = arith.mulf %27, %28 : vector<5x64xf32>
    %30 = vector.broadcast %9 : vector<1x64xf32> to vector<5x64xf32>
    %31 = arith.addf %29, %30 : vector<5x64xf32>
    %c0_17 = arith.constant 0 : index
    %c0_18 = arith.constant 0 : index
    %c0_19 = arith.constant 0 : index
    %32 = vector.load %arg7[%c0_17, %c0_18, %c0_19] : memref<2x1x64xf32, #tpu.memory_space<vmem>>, vector<1x1x64xf32>
    %33 = vector.shape_cast %32 : vector<1x1x64xf32> to vector<1x64xf32>
    %c0_20 = arith.constant 0 : index
    %c0_21 = arith.constant 0 : index
    %c0_22 = arith.constant 0 : index
    %34 = vector.load %arg8[%c0_20, %c0_21, %c0_22] : memref<2x1x64xf32, #tpu.memory_space<vmem>>, vector<1x1x64xf32>
    %35 = vector.shape_cast %34 : vector<1x1x64xf32> to vector<1x64xf32>
    %cst_23 = arith.constant dense<0.000000e+00> : vector<5xf32>
    %36 = vector.multi_reduction <add>, %31, %cst_23 [1] : vector<5x64xf32> to vector<5xf32>
    %37 = vector.shape_cast %36 : vector<5xf32> to vector<5x1xf32>
    %cst_24 = arith.constant 6.400000e+01 : f32
    %38 = vector.broadcast %cst_24 : f32 to vector<5x1xf32>
    %39 = arith.divf %37, %38 : vector<5x1xf32>
    %40 = vector.broadcast %39 : vector<5x1xf32> to vector<5x64xf32>
    %41 = arith.subf %31, %40 : vector<5x64xf32>
    %42 = arith.mulf %41, %41 : vector<5x64xf32>
    %cst_25 = arith.constant dense<0.000000e+00> : vector<5xf32>
    %43 = vector.multi_reduction <add>, %42, %cst_25 [1] : vector<5x64xf32> to vector<5xf32>
    %44 = vector.shape_cast %43 : vector<5xf32> to vector<5x1xf32>
    %cst_26 = arith.constant 6.400000e+01 : f32
    %45 = vector.broadcast %cst_26 : f32 to vector<5x1xf32>
    %46 = arith.divf %44, %45 : vector<5x1xf32>
    %47 = vector.broadcast %39 : vector<5x1xf32> to vector<5x64xf32>
    %48 = arith.subf %31, %47 : vector<5x64xf32>
    %cst_27 = arith.constant 9.99999974E-6 : f32
    %49 = vector.broadcast %cst_27 : f32 to vector<5x1xf32>
    %50 = arith.addf %46, %49 : vector<5x1xf32>
    %51 = math.rsqrt %50 : vector<5x1xf32>
    %52 = vector.broadcast %51 : vector<5x1xf32> to vector<5x64xf32>
    %53 = arith.mulf %48, %52 : vector<5x64xf32>
    %54 = vector.broadcast %33 : vector<1x64xf32> to vector<5x64xf32>
    %55 = arith.mulf %53, %54 : vector<5x64xf32>
    %56 = vector.broadcast %35 : vector<1x64xf32> to vector<5x64xf32>
    %57 = arith.addf %55, %56 : vector<5x64xf32>
    %58 = arith.truncf %57 : vector<5x64xf32> to vector<5x64xbf16>
    %cst_28 = arith.constant 0.000000e+00 : f32
    %59 = vector.broadcast %cst_28 : f32 to vector<5x64xf32>
    %c0_29 = arith.constant 0 : index
    %c0_30 = arith.constant 0 : index
    %c0_31 = arith.constant 0 : index
    %c0_32 = arith.constant 0 : index
    %60 = vector.load %arg9[%c0_29, %c0_30, %c0_31, %c0_32] : memref<2x4x64x16xbf16, #tpu.memory_space<vmem>>, vector<1x1x64x16xbf16>
    %61 = vector.shape_cast %60 : vector<1x1x64x16xbf16> to vector<64x16xbf16>
    %cst_33 = arith.constant dense<0.000000e+00> : vector<5x16xf32>
    %62 = tpu.matmul %58, %61, %cst_33 {dimension_numbers = #tpu.dot_dimension_numbers<[1], [0], [0], [1], [0, 0, 1, 1], [], []>} : vector<5x64xbf16>, vector<64x16xbf16>, vector<5x16xf32> -> vector<5x16xf32>
    %c0_34 = arith.constant 0 : index
    %c0_35 = arith.constant 0 : index
    %c0_36 = arith.constant 0 : index
    %c0_37 = arith.constant 0 : index
    %63 = vector.load %arg10[%c0_34, %c0_35, %c0_36, %c0_37] : memref<2x4x1x16xf32, #tpu.memory_space<vmem>>, vector<1x1x1x16xf32>
    %64 = vector.shape_cast %63 : vector<1x1x1x16xf32> to vector<1x16xf32>
    %65 = vector.broadcast %64 : vector<1x16xf32> to vector<5x16xf32>
    %66 = arith.addf %62, %65 : vector<5x16xf32>
    %67 = arith.truncf %66 : vector<5x16xf32> to vector<5x16xbf16>
    %c0_38 = arith.constant 0 : index
    %c0_39 = arith.constant 0 : index
    %c0_40 = arith.constant 0 : index
    %c0_41 = arith.constant 0 : index
    %68 = vector.load %arg11[%c0_38, %c0_39, %c0_40, %c0_41] : memref<2x4x64x16xbf16, #tpu.memory_space<vmem>>, vector<1x1x64x16xbf16>
    %69 = vector.shape_cast %68 : vector<1x1x64x16xbf16> to vector<64x16xbf16>
    %cst_42 = arith.constant dense<0.000000e+00> : vector<5x16xf32>
    %70 = tpu.matmul %58, %69, %cst_42 {dimension_numbers = #tpu.dot_dimension_numbers<[1], [0], [0], [1], [0, 0, 1, 1], [], []>} : vector<5x64xbf16>, vector<64x16xbf16>, vector<5x16xf32> -> vector<5x16xf32>
    %c0_43 = arith.constant 0 : index
    %c0_44 = arith.constant 0 : index
    %c0_45 = arith.constant 0 : index
    %c0_46 = arith.constant 0 : index
    %71 = vector.load %arg12[%c0_43, %c0_44, %c0_45, %c0_46] : memref<2x4x1x16xf32, #tpu.memory_space<vmem>>, vector<1x1x1x16xf32>
    %72 = vector.shape_cast %71 : vector<1x1x1x16xf32> to vector<1x16xf32>
    %73 = vector.broadcast %72 : vector<1x16xf32> to vector<5x16xf32>
    %74 = arith.addf %70, %73 : vector<5x16xf32>
    %75 = arith.truncf %74 : vector<5x16xf32> to vector<5x16xbf16>
    %c0_47 = arith.constant 0 : index
    %c0_48 = arith.constant 0 : index
    %c0_49 = arith.constant 0 : index
    %c0_50 = arith.constant 0 : index
    %76 = vector.load %arg13[%c0_47, %c0_48, %c0_49, %c0_50] : memref<2x4x64x16xbf16, #tpu.memory_space<vmem>>, vector<1x1x64x16xbf16>
    %77 = vector.shape_cast %76 : vector<1x1x64x16xbf16> to vector<64x16xbf16>
    %cst_51 = arith.constant dense<0.000000e+00> : vector<5x16xf32>
    %78 = tpu.matmul %58, %77, %cst_51 {dimension_numbers = #tpu.dot_dimension_numbers<[1], [0], [0], [1], [0, 0, 1, 1], [], []>} : vector<5x64xbf16>, vector<64x16xbf16>, vector<5x16xf32> -> vector<5x16xf32>
    %c0_52 = arith.constant 0 : index
    %c0_53 = arith.constant 0 : index
    %c0_54 = arith.constant 0 : index
    %c0_55 = arith.constant 0 : index
    %79 = vector.load %arg14[%c0_52, %c0_53, %c0_54, %c0_55] : memref<2x4x1x16xf32, #tpu.memory_space<vmem>>, vector<1x1x1x16xf32>
    %80 = vector.shape_cast %79 : vector<1x1x1x16xf32> to vector<1x16xf32>
    %81 = vector.broadcast %80 : vector<1x16xf32> to vector<5x16xf32>
    %82 = arith.addf %78, %81 : vector<5x16xf32>
    %83 = arith.truncf %82 : vector<5x16xf32> to vector<5x16xbf16>
    %cst_56 = arith.constant dense<0.000000e+00> : vector<5x5xf32>
    %84 = tpu.matmul %67, %75, %cst_56 {dimension_numbers = #tpu.dot_dimension_numbers<[1], [1], [0], [0], [0, 0, 1, 0], [], []>} : vector<5x16xbf16>, vector<5x16xbf16>, vector<5x5xf32> -> vector<5x5xf32>
    %cst_57 = arith.constant dense<0xFF800000> : vector<5xf32>
    %85 = vector.multi_reduction <maximumf>, %84, %cst_57 [1] : vector<5x5xf32> to vector<5xf32>
    %86 = vector.shape_cast %85 : vector<5xf32> to vector<5x1xf32>
    %87 = vector.broadcast %86 : vector<5x1xf32> to vector<5x5xf32>
    %88 = arith.subf %84, %87 : vector<5x5xf32>
    %89 = math.exp %88 : vector<5x5xf32>
    %cst_58 = arith.constant dense<0.000000e+00> : vector<5xf32>
    %90 = vector.multi_reduction <add>, %89, %cst_58 [1] : vector<5x5xf32> to vector<5xf32>
    %91 = vector.shape_cast %90 : vector<5xf32> to vector<5x1xf32>
    %92 = tpu.reciprocal %91 {approx = true} : vector<5x1xf32> -> vector<5x1xf32>
    %93 = vector.broadcast %92 : vector<5x1xf32> to vector<5x5xf32>
    %94 = arith.mulf %89, %93 : vector<5x5xf32>
    %95 = arith.truncf %94 : vector<5x5xf32> to vector<5x5xbf16>
    %cst_59 = arith.constant dense<0.000000e+00> : vector<5x16xf32>
    %96 = tpu.matmul %95, %83, %cst_59 {dimension_numbers = #tpu.dot_dimension_numbers<[1], [0], [0], [1], [0, 0, 1, 1], [], []>} : vector<5x5xbf16>, vector<5x16xbf16>, vector<5x16xf32> -> vector<5x16xf32>
    %97 = arith.truncf %96 : vector<5x16xf32> to vector<5x16xbf16>
    %c0_60 = arith.constant 0 : index
    %c0_61 = arith.constant 0 : index
    %c0_62 = arith.constant 0 : index
    %c0_63 = arith.constant 0 : index
    %98 = vector.load %arg15[%c0_60, %c0_61, %c0_62, %c0_63] : memref<2x4x16x64xbf16, #tpu.memory_space<vmem>>, vector<1x1x16x64xbf16>
    %99 = vector.shape_cast %98 : vector<1x1x16x64xbf16> to vector<16x64xbf16>
    %cst_64 = arith.constant dense<0.000000e+00> : vector<5x64xf32>
    %100 = tpu.matmul %97, %99, %cst_64 {dimension_numbers = #tpu.dot_dimension_numbers<[1], [0], [0], [1], [0, 0, 1, 1], [], []>} : vector<5x16xbf16>, vector<16x64xbf16>, vector<5x64xf32> -> vector<5x64xf32>
    %101 = arith.addf %59, %100 : vector<5x64xf32>
    %c0_65 = arith.constant 0 : index
    %c1 = arith.constant 1 : index
    %c0_66 = arith.constant 0 : index
    %c0_67 = arith.constant 0 : index
    %102 = vector.load %arg9[%c0_65, %c1, %c0_66, %c0_67] : memref<2x4x64x16xbf16, #tpu.memory_space<vmem>>, vector<1x1x64x16xbf16>
    %103 = vector.shape_cast %102 : vector<1x1x64x16xbf16> to vector<64x16xbf16>
    %cst_68 = arith.constant dense<0.000000e+00> : vector<5x16xf32>
    %104 = tpu.matmul %58, %103, %cst_68 {dimension_numbers = #tpu.dot_dimension_numbers<[1], [0], [0], [1], [0, 0, 1, 1], [], []>} : vector<5x64xbf16>, vector<64x16xbf16>, vector<5x16xf32> -> vector<5x16xf32>
    %c0_69 = arith.constant 0 : index
    %c1_70 = arith.constant 1 : index
    %c0_71 = arith.constant 0 : index
    %c0_72 = arith.constant 0 : index
    %105 = vector.load %arg10[%c0_69, %c1_70, %c0_71, %c0_72] : memref<2x4x1x16xf32, #tpu.memory_space<vmem>>, vector<1x1x1x16xf32>
    %106 = vector.shape_cast %105 : vector<1x1x1x16xf32> to vector<1x16xf32>
    %107 = vector.broadcast %106 : vector<1x16xf32> to vector<5x16xf32>
    %108 = arith.addf %104, %107 : vector<5x16xf32>
    %109 = arith.truncf %108 : vector<5x16xf32> to vector<5x16xbf16>
    %c0_73 = arith.constant 0 : index
    %c1_74 = arith.constant 1 : index
    %c0_75 = arith.constant 0 : index
    %c0_76 = arith.constant 0 : index
    %110 = vector.load %arg11[%c0_73, %c1_74, %c0_75, %c0_76] : memref<2x4x64x16xbf16, #tpu.memory_space<vmem>>, vector<1x1x64x16xbf16>
    %111 = vector.shape_cast %110 : vector<1x1x64x16xbf16> to vector<64x16xbf16>
    %cst_77 = arith.constant dense<0.000000e+00> : vector<5x16xf32>
    %112 = tpu.matmul %58, %111, %cst_77 {dimension_numbers = #tpu.dot_dimension_numbers<[1], [0], [0], [1], [0, 0, 1, 1], [], []>} : vector<5x64xbf16>, vector<64x16xbf16>, vector<5x16xf32> -> vector<5x16xf32>
    %c0_78 = arith.constant 0 : index
    %c1_79 = arith.constant 1 : index
    %c0_80 = arith.constant 0 : index
    %c0_81 = arith.constant 0 : index
    %113 = vector.load %arg12[%c0_78, %c1_79, %c0_80, %c0_81] : memref<2x4x1x16xf32, #tpu.memory_space<vmem>>, vector<1x1x1x16xf32>
    %114 = vector.shape_cast %113 : vector<1x1x1x16xf32> to vector<1x16xf32>
    %115 = vector.broadcast %114 : vector<1x16xf32> to vector<5x16xf32>
    %116 = arith.addf %112, %115 : vector<5x16xf32>
    %117 = arith.truncf %116 : vector<5x16xf32> to vector<5x16xbf16>
    %c0_82 = arith.constant 0 : index
    %c1_83 = arith.constant 1 : index
    %c0_84 = arith.constant 0 : index
    %c0_85 = arith.constant 0 : index
    %118 = vector.load %arg13[%c0_82, %c1_83, %c0_84, %c0_85] : memref<2x4x64x16xbf16, #tpu.memory_space<vmem>>, vector<1x1x64x16xbf16>
    %119 = vector.shape_cast %118 : vector<1x1x64x16xbf16> to vector<64x16xbf16>
    %cst_86 = arith.constant dense<0.000000e+00> : vector<5x16xf32>
    %120 = tpu.matmul %58, %119, %cst_86 {dimension_numbers = #tpu.dot_dimension_numbers<[1], [0], [0], [1], [0, 0, 1, 1], [], []>} : vector<5x64xbf16>, vector<64x16xbf16>, vector<5x16xf32> -> vector<5x16xf32>
    %c0_87 = arith.constant 0 : index
    %c1_88 = arith.constant 1 : index
    %c0_89 = arith.constant 0 : index
    %c0_90 = arith.constant 0 : index
    %121 = vector.load %arg14[%c0_87, %c1_88, %c0_89, %c0_90] : memref<2x4x1x16xf32, #tpu.memory_space<vmem>>, vector<1x1x1x16xf32>
    %122 = vector.shape_cast %121 : vector<1x1x1x16xf32> to vector<1x16xf32>
    %123 = vector.broadcast %122 : vector<1x16xf32> to vector<5x16xf32>
    %124 = arith.addf %120, %123 : vector<5x16xf32>
    %125 = arith.truncf %124 : vector<5x16xf32> to vector<5x16xbf16>
    %cst_91 = arith.constant dense<0.000000e+00> : vector<5x5xf32>
    %126 = tpu.matmul %109, %117, %cst_91 {dimension_numbers = #tpu.dot_dimension_numbers<[1], [1], [0], [0], [0, 0, 1, 0], [], []>} : vector<5x16xbf16>, vector<5x16xbf16>, vector<5x5xf32> -> vector<5x5xf32>
    %cst_92 = arith.constant dense<0xFF800000> : vector<5xf32>
    %127 = vector.multi_reduction <maximumf>, %126, %cst_92 [1] : vector<5x5xf32> to vector<5xf32>
    %128 = vector.shape_cast %127 : vector<5xf32> to vector<5x1xf32>
    %129 = vector.broadcast %128 : vector<5x1xf32> to vector<5x5xf32>
    %130 = arith.subf %126, %129 : vector<5x5xf32>
    %131 = math.exp %130 : vector<5x5xf32>
    %cst_93 = arith.constant dense<0.000000e+00> : vector<5xf32>
    %132 = vector.multi_reduction <add>, %131, %cst_93 [1] : vector<5x5xf32> to vector<5xf32>
    %133 = vector.shape_cast %132 : vector<5xf32> to vector<5x1xf32>
    %134 = tpu.reciprocal %133 {approx = true} : vector<5x1xf32> -> vector<5x1xf32>
    %135 = vector.broadcast %134 : vector<5x1xf32> to vector<5x5xf32>
    %136 = arith.mulf %131, %135 : vector<5x5xf32>
    %137 = arith.truncf %136 : vector<5x5xf32> to vector<5x5xbf16>
    %cst_94 = arith.constant dense<0.000000e+00> : vector<5x16xf32>
    %138 = tpu.matmul %137, %125, %cst_94 {dimension_numbers = #tpu.dot_dimension_numbers<[1], [0], [0], [1], [0, 0, 1, 1], [], []>} : vector<5x5xbf16>, vector<5x16xbf16>, vector<5x16xf32> -> vector<5x16xf32>
    %139 = arith.truncf %138 : vector<5x16xf32> to vector<5x16xbf16>
    %c0_95 = arith.constant 0 : index
    %c1_96 = arith.constant 1 : index
    %c0_97 = arith.constant 0 : index
    %c0_98 = arith.constant 0 : index
    %140 = vector.load %arg15[%c0_95, %c1_96, %c0_97, %c0_98] : memref<2x4x16x64xbf16, #tpu.memory_space<vmem>>, vector<1x1x16x64xbf16>
    %141 = vector.shape_cast %140 : vector<1x1x16x64xbf16> to vector<16x64xbf16>
    %cst_99 = arith.constant dense<0.000000e+00> : vector<5x64xf32>
    %142 = tpu.matmul %139, %141, %cst_99 {dimension_numbers = #tpu.dot_dimension_numbers<[1], [0], [0], [1], [0, 0, 1, 1], [], []>} : vector<5x16xbf16>, vector<16x64xbf16>, vector<5x64xf32> -> vector<5x64xf32>
    %143 = arith.addf %101, %142 : vector<5x64xf32>
    %c0_100 = arith.constant 0 : index
    %c2 = arith.constant 2 : index
    %c0_101 = arith.constant 0 : index
    %c0_102 = arith.constant 0 : index
    %144 = vector.load %arg9[%c0_100, %c2, %c0_101, %c0_102] : memref<2x4x64x16xbf16, #tpu.memory_space<vmem>>, vector<1x1x64x16xbf16>
    %145 = vector.shape_cast %144 : vector<1x1x64x16xbf16> to vector<64x16xbf16>
    %cst_103 = arith.constant dense<0.000000e+00> : vector<5x16xf32>
    %146 = tpu.matmul %58, %145, %cst_103 {dimension_numbers = #tpu.dot_dimension_numbers<[1], [0], [0], [1], [0, 0, 1, 1], [], []>} : vector<5x64xbf16>, vector<64x16xbf16>, vector<5x16xf32> -> vector<5x16xf32>
    %c0_104 = arith.constant 0 : index
    %c2_105 = arith.constant 2 : index
    %c0_106 = arith.constant 0 : index
    %c0_107 = arith.constant 0 : index
    %147 = vector.load %arg10[%c0_104, %c2_105, %c0_106, %c0_107] : memref<2x4x1x16xf32, #tpu.memory_space<vmem>>, vector<1x1x1x16xf32>
    %148 = vector.shape_cast %147 : vector<1x1x1x16xf32> to vector<1x16xf32>
    %149 = vector.broadcast %148 : vector<1x16xf32> to vector<5x16xf32>
    %150 = arith.addf %146, %149 : vector<5x16xf32>
    %151 = arith.truncf %150 : vector<5x16xf32> to vector<5x16xbf16>
    %c0_108 = arith.constant 0 : index
    %c2_109 = arith.constant 2 : index
    %c0_110 = arith.constant 0 : index
    %c0_111 = arith.constant 0 : index
    %152 = vector.load %arg11[%c0_108, %c2_109, %c0_110, %c0_111] : memref<2x4x64x16xbf16, #tpu.memory_space<vmem>>, vector<1x1x64x16xbf16>
    %153 = vector.shape_cast %152 : vector<1x1x64x16xbf16> to vector<64x16xbf16>
    %cst_112 = arith.constant dense<0.000000e+00> : vector<5x16xf32>
    %154 = tpu.matmul %58, %153, %cst_112 {dimension_numbers = #tpu.dot_dimension_numbers<[1], [0], [0], [1], [0, 0, 1, 1], [], []>} : vector<5x64xbf16>, vector<64x16xbf16>, vector<5x16xf32> -> vector<5x16xf32>
    %c0_113 = arith.constant 0 : index
    %c2_114 = arith.constant 2 : index
    %c0_115 = arith.constant 0 : index
    %c0_116 = arith.constant 0 : index
    %155 = vector.load %arg12[%c0_113, %c2_114, %c0_115, %c0_116] : memref<2x4x1x16xf32, #tpu.memory_space<vmem>>, vector<1x1x1x16xf32>
    %156 = vector.shape_cast %155 : vector<1x1x1x16xf32> to vector<1x16xf32>
    %157 = vector.broadcast %156 : vector<1x16xf32> to vector<5x16xf32>
    %158 = arith.addf %154, %157 : vector<5x16xf32>
    %159 = arith.truncf %158 : vector<5x16xf32> to vector<5x16xbf16>
    %c0_117 = arith.constant 0 : index
    %c2_118 = arith.constant 2 : index
    %c0_119 = arith.constant 0 : index
    %c0_120 = arith.constant 0 : index
    %160 = vector.load %arg13[%c0_117, %c2_118, %c0_119, %c0_120] : memref<2x4x64x16xbf16, #tpu.memory_space<vmem>>, vector<1x1x64x16xbf16>
    %161 = vector.shape_cast %160 : vector<1x1x64x16xbf16> to vector<64x16xbf16>
    %cst_121 = arith.constant dense<0.000000e+00> : vector<5x16xf32>
    %162 = tpu.matmul %58, %161, %cst_121 {dimension_numbers = #tpu.dot_dimension_numbers<[1], [0], [0], [1], [0, 0, 1, 1], [], []>} : vector<5x64xbf16>, vector<64x16xbf16>, vector<5x16xf32> -> vector<5x16xf32>
    %c0_122 = arith.constant 0 : index
    %c2_123 = arith.constant 2 : index
    %c0_124 = arith.constant 0 : index
    %c0_125 = arith.constant 0 : index
    %163 = vector.load %arg14[%c0_122, %c2_123, %c0_124, %c0_125] : memref<2x4x1x16xf32, #tpu.memory_space<vmem>>, vector<1x1x1x16xf32>
    %164 = vector.shape_cast %163 : vector<1x1x1x16xf32> to vector<1x16xf32>
    %165 = vector.broadcast %164 : vector<1x16xf32> to vector<5x16xf32>
    %166 = arith.addf %162, %165 : vector<5x16xf32>
    %167 = arith.truncf %166 : vector<5x16xf32> to vector<5x16xbf16>
    %cst_126 = arith.constant dense<0.000000e+00> : vector<5x5xf32>
    %168 = tpu.matmul %151, %159, %cst_126 {dimension_numbers = #tpu.dot_dimension_numbers<[1], [1], [0], [0], [0, 0, 1, 0], [], []>} : vector<5x16xbf16>, vector<5x16xbf16>, vector<5x5xf32> -> vector<5x5xf32>
    %cst_127 = arith.constant dense<0xFF800000> : vector<5xf32>
    %169 = vector.multi_reduction <maximumf>, %168, %cst_127 [1] : vector<5x5xf32> to vector<5xf32>
    %170 = vector.shape_cast %169 : vector<5xf32> to vector<5x1xf32>
    %171 = vector.broadcast %170 : vector<5x1xf32> to vector<5x5xf32>
    %172 = arith.subf %168, %171 : vector<5x5xf32>
    %173 = math.exp %172 : vector<5x5xf32>
    %cst_128 = arith.constant dense<0.000000e+00> : vector<5xf32>
    %174 = vector.multi_reduction <add>, %173, %cst_128 [1] : vector<5x5xf32> to vector<5xf32>
    %175 = vector.shape_cast %174 : vector<5xf32> to vector<5x1xf32>
    %176 = tpu.reciprocal %175 {approx = true} : vector<5x1xf32> -> vector<5x1xf32>
    %177 = vector.broadcast %176 : vector<5x1xf32> to vector<5x5xf32>
    %178 = arith.mulf %173, %177 : vector<5x5xf32>
    %179 = arith.truncf %178 : vector<5x5xf32> to vector<5x5xbf16>
    %cst_129 = arith.constant dense<0.000000e+00> : vector<5x16xf32>
    %180 = tpu.matmul %179, %167, %cst_129 {dimension_numbers = #tpu.dot_dimension_numbers<[1], [0], [0], [1], [0, 0, 1, 1], [], []>} : vector<5x5xbf16>, vector<5x16xbf16>, vector<5x16xf32> -> vector<5x16xf32>
    %181 = arith.truncf %180 : vector<5x16xf32> to vector<5x16xbf16>
    %c0_130 = arith.constant 0 : index
    %c2_131 = arith.constant 2 : index
    %c0_132 = arith.constant 0 : index
    %c0_133 = arith.constant 0 : index
    %182 = vector.load %arg15[%c0_130, %c2_131, %c0_132, %c0_133] : memref<2x4x16x64xbf16, #tpu.memory_space<vmem>>, vector<1x1x16x64xbf16>
    %183 = vector.shape_cast %182 : vector<1x1x16x64xbf16> to vector<16x64xbf16>
    %cst_134 = arith.constant dense<0.000000e+00> : vector<5x64xf32>
    %184 = tpu.matmul %181, %183, %cst_134 {dimension_numbers = #tpu.dot_dimension_numbers<[1], [0], [0], [1], [0, 0, 1, 1], [], []>} : vector<5x16xbf16>, vector<16x64xbf16>, vector<5x64xf32> -> vector<5x64xf32>
    %185 = arith.addf %143, %184 : vector<5x64xf32>
    %c0_135 = arith.constant 0 : index
    %c3 = arith.constant 3 : index
    %c0_136 = arith.constant 0 : index
    %c0_137 = arith.constant 0 : index
    %186 = vector.load %arg9[%c0_135, %c3, %c0_136, %c0_137] : memref<2x4x64x16xbf16, #tpu.memory_space<vmem>>, vector<1x1x64x16xbf16>
    %187 = vector.shape_cast %186 : vector<1x1x64x16xbf16> to vector<64x16xbf16>
    %cst_138 = arith.constant dense<0.000000e+00> : vector<5x16xf32>
    %188 = tpu.matmul %58, %187, %cst_138 {dimension_numbers = #tpu.dot_dimension_numbers<[1], [0], [0], [1], [0, 0, 1, 1], [], []>} : vector<5x64xbf16>, vector<64x16xbf16>, vector<5x16xf32> -> vector<5x16xf32>
    %c0_139 = arith.constant 0 : index
    %c3_140 = arith.constant 3 : index
    %c0_141 = arith.constant 0 : index
    %c0_142 = arith.constant 0 : index
    %189 = vector.load %arg10[%c0_139, %c3_140, %c0_141, %c0_142] : memref<2x4x1x16xf32, #tpu.memory_space<vmem>>, vector<1x1x1x16xf32>
    %190 = vector.shape_cast %189 : vector<1x1x1x16xf32> to vector<1x16xf32>
    %191 = vector.broadcast %190 : vector<1x16xf32> to vector<5x16xf32>
    %192 = arith.addf %188, %191 : vector<5x16xf32>
    %193 = arith.truncf %192 : vector<5x16xf32> to vector<5x16xbf16>
    %c0_143 = arith.constant 0 : index
    %c3_144 = arith.constant 3 : index
    %c0_145 = arith.constant 0 : index
    %c0_146 = arith.constant 0 : index
    %194 = vector.load %arg11[%c0_143, %c3_144, %c0_145, %c0_146] : memref<2x4x64x16xbf16, #tpu.memory_space<vmem>>, vector<1x1x64x16xbf16>
    %195 = vector.shape_cast %194 : vector<1x1x64x16xbf16> to vector<64x16xbf16>
    %cst_147 = arith.constant dense<0.000000e+00> : vector<5x16xf32>
    %196 = tpu.matmul %58, %195, %cst_147 {dimension_numbers = #tpu.dot_dimension_numbers<[1], [0], [0], [1], [0, 0, 1, 1], [], []>} : vector<5x64xbf16>, vector<64x16xbf16>, vector<5x16xf32> -> vector<5x16xf32>
    %c0_148 = arith.constant 0 : index
    %c3_149 = arith.constant 3 : index
    %c0_150 = arith.constant 0 : index
    %c0_151 = arith.constant 0 : index
    %197 = vector.load %arg12[%c0_148, %c3_149, %c0_150, %c0_151] : memref<2x4x1x16xf32, #tpu.memory_space<vmem>>, vector<1x1x1x16xf32>
    %198 = vector.shape_cast %197 : vector<1x1x1x16xf32> to vector<1x16xf32>
    %199 = vector.broadcast %198 : vector<1x16xf32> to vector<5x16xf32>
    %200 = arith.addf %196, %199 : vector<5x16xf32>
    %201 = arith.truncf %200 : vector<5x16xf32> to vector<5x16xbf16>
    %c0_152 = arith.constant 0 : index
    %c3_153 = arith.constant 3 : index
    %c0_154 = arith.constant 0 : index
    %c0_155 = arith.constant 0 : index
    %202 = vector.load %arg13[%c0_152, %c3_153, %c0_154, %c0_155] : memref<2x4x64x16xbf16, #tpu.memory_space<vmem>>, vector<1x1x64x16xbf16>
    %203 = vector.shape_cast %202 : vector<1x1x64x16xbf16> to vector<64x16xbf16>
    %cst_156 = arith.constant dense<0.000000e+00> : vector<5x16xf32>
    %204 = tpu.matmul %58, %203, %cst_156 {dimension_numbers = #tpu.dot_dimension_numbers<[1], [0], [0], [1], [0, 0, 1, 1], [], []>} : vector<5x64xbf16>, vector<64x16xbf16>, vector<5x16xf32> -> vector<5x16xf32>
    %c0_157 = arith.constant 0 : index
    %c3_158 = arith.constant 3 : index
    %c0_159 = arith.constant 0 : index
    %c0_160 = arith.constant 0 : index
    %205 = vector.load %arg14[%c0_157, %c3_158, %c0_159, %c0_160] : memref<2x4x1x16xf32, #tpu.memory_space<vmem>>, vector<1x1x1x16xf32>
    %206 = vector.shape_cast %205 : vector<1x1x1x16xf32> to vector<1x16xf32>
    %207 = vector.broadcast %206 : vector<1x16xf32> to vector<5x16xf32>
    %208 = arith.addf %204, %207 : vector<5x16xf32>
    %209 = arith.truncf %208 : vector<5x16xf32> to vector<5x16xbf16>
    %cst_161 = arith.constant dense<0.000000e+00> : vector<5x5xf32>
    %210 = tpu.matmul %193, %201, %cst_161 {dimension_numbers = #tpu.dot_dimension_numbers<[1], [1], [0], [0], [0, 0, 1, 0], [], []>} : vector<5x16xbf16>, vector<5x16xbf16>, vector<5x5xf32> -> vector<5x5xf32>
    %cst_162 = arith.constant dense<0xFF800000> : vector<5xf32>
    %211 = vector.multi_reduction <maximumf>, %210, %cst_162 [1] : vector<5x5xf32> to vector<5xf32>
    %212 = vector.shape_cast %211 : vector<5xf32> to vector<5x1xf32>
    %213 = vector.broadcast %212 : vector<5x1xf32> to vector<5x5xf32>
    %214 = arith.subf %210, %213 : vector<5x5xf32>
    %215 = math.exp %214 : vector<5x5xf32>
    %cst_163 = arith.constant dense<0.000000e+00> : vector<5xf32>
    %216 = vector.multi_reduction <add>, %215, %cst_163 [1] : vector<5x5xf32> to vector<5xf32>
    %217 = vector.shape_cast %216 : vector<5xf32> to vector<5x1xf32>
    %218 = tpu.reciprocal %217 {approx = true} : vector<5x1xf32> -> vector<5x1xf32>
    %219 = vector.broadcast %218 : vector<5x1xf32> to vector<5x5xf32>
    %220 = arith.mulf %215, %219 : vector<5x5xf32>
    %221 = arith.truncf %220 : vector<5x5xf32> to vector<5x5xbf16>
    %cst_164 = arith.constant dense<0.000000e+00> : vector<5x16xf32>
    %222 = tpu.matmul %221, %209, %cst_164 {dimension_numbers = #tpu.dot_dimension_numbers<[1], [0], [0], [1], [0, 0, 1, 1], [], []>} : vector<5x5xbf16>, vector<5x16xbf16>, vector<5x16xf32> -> vector<5x16xf32>
    %223 = arith.truncf %222 : vector<5x16xf32> to vector<5x16xbf16>
    %c0_165 = arith.constant 0 : index
    %c3_166 = arith.constant 3 : index
    %c0_167 = arith.constant 0 : index
    %c0_168 = arith.constant 0 : index
    %224 = vector.load %arg15[%c0_165, %c3_166, %c0_167, %c0_168] : memref<2x4x16x64xbf16, #tpu.memory_space<vmem>>, vector<1x1x16x64xbf16>
    %225 = vector.shape_cast %224 : vector<1x1x16x64xbf16> to vector<16x64xbf16>
    %cst_169 = arith.constant dense<0.000000e+00> : vector<5x64xf32>
    %226 = tpu.matmul %223, %225, %cst_169 {dimension_numbers = #tpu.dot_dimension_numbers<[1], [0], [0], [1], [0, 0, 1, 1], [], []>} : vector<5x16xbf16>, vector<16x64xbf16>, vector<5x64xf32> -> vector<5x64xf32>
    %227 = arith.addf %185, %226 : vector<5x64xf32>
    %228 = arith.addf %31, %227 : vector<5x64xf32>
    %c0_170 = arith.constant 0 : index
    %c0_171 = arith.constant 0 : index
    %c0_172 = arith.constant 0 : index
    %229 = vector.load %arg16[%c0_170, %c0_171, %c0_172] : memref<2x1x64xf32, #tpu.memory_space<vmem>>, vector<1x1x64xf32>
    %230 = vector.shape_cast %229 : vector<1x1x64xf32> to vector<1x64xf32>
    %231 = vector.broadcast %230 : vector<1x64xf32> to vector<5x64xf32>
    %232 = arith.addf %228, %231 : vector<5x64xf32>
    %c0_173 = arith.constant 0 : index
    %c0_174 = arith.constant 0 : index
    %c0_175 = arith.constant 0 : index
    %233 = vector.load %arg17[%c0_173, %c0_174, %c0_175] : memref<2x1x64xf32, #tpu.memory_space<vmem>>, vector<1x1x64xf32>
    %234 = vector.shape_cast %233 : vector<1x1x64xf32> to vector<1x64xf32>
    %c0_176 = arith.constant 0 : index
    %c0_177 = arith.constant 0 : index
    %c0_178 = arith.constant 0 : index
    %235 = vector.load %arg18[%c0_176, %c0_177, %c0_178] : memref<2x1x64xf32, #tpu.memory_space<vmem>>, vector<1x1x64xf32>
    %236 = vector.shape_cast %235 : vector<1x1x64xf32> to vector<1x64xf32>
    %cst_179 = arith.constant dense<0.000000e+00> : vector<5xf32>
    %237 = vector.multi_reduction <add>, %232, %cst_179 [1] : vector<5x64xf32> to vector<5xf32>
    %238 = vector.shape_cast %237 : vector<5xf32> to vector<5x1xf32>
    %cst_180 = arith.constant 6.400000e+01 : f32
    %239 = vector.broadcast %cst_180 : f32 to vector<5x1xf32>
    %240 = arith.divf %238, %239 : vector<5x1xf32>
    %241 = vector.broadcast %240 : vector<5x1xf32> to vector<5x64xf32>
    %242 = arith.subf %232, %241 : vector<5x64xf32>
    %243 = arith.mulf %242, %242 : vector<5x64xf32>
    %cst_181 = arith.constant dense<0.000000e+00> : vector<5xf32>
    %244 = vector.multi_reduction <add>, %243, %cst_181 [1] : vector<5x64xf32> to vector<5xf32>
    %245 = vector.shape_cast %244 : vector<5xf32> to vector<5x1xf32>
    %cst_182 = arith.constant 6.400000e+01 : f32
    %246 = vector.broadcast %cst_182 : f32 to vector<5x1xf32>
    %247 = arith.divf %245, %246 : vector<5x1xf32>
    %248 = vector.broadcast %240 : vector<5x1xf32> to vector<5x64xf32>
    %249 = arith.subf %232, %248 : vector<5x64xf32>
    %cst_183 = arith.constant 9.99999974E-6 : f32
    %250 = vector.broadcast %cst_183 : f32 to vector<5x1xf32>
    %251 = arith.addf %247, %250 : vector<5x1xf32>
    %252 = math.rsqrt %251 : vector<5x1xf32>
    %253 = vector.broadcast %252 : vector<5x1xf32> to vector<5x64xf32>
    %254 = arith.mulf %249, %253 : vector<5x64xf32>
    %255 = vector.broadcast %234 : vector<1x64xf32> to vector<5x64xf32>
    %256 = arith.mulf %254, %255 : vector<5x64xf32>
    %257 = vector.broadcast %236 : vector<1x64xf32> to vector<5x64xf32>
    %258 = arith.addf %256, %257 : vector<5x64xf32>
    %259 = arith.truncf %258 : vector<5x64xf32> to vector<5x64xbf16>
    %c0_184 = arith.constant 0 : index
    %c0_185 = arith.constant 0 : index
    %c0_186 = arith.constant 0 : index
    %260 = vector.load %arg19[%c0_184, %c0_185, %c0_186] : memref<2x64x128xbf16, #tpu.memory_space<vmem>>, vector<1x64x128xbf16>
    %261 = vector.shape_cast %260 : vector<1x64x128xbf16> to vector<64x128xbf16>
    %cst_187 = arith.constant dense<0.000000e+00> : vector<5x128xf32>
    %262 = tpu.matmul %259, %261, %cst_187 {dimension_numbers = #tpu.dot_dimension_numbers<[1], [0], [0], [1], [0, 0, 1, 1], [], []>} : vector<5x64xbf16>, vector<64x128xbf16>, vector<5x128xf32> -> vector<5x128xf32>
    %c0_188 = arith.constant 0 : index
    %c0_189 = arith.constant 0 : index
    %c0_190 = arith.constant 0 : index
    %263 = vector.load %arg20[%c0_188, %c0_189, %c0_190] : memref<2x1x128xf32, #tpu.memory_space<vmem>>, vector<1x1x128xf32>
    %264 = vector.shape_cast %263 : vector<1x1x128xf32> to vector<1x128xf32>
    %265 = vector.broadcast %264 : vector<1x128xf32> to vector<5x128xf32>
    %266 = arith.addf %262, %265 : vector<5x128xf32>
    %cst_191 = arith.constant 1.702000e+00 : f32
    %267 = vector.broadcast %cst_191 : f32 to vector<5x128xf32>
    %268 = arith.mulf %267, %266 : vector<5x128xf32>
    %269 = arith.negf %268 : vector<5x128xf32>
    %270 = math.exp %269 : vector<5x128xf32>
    %cst_192 = arith.constant 1.000000e+00 : f32
    %271 = vector.broadcast %cst_192 : f32 to vector<5x128xf32>
    %272 = arith.addf %271, %270 : vector<5x128xf32>
    %273 = arith.divf %271, %272 : vector<5x128xf32>
    %274 = arith.mulf %266, %273 : vector<5x128xf32>
    %275 = arith.truncf %274 : vector<5x128xf32> to vector<5x128xbf16>
    %c0_193 = arith.constant 0 : index
    %c0_194 = arith.constant 0 : index
    %c0_195 = arith.constant 0 : index
    %276 = vector.load %arg21[%c0_193, %c0_194, %c0_195] : memref<2x128x64xbf16, #tpu.memory_space<vmem>>, vector<1x128x64xbf16>
    %277 = vector.shape_cast %276 : vector<1x128x64xbf16> to vector<128x64xbf16>
    %cst_196 = arith.constant dense<0.000000e+00> : vector<5x64xf32>
    %278 = tpu.matmul %275, %277, %cst_196 {dimension_numbers = #tpu.dot_dimension_numbers<[1], [0], [0], [1], [0, 0, 1, 1], [], []>} : vector<5x128xbf16>, vector<128x64xbf16>, vector<5x64xf32> -> vector<5x64xf32>
    %279 = arith.addf %232, %278 : vector<5x64xf32>
    %c0_197 = arith.constant 0 : index
    %c0_198 = arith.constant 0 : index
    %c0_199 = arith.constant 0 : index
    %280 = vector.load %arg22[%c0_197, %c0_198, %c0_199] : memref<2x1x64xf32, #tpu.memory_space<vmem>>, vector<1x1x64xf32>
    %281 = vector.shape_cast %280 : vector<1x1x64xf32> to vector<1x64xf32>
    %282 = vector.broadcast %281 : vector<1x64xf32> to vector<5x64xf32>
    %283 = arith.addf %279, %282 : vector<5x64xf32>
    %c1_200 = arith.constant 1 : index
    %c0_201 = arith.constant 0 : index
    %c0_202 = arith.constant 0 : index
    %284 = vector.load %arg7[%c1_200, %c0_201, %c0_202] : memref<2x1x64xf32, #tpu.memory_space<vmem>>, vector<1x1x64xf32>
    %285 = vector.shape_cast %284 : vector<1x1x64xf32> to vector<1x64xf32>
    %c1_203 = arith.constant 1 : index
    %c0_204 = arith.constant 0 : index
    %c0_205 = arith.constant 0 : index
    %286 = vector.load %arg8[%c1_203, %c0_204, %c0_205] : memref<2x1x64xf32, #tpu.memory_space<vmem>>, vector<1x1x64xf32>
    %287 = vector.shape_cast %286 : vector<1x1x64xf32> to vector<1x64xf32>
    %cst_206 = arith.constant dense<0.000000e+00> : vector<5xf32>
    %288 = vector.multi_reduction <add>, %283, %cst_206 [1] : vector<5x64xf32> to vector<5xf32>
    %289 = vector.shape_cast %288 : vector<5xf32> to vector<5x1xf32>
    %cst_207 = arith.constant 6.400000e+01 : f32
    %290 = vector.broadcast %cst_207 : f32 to vector<5x1xf32>
    %291 = arith.divf %289, %290 : vector<5x1xf32>
    %292 = vector.broadcast %291 : vector<5x1xf32> to vector<5x64xf32>
    %293 = arith.subf %283, %292 : vector<5x64xf32>
    %294 = arith.mulf %293, %293 : vector<5x64xf32>
    %cst_208 = arith.constant dense<0.000000e+00> : vector<5xf32>
    %295 = vector.multi_reduction <add>, %294, %cst_208 [1] : vector<5x64xf32> to vector<5xf32>
    %296 = vector.shape_cast %295 : vector<5xf32> to vector<5x1xf32>
    %cst_209 = arith.constant 6.400000e+01 : f32
    %297 = vector.broadcast %cst_209 : f32 to vector<5x1xf32>
    %298 = arith.divf %296, %297 : vector<5x1xf32>
    %299 = vector.broadcast %291 : vector<5x1xf32> to vector<5x64xf32>
    %300 = arith.subf %283, %299 : vector<5x64xf32>
    %cst_210 = arith.constant 9.99999974E-6 : f32
    %301 = vector.broadcast %cst_210 : f32 to vector<5x1xf32>
    %302 = arith.addf %298, %301 : vector<5x1xf32>
    %303 = math.rsqrt %302 : vector<5x1xf32>
    %304 = vector.broadcast %303 : vector<5x1xf32> to vector<5x64xf32>
    %305 = arith.mulf %300, %304 : vector<5x64xf32>
    %306 = vector.broadcast %285 : vector<1x64xf32> to vector<5x64xf32>
    %307 = arith.mulf %305, %306 : vector<5x64xf32>
    %308 = vector.broadcast %287 : vector<1x64xf32> to vector<5x64xf32>
    %309 = arith.addf %307, %308 : vector<5x64xf32>
    %310 = arith.truncf %309 : vector<5x64xf32> to vector<5x64xbf16>
    %cst_211 = arith.constant 0.000000e+00 : f32
    %311 = vector.broadcast %cst_211 : f32 to vector<5x64xf32>
    %c1_212 = arith.constant 1 : index
    %c0_213 = arith.constant 0 : index
    %c0_214 = arith.constant 0 : index
    %c0_215 = arith.constant 0 : index
    %312 = vector.load %arg9[%c1_212, %c0_213, %c0_214, %c0_215] : memref<2x4x64x16xbf16, #tpu.memory_space<vmem>>, vector<1x1x64x16xbf16>
    %313 = vector.shape_cast %312 : vector<1x1x64x16xbf16> to vector<64x16xbf16>
    %cst_216 = arith.constant dense<0.000000e+00> : vector<5x16xf32>
    %314 = tpu.matmul %310, %313, %cst_216 {dimension_numbers = #tpu.dot_dimension_numbers<[1], [0], [0], [1], [0, 0, 1, 1], [], []>} : vector<5x64xbf16>, vector<64x16xbf16>, vector<5x16xf32> -> vector<5x16xf32>
    %c1_217 = arith.constant 1 : index
    %c0_218 = arith.constant 0 : index
    %c0_219 = arith.constant 0 : index
    %c0_220 = arith.constant 0 : index
    %315 = vector.load %arg10[%c1_217, %c0_218, %c0_219, %c0_220] : memref<2x4x1x16xf32, #tpu.memory_space<vmem>>, vector<1x1x1x16xf32>
    %316 = vector.shape_cast %315 : vector<1x1x1x16xf32> to vector<1x16xf32>
    %317 = vector.broadcast %316 : vector<1x16xf32> to vector<5x16xf32>
    %318 = arith.addf %314, %317 : vector<5x16xf32>
    %319 = arith.truncf %318 : vector<5x16xf32> to vector<5x16xbf16>
    %c1_221 = arith.constant 1 : index
    %c0_222 = arith.constant 0 : index
    %c0_223 = arith.constant 0 : index
    %c0_224 = arith.constant 0 : index
    %320 = vector.load %arg11[%c1_221, %c0_222, %c0_223, %c0_224] : memref<2x4x64x16xbf16, #tpu.memory_space<vmem>>, vector<1x1x64x16xbf16>
    %321 = vector.shape_cast %320 : vector<1x1x64x16xbf16> to vector<64x16xbf16>
    %cst_225 = arith.constant dense<0.000000e+00> : vector<5x16xf32>
    %322 = tpu.matmul %310, %321, %cst_225 {dimension_numbers = #tpu.dot_dimension_numbers<[1], [0], [0], [1], [0, 0, 1, 1], [], []>} : vector<5x64xbf16>, vector<64x16xbf16>, vector<5x16xf32> -> vector<5x16xf32>
    %c1_226 = arith.constant 1 : index
    %c0_227 = arith.constant 0 : index
    %c0_228 = arith.constant 0 : index
    %c0_229 = arith.constant 0 : index
    %323 = vector.load %arg12[%c1_226, %c0_227, %c0_228, %c0_229] : memref<2x4x1x16xf32, #tpu.memory_space<vmem>>, vector<1x1x1x16xf32>
    %324 = vector.shape_cast %323 : vector<1x1x1x16xf32> to vector<1x16xf32>
    %325 = vector.broadcast %324 : vector<1x16xf32> to vector<5x16xf32>
    %326 = arith.addf %322, %325 : vector<5x16xf32>
    %327 = arith.truncf %326 : vector<5x16xf32> to vector<5x16xbf16>
    %c1_230 = arith.constant 1 : index
    %c0_231 = arith.constant 0 : index
    %c0_232 = arith.constant 0 : index
    %c0_233 = arith.constant 0 : index
    %328 = vector.load %arg13[%c1_230, %c0_231, %c0_232, %c0_233] : memref<2x4x64x16xbf16, #tpu.memory_space<vmem>>, vector<1x1x64x16xbf16>
    %329 = vector.shape_cast %328 : vector<1x1x64x16xbf16> to vector<64x16xbf16>
    %cst_234 = arith.constant dense<0.000000e+00> : vector<5x16xf32>
    %330 = tpu.matmul %310, %329, %cst_234 {dimension_numbers = #tpu.dot_dimension_numbers<[1], [0], [0], [1], [0, 0, 1, 1], [], []>} : vector<5x64xbf16>, vector<64x16xbf16>, vector<5x16xf32> -> vector<5x16xf32>
    %c1_235 = arith.constant 1 : index
    %c0_236 = arith.constant 0 : index
    %c0_237 = arith.constant 0 : index
    %c0_238 = arith.constant 0 : index
    %331 = vector.load %arg14[%c1_235, %c0_236, %c0_237, %c0_238] : memref<2x4x1x16xf32, #tpu.memory_space<vmem>>, vector<1x1x1x16xf32>
    %332 = vector.shape_cast %331 : vector<1x1x1x16xf32> to vector<1x16xf32>
    %333 = vector.broadcast %332 : vector<1x16xf32> to vector<5x16xf32>
    %334 = arith.addf %330, %333 : vector<5x16xf32>
    %335 = arith.truncf %334 : vector<5x16xf32> to vector<5x16xbf16>
    %cst_239 = arith.constant dense<0.000000e+00> : vector<5x5xf32>
    %336 = tpu.matmul %319, %327, %cst_239 {dimension_numbers = #tpu.dot_dimension_numbers<[1], [1], [0], [0], [0, 0, 1, 0], [], []>} : vector<5x16xbf16>, vector<5x16xbf16>, vector<5x5xf32> -> vector<5x5xf32>
    %cst_240 = arith.constant dense<0xFF800000> : vector<5xf32>
    %337 = vector.multi_reduction <maximumf>, %336, %cst_240 [1] : vector<5x5xf32> to vector<5xf32>
    %338 = vector.shape_cast %337 : vector<5xf32> to vector<5x1xf32>
    %339 = vector.broadcast %338 : vector<5x1xf32> to vector<5x5xf32>
    %340 = arith.subf %336, %339 : vector<5x5xf32>
    %341 = math.exp %340 : vector<5x5xf32>
    %cst_241 = arith.constant dense<0.000000e+00> : vector<5xf32>
    %342 = vector.multi_reduction <add>, %341, %cst_241 [1] : vector<5x5xf32> to vector<5xf32>
    %343 = vector.shape_cast %342 : vector<5xf32> to vector<5x1xf32>
    %344 = tpu.reciprocal %343 {approx = true} : vector<5x1xf32> -> vector<5x1xf32>
    %345 = vector.broadcast %344 : vector<5x1xf32> to vector<5x5xf32>
    %346 = arith.mulf %341, %345 : vector<5x5xf32>
    %347 = arith.truncf %346 : vector<5x5xf32> to vector<5x5xbf16>
    %cst_242 = arith.constant dense<0.000000e+00> : vector<5x16xf32>
    %348 = tpu.matmul %347, %335, %cst_242 {dimension_numbers = #tpu.dot_dimension_numbers<[1], [0], [0], [1], [0, 0, 1, 1], [], []>} : vector<5x5xbf16>, vector<5x16xbf16>, vector<5x16xf32> -> vector<5x16xf32>
    %349 = arith.truncf %348 : vector<5x16xf32> to vector<5x16xbf16>
    %c1_243 = arith.constant 1 : index
    %c0_244 = arith.constant 0 : index
    %c0_245 = arith.constant 0 : index
    %c0_246 = arith.constant 0 : index
    %350 = vector.load %arg15[%c1_243, %c0_244, %c0_245, %c0_246] : memref<2x4x16x64xbf16, #tpu.memory_space<vmem>>, vector<1x1x16x64xbf16>
    %351 = vector.shape_cast %350 : vector<1x1x16x64xbf16> to vector<16x64xbf16>
    %cst_247 = arith.constant dense<0.000000e+00> : vector<5x64xf32>
    %352 = tpu.matmul %349, %351, %cst_247 {dimension_numbers = #tpu.dot_dimension_numbers<[1], [0], [0], [1], [0, 0, 1, 1], [], []>} : vector<5x16xbf16>, vector<16x64xbf16>, vector<5x64xf32> -> vector<5x64xf32>
    %353 = arith.addf %311, %352 : vector<5x64xf32>
    %c1_248 = arith.constant 1 : index
    %c1_249 = arith.constant 1 : index
    %c0_250 = arith.constant 0 : index
    %c0_251 = arith.constant 0 : index
    %354 = vector.load %arg9[%c1_248, %c1_249, %c0_250, %c0_251] : memref<2x4x64x16xbf16, #tpu.memory_space<vmem>>, vector<1x1x64x16xbf16>
    %355 = vector.shape_cast %354 : vector<1x1x64x16xbf16> to vector<64x16xbf16>
    %cst_252 = arith.constant dense<0.000000e+00> : vector<5x16xf32>
    %356 = tpu.matmul %310, %355, %cst_252 {dimension_numbers = #tpu.dot_dimension_numbers<[1], [0], [0], [1], [0, 0, 1, 1], [], []>} : vector<5x64xbf16>, vector<64x16xbf16>, vector<5x16xf32> -> vector<5x16xf32>
    %c1_253 = arith.constant 1 : index
    %c1_254 = arith.constant 1 : index
    %c0_255 = arith.constant 0 : index
    %c0_256 = arith.constant 0 : index
    %357 = vector.load %arg10[%c1_253, %c1_254, %c0_255, %c0_256] : memref<2x4x1x16xf32, #tpu.memory_space<vmem>>, vector<1x1x1x16xf32>
    %358 = vector.shape_cast %357 : vector<1x1x1x16xf32> to vector<1x16xf32>
    %359 = vector.broadcast %358 : vector<1x16xf32> to vector<5x16xf32>
    %360 = arith.addf %356, %359 : vector<5x16xf32>
    %361 = arith.truncf %360 : vector<5x16xf32> to vector<5x16xbf16>
    %c1_257 = arith.constant 1 : index
    %c1_258 = arith.constant 1 : index
    %c0_259 = arith.constant 0 : index
    %c0_260 = arith.constant 0 : index
    %362 = vector.load %arg11[%c1_257, %c1_258, %c0_259, %c0_260] : memref<2x4x64x16xbf16, #tpu.memory_space<vmem>>, vector<1x1x64x16xbf16>
    %363 = vector.shape_cast %362 : vector<1x1x64x16xbf16> to vector<64x16xbf16>
    %cst_261 = arith.constant dense<0.000000e+00> : vector<5x16xf32>
    %364 = tpu.matmul %310, %363, %cst_261 {dimension_numbers = #tpu.dot_dimension_numbers<[1], [0], [0], [1], [0, 0, 1, 1], [], []>} : vector<5x64xbf16>, vector<64x16xbf16>, vector<5x16xf32> -> vector<5x16xf32>
    %c1_262 = arith.constant 1 : index
    %c1_263 = arith.constant 1 : index
    %c0_264 = arith.constant 0 : index
    %c0_265 = arith.constant 0 : index
    %365 = vector.load %arg12[%c1_262, %c1_263, %c0_264, %c0_265] : memref<2x4x1x16xf32, #tpu.memory_space<vmem>>, vector<1x1x1x16xf32>
    %366 = vector.shape_cast %365 : vector<1x1x1x16xf32> to vector<1x16xf32>
    %367 = vector.broadcast %366 : vector<1x16xf32> to vector<5x16xf32>
    %368 = arith.addf %364, %367 : vector<5x16xf32>
    %369 = arith.truncf %368 : vector<5x16xf32> to vector<5x16xbf16>
    %c1_266 = arith.constant 1 : index
    %c1_267 = arith.constant 1 : index
    %c0_268 = arith.constant 0 : index
    %c0_269 = arith.constant 0 : index
    %370 = vector.load %arg13[%c1_266, %c1_267, %c0_268, %c0_269] : memref<2x4x64x16xbf16, #tpu.memory_space<vmem>>, vector<1x1x64x16xbf16>
    %371 = vector.shape_cast %370 : vector<1x1x64x16xbf16> to vector<64x16xbf16>
    %cst_270 = arith.constant dense<0.000000e+00> : vector<5x16xf32>
    %372 = tpu.matmul %310, %371, %cst_270 {dimension_numbers = #tpu.dot_dimension_numbers<[1], [0], [0], [1], [0, 0, 1, 1], [], []>} : vector<5x64xbf16>, vector<64x16xbf16>, vector<5x16xf32> -> vector<5x16xf32>
    %c1_271 = arith.constant 1 : index
    %c1_272 = arith.constant 1 : index
    %c0_273 = arith.constant 0 : index
    %c0_274 = arith.constant 0 : index
    %373 = vector.load %arg14[%c1_271, %c1_272, %c0_273, %c0_274] : memref<2x4x1x16xf32, #tpu.memory_space<vmem>>, vector<1x1x1x16xf32>
    %374 = vector.shape_cast %373 : vector<1x1x1x16xf32> to vector<1x16xf32>
    %375 = vector.broadcast %374 : vector<1x16xf32> to vector<5x16xf32>
    %376 = arith.addf %372, %375 : vector<5x16xf32>
    %377 = arith.truncf %376 : vector<5x16xf32> to vector<5x16xbf16>
    %cst_275 = arith.constant dense<0.000000e+00> : vector<5x5xf32>
    %378 = tpu.matmul %361, %369, %cst_275 {dimension_numbers = #tpu.dot_dimension_numbers<[1], [1], [0], [0], [0, 0, 1, 0], [], []>} : vector<5x16xbf16>, vector<5x16xbf16>, vector<5x5xf32> -> vector<5x5xf32>
    %cst_276 = arith.constant dense<0xFF800000> : vector<5xf32>
    %379 = vector.multi_reduction <maximumf>, %378, %cst_276 [1] : vector<5x5xf32> to vector<5xf32>
    %380 = vector.shape_cast %379 : vector<5xf32> to vector<5x1xf32>
    %381 = vector.broadcast %380 : vector<5x1xf32> to vector<5x5xf32>
    %382 = arith.subf %378, %381 : vector<5x5xf32>
    %383 = math.exp %382 : vector<5x5xf32>
    %cst_277 = arith.constant dense<0.000000e+00> : vector<5xf32>
    %384 = vector.multi_reduction <add>, %383, %cst_277 [1] : vector<5x5xf32> to vector<5xf32>
    %385 = vector.shape_cast %384 : vector<5xf32> to vector<5x1xf32>
    %386 = tpu.reciprocal %385 {approx = true} : vector<5x1xf32> -> vector<5x1xf32>
    %387 = vector.broadcast %386 : vector<5x1xf32> to vector<5x5xf32>
    %388 = arith.mulf %383, %387 : vector<5x5xf32>
    %389 = arith.truncf %388 : vector<5x5xf32> to vector<5x5xbf16>
    %cst_278 = arith.constant dense<0.000000e+00> : vector<5x16xf32>
    %390 = tpu.matmul %389, %377, %cst_278 {dimension_numbers = #tpu.dot_dimension_numbers<[1], [0], [0], [1], [0, 0, 1, 1], [], []>} : vector<5x5xbf16>, vector<5x16xbf16>, vector<5x16xf32> -> vector<5x16xf32>
    %391 = arith.truncf %390 : vector<5x16xf32> to vector<5x16xbf16>
    %c1_279 = arith.constant 1 : index
    %c1_280 = arith.constant 1 : index
    %c0_281 = arith.constant 0 : index
    %c0_282 = arith.constant 0 : index
    %392 = vector.load %arg15[%c1_279, %c1_280, %c0_281, %c0_282] : memref<2x4x16x64xbf16, #tpu.memory_space<vmem>>, vector<1x1x16x64xbf16>
    %393 = vector.shape_cast %392 : vector<1x1x16x64xbf16> to vector<16x64xbf16>
    %cst_283 = arith.constant dense<0.000000e+00> : vector<5x64xf32>
    %394 = tpu.matmul %391, %393, %cst_283 {dimension_numbers = #tpu.dot_dimension_numbers<[1], [0], [0], [1], [0, 0, 1, 1], [], []>} : vector<5x16xbf16>, vector<16x64xbf16>, vector<5x64xf32> -> vector<5x64xf32>
    %395 = arith.addf %353, %394 : vector<5x64xf32>
    %c1_284 = arith.constant 1 : index
    %c2_285 = arith.constant 2 : index
    %c0_286 = arith.constant 0 : index
    %c0_287 = arith.constant 0 : index
    %396 = vector.load %arg9[%c1_284, %c2_285, %c0_286, %c0_287] : memref<2x4x64x16xbf16, #tpu.memory_space<vmem>>, vector<1x1x64x16xbf16>
    %397 = vector.shape_cast %396 : vector<1x1x64x16xbf16> to vector<64x16xbf16>
    %cst_288 = arith.constant dense<0.000000e+00> : vector<5x16xf32>
    %398 = tpu.matmul %310, %397, %cst_288 {dimension_numbers = #tpu.dot_dimension_numbers<[1], [0], [0], [1], [0, 0, 1, 1], [], []>} : vector<5x64xbf16>, vector<64x16xbf16>, vector<5x16xf32> -> vector<5x16xf32>
    %c1_289 = arith.constant 1 : index
    %c2_290 = arith.constant 2 : index
    %c0_291 = arith.constant 0 : index
    %c0_292 = arith.constant 0 : index
    %399 = vector.load %arg10[%c1_289, %c2_290, %c0_291, %c0_292] : memref<2x4x1x16xf32, #tpu.memory_space<vmem>>, vector<1x1x1x16xf32>
    %400 = vector.shape_cast %399 : vector<1x1x1x16xf32> to vector<1x16xf32>
    %401 = vector.broadcast %400 : vector<1x16xf32> to vector<5x16xf32>
    %402 = arith.addf %398, %401 : vector<5x16xf32>
    %403 = arith.truncf %402 : vector<5x16xf32> to vector<5x16xbf16>
    %c1_293 = arith.constant 1 : index
    %c2_294 = arith.constant 2 : index
    %c0_295 = arith.constant 0 : index
    %c0_296 = arith.constant 0 : index
    %404 = vector.load %arg11[%c1_293, %c2_294, %c0_295, %c0_296] : memref<2x4x64x16xbf16, #tpu.memory_space<vmem>>, vector<1x1x64x16xbf16>
    %405 = vector.shape_cast %404 : vector<1x1x64x16xbf16> to vector<64x16xbf16>
    %cst_297 = arith.constant dense<0.000000e+00> : vector<5x16xf32>
    %406 = tpu.matmul %310, %405, %cst_297 {dimension_numbers = #tpu.dot_dimension_numbers<[1], [0], [0], [1], [0, 0, 1, 1], [], []>} : vector<5x64xbf16>, vector<64x16xbf16>, vector<5x16xf32> -> vector<5x16xf32>
    %c1_298 = arith.constant 1 : index
    %c2_299 = arith.constant 2 : index
    %c0_300 = arith.constant 0 : index
    %c0_301 = arith.constant 0 : index
    %407 = vector.load %arg12[%c1_298, %c2_299, %c0_300, %c0_301] : memref<2x4x1x16xf32, #tpu.memory_space<vmem>>, vector<1x1x1x16xf32>
    %408 = vector.shape_cast %407 : vector<1x1x1x16xf32> to vector<1x16xf32>
    %409 = vector.broadcast %408 : vector<1x16xf32> to vector<5x16xf32>
    %410 = arith.addf %406, %409 : vector<5x16xf32>
    %411 = arith.truncf %410 : vector<5x16xf32> to vector<5x16xbf16>
    %c1_302 = arith.constant 1 : index
    %c2_303 = arith.constant 2 : index
    %c0_304 = arith.constant 0 : index
    %c0_305 = arith.constant 0 : index
    %412 = vector.load %arg13[%c1_302, %c2_303, %c0_304, %c0_305] : memref<2x4x64x16xbf16, #tpu.memory_space<vmem>>, vector<1x1x64x16xbf16>
    %413 = vector.shape_cast %412 : vector<1x1x64x16xbf16> to vector<64x16xbf16>
    %cst_306 = arith.constant dense<0.000000e+00> : vector<5x16xf32>
    %414 = tpu.matmul %310, %413, %cst_306 {dimension_numbers = #tpu.dot_dimension_numbers<[1], [0], [0], [1], [0, 0, 1, 1], [], []>} : vector<5x64xbf16>, vector<64x16xbf16>, vector<5x16xf32> -> vector<5x16xf32>
    %c1_307 = arith.constant 1 : index
    %c2_308 = arith.constant 2 : index
    %c0_309 = arith.constant 0 : index
    %c0_310 = arith.constant 0 : index
    %415 = vector.load %arg14[%c1_307, %c2_308, %c0_309, %c0_310] : memref<2x4x1x16xf32, #tpu.memory_space<vmem>>, vector<1x1x1x16xf32>
    %416 = vector.shape_cast %415 : vector<1x1x1x16xf32> to vector<1x16xf32>
    %417 = vector.broadcast %416 : vector<1x16xf32> to vector<5x16xf32>
    %418 = arith.addf %414, %417 : vector<5x16xf32>
    %419 = arith.truncf %418 : vector<5x16xf32> to vector<5x16xbf16>
    %cst_311 = arith.constant dense<0.000000e+00> : vector<5x5xf32>
    %420 = tpu.matmul %403, %411, %cst_311 {dimension_numbers = #tpu.dot_dimension_numbers<[1], [1], [0], [0], [0, 0, 1, 0], [], []>} : vector<5x16xbf16>, vector<5x16xbf16>, vector<5x5xf32> -> vector<5x5xf32>
    %cst_312 = arith.constant dense<0xFF800000> : vector<5xf32>
    %421 = vector.multi_reduction <maximumf>, %420, %cst_312 [1] : vector<5x5xf32> to vector<5xf32>
    %422 = vector.shape_cast %421 : vector<5xf32> to vector<5x1xf32>
    %423 = vector.broadcast %422 : vector<5x1xf32> to vector<5x5xf32>
    %424 = arith.subf %420, %423 : vector<5x5xf32>
    %425 = math.exp %424 : vector<5x5xf32>
    %cst_313 = arith.constant dense<0.000000e+00> : vector<5xf32>
    %426 = vector.multi_reduction <add>, %425, %cst_313 [1] : vector<5x5xf32> to vector<5xf32>
    %427 = vector.shape_cast %426 : vector<5xf32> to vector<5x1xf32>
    %428 = tpu.reciprocal %427 {approx = true} : vector<5x1xf32> -> vector<5x1xf32>
    %429 = vector.broadcast %428 : vector<5x1xf32> to vector<5x5xf32>
    %430 = arith.mulf %425, %429 : vector<5x5xf32>
    %431 = arith.truncf %430 : vector<5x5xf32> to vector<5x5xbf16>
    %cst_314 = arith.constant dense<0.000000e+00> : vector<5x16xf32>
    %432 = tpu.matmul %431, %419, %cst_314 {dimension_numbers = #tpu.dot_dimension_numbers<[1], [0], [0], [1], [0, 0, 1, 1], [], []>} : vector<5x5xbf16>, vector<5x16xbf16>, vector<5x16xf32> -> vector<5x16xf32>
    %433 = arith.truncf %432 : vector<5x16xf32> to vector<5x16xbf16>
    %c1_315 = arith.constant 1 : index
    %c2_316 = arith.constant 2 : index
    %c0_317 = arith.constant 0 : index
    %c0_318 = arith.constant 0 : index
    %434 = vector.load %arg15[%c1_315, %c2_316, %c0_317, %c0_318] : memref<2x4x16x64xbf16, #tpu.memory_space<vmem>>, vector<1x1x16x64xbf16>
    %435 = vector.shape_cast %434 : vector<1x1x16x64xbf16> to vector<16x64xbf16>
    %cst_319 = arith.constant dense<0.000000e+00> : vector<5x64xf32>
    %436 = tpu.matmul %433, %435, %cst_319 {dimension_numbers = #tpu.dot_dimension_numbers<[1], [0], [0], [1], [0, 0, 1, 1], [], []>} : vector<5x16xbf16>, vector<16x64xbf16>, vector<5x64xf32> -> vector<5x64xf32>
    %437 = arith.addf %395, %436 : vector<5x64xf32>
    %c1_320 = arith.constant 1 : index
    %c3_321 = arith.constant 3 : index
    %c0_322 = arith.constant 0 : index
    %c0_323 = arith.constant 0 : index
    %438 = vector.load %arg9[%c1_320, %c3_321, %c0_322, %c0_323] : memref<2x4x64x16xbf16, #tpu.memory_space<vmem>>, vector<1x1x64x16xbf16>
    %439 = vector.shape_cast %438 : vector<1x1x64x16xbf16> to vector<64x16xbf16>
    %cst_324 = arith.constant dense<0.000000e+00> : vector<5x16xf32>
    %440 = tpu.matmul %310, %439, %cst_324 {dimension_numbers = #tpu.dot_dimension_numbers<[1], [0], [0], [1], [0, 0, 1, 1], [], []>} : vector<5x64xbf16>, vector<64x16xbf16>, vector<5x16xf32> -> vector<5x16xf32>
    %c1_325 = arith.constant 1 : index
    %c3_326 = arith.constant 3 : index
    %c0_327 = arith.constant 0 : index
    %c0_328 = arith.constant 0 : index
    %441 = vector.load %arg10[%c1_325, %c3_326, %c0_327, %c0_328] : memref<2x4x1x16xf32, #tpu.memory_space<vmem>>, vector<1x1x1x16xf32>
    %442 = vector.shape_cast %441 : vector<1x1x1x16xf32> to vector<1x16xf32>
    %443 = vector.broadcast %442 : vector<1x16xf32> to vector<5x16xf32>
    %444 = arith.addf %440, %443 : vector<5x16xf32>
    %445 = arith.truncf %444 : vector<5x16xf32> to vector<5x16xbf16>
    %c1_329 = arith.constant 1 : index
    %c3_330 = arith.constant 3 : index
    %c0_331 = arith.constant 0 : index
    %c0_332 = arith.constant 0 : index
    %446 = vector.load %arg11[%c1_329, %c3_330, %c0_331, %c0_332] : memref<2x4x64x16xbf16, #tpu.memory_space<vmem>>, vector<1x1x64x16xbf16>
    %447 = vector.shape_cast %446 : vector<1x1x64x16xbf16> to vector<64x16xbf16>
    %cst_333 = arith.constant dense<0.000000e+00> : vector<5x16xf32>
    %448 = tpu.matmul %310, %447, %cst_333 {dimension_numbers = #tpu.dot_dimension_numbers<[1], [0], [0], [1], [0, 0, 1, 1], [], []>} : vector<5x64xbf16>, vector<64x16xbf16>, vector<5x16xf32> -> vector<5x16xf32>
    %c1_334 = arith.constant 1 : index
    %c3_335 = arith.constant 3 : index
    %c0_336 = arith.constant 0 : index
    %c0_337 = arith.constant 0 : index
    %449 = vector.load %arg12[%c1_334, %c3_335, %c0_336, %c0_337] : memref<2x4x1x16xf32, #tpu.memory_space<vmem>>, vector<1x1x1x16xf32>
    %450 = vector.shape_cast %449 : vector<1x1x1x16xf32> to vector<1x16xf32>
    %451 = vector.broadcast %450 : vector<1x16xf32> to vector<5x16xf32>
    %452 = arith.addf %448, %451 : vector<5x16xf32>
    %453 = arith.truncf %452 : vector<5x16xf32> to vector<5x16xbf16>
    %c1_338 = arith.constant 1 : index
    %c3_339 = arith.constant 3 : index
    %c0_340 = arith.constant 0 : index
    %c0_341 = arith.constant 0 : index
    %454 = vector.load %arg13[%c1_338, %c3_339, %c0_340, %c0_341] : memref<2x4x64x16xbf16, #tpu.memory_space<vmem>>, vector<1x1x64x16xbf16>
    %455 = vector.shape_cast %454 : vector<1x1x64x16xbf16> to vector<64x16xbf16>
    %cst_342 = arith.constant dense<0.000000e+00> : vector<5x16xf32>
    %456 = tpu.matmul %310, %455, %cst_342 {dimension_numbers = #tpu.dot_dimension_numbers<[1], [0], [0], [1], [0, 0, 1, 1], [], []>} : vector<5x64xbf16>, vector<64x16xbf16>, vector<5x16xf32> -> vector<5x16xf32>
    %c1_343 = arith.constant 1 : index
    %c3_344 = arith.constant 3 : index
    %c0_345 = arith.constant 0 : index
    %c0_346 = arith.constant 0 : index
    %457 = vector.load %arg14[%c1_343, %c3_344, %c0_345, %c0_346] : memref<2x4x1x16xf32, #tpu.memory_space<vmem>>, vector<1x1x1x16xf32>
    %458 = vector.shape_cast %457 : vector<1x1x1x16xf32> to vector<1x16xf32>
    %459 = vector.broadcast %458 : vector<1x16xf32> to vector<5x16xf32>
    %460 = arith.addf %456, %459 : vector<5x16xf32>
    %461 = arith.truncf %460 : vector<5x16xf32> to vector<5x16xbf16>
    %cst_347 = arith.constant dense<0.000000e+00> : vector<5x5xf32>
    %462 = tpu.matmul %445, %453, %cst_347 {dimension_numbers = #tpu.dot_dimension_numbers<[1], [1], [0], [0], [0, 0, 1, 0], [], []>} : vector<5x16xbf16>, vector<5x16xbf16>, vector<5x5xf32> -> vector<5x5xf32>
    %cst_348 = arith.constant dense<0xFF800000> : vector<5xf32>
    %463 = vector.multi_reduction <maximumf>, %462, %cst_348 [1] : vector<5x5xf32> to vector<5xf32>
    %464 = vector.shape_cast %463 : vector<5xf32> to vector<5x1xf32>
    %465 = vector.broadcast %464 : vector<5x1xf32> to vector<5x5xf32>
    %466 = arith.subf %462, %465 : vector<5x5xf32>
    %467 = math.exp %466 : vector<5x5xf32>
    %cst_349 = arith.constant dense<0.000000e+00> : vector<5xf32>
    %468 = vector.multi_reduction <add>, %467, %cst_349 [1] : vector<5x5xf32> to vector<5xf32>
    %469 = vector.shape_cast %468 : vector<5xf32> to vector<5x1xf32>
    %470 = tpu.reciprocal %469 {approx = true} : vector<5x1xf32> -> vector<5x1xf32>
    %471 = vector.broadcast %470 : vector<5x1xf32> to vector<5x5xf32>
    %472 = arith.mulf %467, %471 : vector<5x5xf32>
    %473 = arith.truncf %472 : vector<5x5xf32> to vector<5x5xbf16>
    %cst_350 = arith.constant dense<0.000000e+00> : vector<5x16xf32>
    %474 = tpu.matmul %473, %461, %cst_350 {dimension_numbers = #tpu.dot_dimension_numbers<[1], [0], [0], [1], [0, 0, 1, 1], [], []>} : vector<5x5xbf16>, vector<5x16xbf16>, vector<5x16xf32> -> vector<5x16xf32>
    %475 = arith.truncf %474 : vector<5x16xf32> to vector<5x16xbf16>
    %c1_351 = arith.constant 1 : index
    %c3_352 = arith.constant 3 : index
    %c0_353 = arith.constant 0 : index
    %c0_354 = arith.constant 0 : index
    %476 = vector.load %arg15[%c1_351, %c3_352, %c0_353, %c0_354] : memref<2x4x16x64xbf16, #tpu.memory_space<vmem>>, vector<1x1x16x64xbf16>
    %477 = vector.shape_cast %476 : vector<1x1x16x64xbf16> to vector<16x64xbf16>
    %cst_355 = arith.constant dense<0.000000e+00> : vector<5x64xf32>
    %478 = tpu.matmul %475, %477, %cst_355 {dimension_numbers = #tpu.dot_dimension_numbers<[1], [0], [0], [1], [0, 0, 1, 1], [], []>} : vector<5x16xbf16>, vector<16x64xbf16>, vector<5x64xf32> -> vector<5x64xf32>
    %479 = arith.addf %437, %478 : vector<5x64xf32>
    %480 = arith.addf %283, %479 : vector<5x64xf32>
    %c1_356 = arith.constant 1 : index
    %c0_357 = arith.constant 0 : index
    %c0_358 = arith.constant 0 : index
    %481 = vector.load %arg16[%c1_356, %c0_357, %c0_358] : memref<2x1x64xf32, #tpu.memory_space<vmem>>, vector<1x1x64xf32>
    %482 = vector.shape_cast %481 : vector<1x1x64xf32> to vector<1x64xf32>
    %483 = vector.broadcast %482 : vector<1x64xf32> to vector<5x64xf32>
    %484 = arith.addf %480, %483 : vector<5x64xf32>
    %c1_359 = arith.constant 1 : index
    %c0_360 = arith.constant 0 : index
    %c0_361 = arith.constant 0 : index
    %485 = vector.load %arg17[%c1_359, %c0_360, %c0_361] : memref<2x1x64xf32, #tpu.memory_space<vmem>>, vector<1x1x64xf32>
    %486 = vector.shape_cast %485 : vector<1x1x64xf32> to vector<1x64xf32>
    %c1_362 = arith.constant 1 : index
    %c0_363 = arith.constant 0 : index
    %c0_364 = arith.constant 0 : index
    %487 = vector.load %arg18[%c1_362, %c0_363, %c0_364] : memref<2x1x64xf32, #tpu.memory_space<vmem>>, vector<1x1x64xf32>
    %488 = vector.shape_cast %487 : vector<1x1x64xf32> to vector<1x64xf32>
    %cst_365 = arith.constant dense<0.000000e+00> : vector<5xf32>
    %489 = vector.multi_reduction <add>, %484, %cst_365 [1] : vector<5x64xf32> to vector<5xf32>
    %490 = vector.shape_cast %489 : vector<5xf32> to vector<5x1xf32>
    %cst_366 = arith.constant 6.400000e+01 : f32
    %491 = vector.broadcast %cst_366 : f32 to vector<5x1xf32>
    %492 = arith.divf %490, %491 : vector<5x1xf32>
    %493 = vector.broadcast %492 : vector<5x1xf32> to vector<5x64xf32>
    %494 = arith.subf %484, %493 : vector<5x64xf32>
    %495 = arith.mulf %494, %494 : vector<5x64xf32>
    %cst_367 = arith.constant dense<0.000000e+00> : vector<5xf32>
    %496 = vector.multi_reduction <add>, %495, %cst_367 [1] : vector<5x64xf32> to vector<5xf32>
    %497 = vector.shape_cast %496 : vector<5xf32> to vector<5x1xf32>
    %cst_368 = arith.constant 6.400000e+01 : f32
    %498 = vector.broadcast %cst_368 : f32 to vector<5x1xf32>
    %499 = arith.divf %497, %498 : vector<5x1xf32>
    %500 = vector.broadcast %492 : vector<5x1xf32> to vector<5x64xf32>
    %501 = arith.subf %484, %500 : vector<5x64xf32>
    %cst_369 = arith.constant 9.99999974E-6 : f32
    %502 = vector.broadcast %cst_369 : f32 to vector<5x1xf32>
    %503 = arith.addf %499, %502 : vector<5x1xf32>
    %504 = math.rsqrt %503 : vector<5x1xf32>
    %505 = vector.broadcast %504 : vector<5x1xf32> to vector<5x64xf32>
    %506 = arith.mulf %501, %505 : vector<5x64xf32>
    %507 = vector.broadcast %486 : vector<1x64xf32> to vector<5x64xf32>
    %508 = arith.mulf %506, %507 : vector<5x64xf32>
    %509 = vector.broadcast %488 : vector<1x64xf32> to vector<5x64xf32>
    %510 = arith.addf %508, %509 : vector<5x64xf32>
    %511 = arith.truncf %510 : vector<5x64xf32> to vector<5x64xbf16>
    %c1_370 = arith.constant 1 : index
    %c0_371 = arith.constant 0 : index
    %c0_372 = arith.constant 0 : index
    %512 = vector.load %arg19[%c1_370, %c0_371, %c0_372] : memref<2x64x128xbf16, #tpu.memory_space<vmem>>, vector<1x64x128xbf16>
    %513 = vector.shape_cast %512 : vector<1x64x128xbf16> to vector<64x128xbf16>
    %cst_373 = arith.constant dense<0.000000e+00> : vector<5x128xf32>
    %514 = tpu.matmul %511, %513, %cst_373 {dimension_numbers = #tpu.dot_dimension_numbers<[1], [0], [0], [1], [0, 0, 1, 1], [], []>} : vector<5x64xbf16>, vector<64x128xbf16>, vector<5x128xf32> -> vector<5x128xf32>
    %c1_374 = arith.constant 1 : index
    %c0_375 = arith.constant 0 : index
    %c0_376 = arith.constant 0 : index
    %515 = vector.load %arg20[%c1_374, %c0_375, %c0_376] : memref<2x1x128xf32, #tpu.memory_space<vmem>>, vector<1x1x128xf32>
    %516 = vector.shape_cast %515 : vector<1x1x128xf32> to vector<1x128xf32>
    %517 = vector.broadcast %516 : vector<1x128xf32> to vector<5x128xf32>
    %518 = arith.addf %514, %517 : vector<5x128xf32>
    %cst_377 = arith.constant 1.702000e+00 : f32
    %519 = vector.broadcast %cst_377 : f32 to vector<5x128xf32>
    %520 = arith.mulf %519, %518 : vector<5x128xf32>
    %521 = arith.negf %520 : vector<5x128xf32>
    %522 = math.exp %521 : vector<5x128xf32>
    %cst_378 = arith.constant 1.000000e+00 : f32
    %523 = vector.broadcast %cst_378 : f32 to vector<5x128xf32>
    %524 = arith.addf %523, %522 : vector<5x128xf32>
    %525 = arith.divf %523, %524 : vector<5x128xf32>
    %526 = arith.mulf %518, %525 : vector<5x128xf32>
    %527 = arith.truncf %526 : vector<5x128xf32> to vector<5x128xbf16>
    %c1_379 = arith.constant 1 : index
    %c0_380 = arith.constant 0 : index
    %c0_381 = arith.constant 0 : index
    %528 = vector.load %arg21[%c1_379, %c0_380, %c0_381] : memref<2x128x64xbf16, #tpu.memory_space<vmem>>, vector<1x128x64xbf16>
    %529 = vector.shape_cast %528 : vector<1x128x64xbf16> to vector<128x64xbf16>
    %cst_382 = arith.constant dense<0.000000e+00> : vector<5x64xf32>
    %530 = tpu.matmul %527, %529, %cst_382 {dimension_numbers = #tpu.dot_dimension_numbers<[1], [0], [0], [1], [0, 0, 1, 1], [], []>} : vector<5x128xbf16>, vector<128x64xbf16>, vector<5x64xf32> -> vector<5x64xf32>
    %531 = arith.addf %484, %530 : vector<5x64xf32>
    %c1_383 = arith.constant 1 : index
    %c0_384 = arith.constant 0 : index
    %c0_385 = arith.constant 0 : index
    %532 = vector.load %arg22[%c1_383, %c0_384, %c0_385] : memref<2x1x64xf32, #tpu.memory_space<vmem>>, vector<1x1x64xf32>
    %533 = vector.shape_cast %532 : vector<1x1x64xf32> to vector<1x64xf32>
    %534 = vector.broadcast %533 : vector<1x64xf32> to vector<5x64xf32>
    %535 = arith.addf %531, %534 : vector<5x64xf32>
    %536 = vector.extract_strided_slice %535 {offsets = [1, 0], sizes = [4, 64], strides = [1, 1]} : vector<5x64xf32> to vector<4x64xf32>
    %c0_386 = arith.constant 0 : index
    %c0_387 = arith.constant 0 : index
    %c0_388 = arith.constant 0 : index
    %537 = vector.load %arg23[%c0_386, %c0_387, %c0_388] : memref<1x4x64xf32, #tpu.memory_space<vmem>>, vector<1x4x64xf32>
    %538 = vector.shape_cast %537 : vector<1x4x64xf32> to vector<4x64xf32>
    %539 = vector.shape_cast %536 : vector<4x64xf32> to vector<1x4x64xf32>
    tpu.vector_store %arg23[%c0_386, %c0_387, %c0_388], %539 {strides = array<i32>} : memref<1x4x64xf32, #tpu.memory_space<vmem>>, vector<1x4x64xf32>,
    return
  }
  func.func @transform_0(%arg0: i32) -> (i32, i32, i32) {
    %c0_i32 = arith.constant 0 : i32
    %c0_i32_0 = arith.constant 0 : i32
    %c0_i32_1 = arith.constant 0 : i32
    return %arg0, %c0_i32, %c0_i32_0 : i32, i32, i32
  }
  func.func @transform_1(%arg0: i32) -> (i32, i32) {
    %c0_i32 = arith.constant 0 : i32
    %c0_i32_0 = arith.constant 0 : i32
    %c0_i32_1 = arith.constant 0 : i32
    return %c0_i32, %c0_i32_0 : i32, i32
  }
  func.func @transform_2(%arg0: i32) -> (i32, i32) {
    %c0_i32 = arith.constant 0 : i32
    %c0_i32_0 = arith.constant 0 : i32
    %c0_i32_1 = arith.constant 0 : i32
    return %c0_i32, %c0_i32_0 : i32, i32
  }
  func.func @transform_3(%arg0: i32) -> (i32, i32) {
    %c0_i32 = arith.constant 0 : i32
    %c0_i32_0 = arith.constant 0 : i32
    %c0_i32_1 = arith.constant 0 : i32
    return %c0_i32, %c0_i32_0 : i32, i32
  }
  func.func @transform_4(%arg0: i32) -> (i32, i32) {
    %c0_i32 = arith.constant 0 : i32
    %c0_i32_0 = arith.constant 0 : i32
    %c0_i32_1 = arith.constant 0 : i32
    return %c0_i32, %c0_i32_0 : i32, i32
  }
  func.func @transform_5(%arg0: i32) -> (i32, i32) {
    %c0_i32 = arith.constant 0 : i32
    %c0_i32_0 = arith.constant 0 : i32
    %c0_i32_1 = arith.constant 0 : i32
    return %c0_i32, %c0_i32_0 : i32, i32
  }
  func.func @transform_6(%arg0: i32) -> (i32, i32, i32) {
    %c0_i32 = arith.constant 0 : i32
    %c0_i32_0 = arith.constant 0 : i32
    %c0_i32_1 = arith.constant 0 : i32
    %c0_i32_2 = arith.constant 0 : i32
    return %c0_i32, %c0_i32_0, %c0_i32_1 : i32, i32, i32
  }
  func.func @transform_7(%arg0: i32) -> (i32, i32, i32) {
    %c0_i32 = arith.constant 0 : i32
    %c0_i32_0 = arith.constant 0 : i32
    %c0_i32_1 = arith.constant 0 : i32
    %c0_i32_2 = arith.constant 0 : i32
    return %c0_i32, %c0_i32_0, %c0_i32_1 : i32, i32, i32
  }
  func.func @transform_8(%arg0: i32) -> (i32, i32, i32, i32) {
    %c0_i32 = arith.constant 0 : i32
    %c0_i32_0 = arith.constant 0 : i32
    %c0_i32_1 = arith.constant 0 : i32
    %c0_i32_2 = arith.constant 0 : i32
    %c0_i32_3 = arith.constant 0 : i32
    return %c0_i32, %c0_i32_0, %c0_i32_1, %c0_i32_2 : i32, i32, i32, i32
  }
  func.func @transform_9(%arg0: i32) -> (i32, i32, i32, i32) {
    %c0_i32 = arith.constant 0 : i32
    %c0_i32_0 = arith.constant 0 : i32
    %c0_i32_1 = arith.constant 0 : i32
    %c0_i32_2 = arith.constant 0 : i32
    %c0_i32_3 = arith.constant 0 : i32
    return %c0_i32, %c0_i32_0, %c0_i32_1, %c0_i32_2 : i32, i32, i32, i32
  }
  func.func @transform_10(%arg0: i32) -> (i32, i32, i32, i32) {
    %c0_i32 = arith.constant 0 : i32
    %c0_i32_0 = arith.constant 0 : i32
    %c0_i32_1 = arith.constant 0 : i32
    %c0_i32_2 = arith.constant 0 : i32
    %c0_i32_3 = arith.constant 0 : i32
    return %c0_i32, %c0_i32_0, %c0_i32_1, %c0_i32_2 : i32, i32, i32, i32
  }
  func.func @transform_11(%arg0: i32) -> (i32, i32, i32, i32) {
    %c0_i32 = arith.constant 0 : i32
    %c0_i32_0 = arith.constant 0 : i32
    %c0_i32_1 = arith.constant 0 : i32
    %c0_i32_2 = arith.constant 0 : i32
    %c0_i32_3 = arith.constant 0 : i32
    return %c0_i32, %c0_i32_0, %c0_i32_1, %c0_i32_2 : i32, i32, i32, i32
  }
  func.func @transform_12(%arg0: i32) -> (i32, i32, i32, i32) {
    %c0_i32 = arith.constant 0 : i32
    %c0_i32_0 = arith.constant 0 : i32
    %c0_i32_1 = arith.constant 0 : i32
    %c0_i32_2 = arith.constant 0 : i32
    %c0_i32_3 = arith.constant 0 : i32
    return %c0_i32, %c0_i32_0, %c0_i32_1, %c0_i32_2 : i32, i32, i32, i32
  }
  func.func @transform_13(%arg0: i32) -> (i32, i32, i32, i32) {
    %c0_i32 = arith.constant 0 : i32
    %c0_i32_0 = arith.constant 0 : i32
    %c0_i32_1 = arith.constant 0 : i32
    %c0_i32_2 = arith.constant 0 : i32
    %c0_i32_3 = arith.constant 0 : i32
    return %c0_i32, %c0_i32_0, %c0_i32_1, %c0_i32_2 : i32, i32, i32, i32
  }
  func.func @transform_14(%arg0: i32) -> (i32, i32, i32, i32) {
    %c0_i32 = arith.constant 0 : i32
    %c0_i32_0 = arith.constant 0 : i32
    %c0_i32_1 = arith.constant 0 : i32
    %c0_i32_2 = arith.constant 0 : i32
    %c0_i32_3 = arith.constant 0 : i32
    return %c0_i32, %c0_i32_0, %c0_i32_1, %c0_i32_2 : i32, i32, i32, i32
  }
  func.func @transform_15(%arg0: i32) -> (i32, i32, i32) {
    %c0_i32 = arith.constant 0 : i32
    %c0_i32_0 = arith.constant 0 : i32
    %c0_i32_1 = arith.constant 0 : i32
    %c0_i32_2 = arith.constant 0 : i32
    return %c0_i32, %c0_i32_0, %c0_i32_1 : i32, i32, i32
  }
  func.func @transform_16(%arg0: i32) -> (i32, i32, i32) {
    %c0_i32 = arith.constant 0 : i32
    %c0_i32_0 = arith.constant 0 : i32
    %c0_i32_1 = arith.constant 0 : i32
    %c0_i32_2 = arith.constant 0 : i32
    return %c0_i32, %c0_i32_0, %c0_i32_1 : i32, i32, i32
  }
  func.func @transform_17(%arg0: i32) -> (i32, i32, i32) {
    %c0_i32 = arith.constant 0 : i32
    %c0_i32_0 = arith.constant 0 : i32
    %c0_i32_1 = arith.constant 0 : i32
    %c0_i32_2 = arith.constant 0 : i32
    return %c0_i32, %c0_i32_0, %c0_i32_1 : i32, i32, i32
  }
  func.func @transform_18(%arg0: i32) -> (i32, i32, i32) {
    %c0_i32 = arith.constant 0 : i32
    %c0_i32_0 = arith.constant 0 : i32
    %c0_i32_1 = arith.constant 0 : i32
    %c0_i32_2 = arith.constant 0 : i32
    return %c0_i32, %c0_i32_0, %c0_i32_1 : i32, i32, i32
  }
  func.func @transform_19(%arg0: i32) -> (i32, i32, i32) {
    %c0_i32 = arith.constant 0 : i32
    %c0_i32_0 = arith.constant 0 : i32
    %c0_i32_1 = arith.constant 0 : i32
    %c0_i32_2 = arith.constant 0 : i32
    return %c0_i32, %c0_i32_0, %c0_i32_1 : i32, i32, i32
  }
  func.func @transform_20(%arg0: i32) -> (i32, i32, i32) {
    %c0_i32 = arith.constant 0 : i32
    %c0_i32_0 = arith.constant 0 : i32
    %c0_i32_1 = arith.constant 0 : i32
    %c0_i32_2 = arith.constant 0 : i32
    return %c0_i32, %c0_i32_0, %c0_i32_1 : i32, i32, i32
  }
  func.func @transform_21(%arg0: i32) -> (i32, i32, i32) {
    %c0_i32 = arith.constant 0 : i32
    %c0_i32_0 = arith.constant 0 : i32
    %c0_i32_1 = arith.constant 0 : i32
    %c0_i32_2 = arith.constant 0 : i32
    return %c0_i32, %c0_i32_0, %c0_i32_1 : i32, i32, i32
  }
  func.func @transform_22(%arg0: i32) -> (i32, i32, i32) {
    %c0_i32 = arith.constant 0 : i32
    %c0_i32_0 = arith.constant 0 : i32
    %c0_i32_1 = arith.constant 0 : i32
    return %arg0, %c0_i32, %c0_i32_0 : i32, i32, i32
  }
}

</mosaic_0001>

<llo_original>
// kernel: clip_vision_tower_forward.1
$region0: #{clip_vision_tower_forward.1}
  #allocation0 [shape = 'u32[]', space=smem, size = 0x4, offset = 0x4, fixed_abs, tag = 'smem constant byte address 0x4 - core index']
  #allocation1 [shape = 'u32[144,128]{1,0:T(1,128)}', space=vmem, size = 0x12000, scoped, tag = 'internal scratch']
  %s0 = inlined_call_operand.vmem [shape: bf16[2,4,192], index: 0, kind: input, shape index: {}]
  %s1 = inlined_call_operand.vmem [shape: bf16[192,64], index: 1, kind: input, shape index: {}]
  %s2 = inlined_call_operand.vmem [shape: f32[1,64], index: 2, kind: input, shape index: {}]
  %s3 = inlined_call_operand.vmem [shape: f32[5,64], index: 3, kind: input, shape index: {}]
  %s4 = inlined_call_operand.vmem [shape: f32[1,64], index: 4, kind: input, shape index: {}]
  %s5 = inlined_call_operand.vmem [shape: f32[1,64], index: 5, kind: input, shape index: {}]
  %s6 = inlined_call_operand.vmem [shape: f32[2,1,64], index: 6, kind: input, shape index: {}]
  %s7 = inlined_call_operand.vmem [shape: f32[2,1,64], index: 7, kind: input, shape index: {}]
  %s8 = inlined_call_operand.vmem [shape: bf16[2,4,64,16], index: 8, kind: input, shape index: {}]
  %s9 = inlined_call_operand.vmem [shape: f32[2,4,1,16], index: 9, kind: input, shape index: {}]
  %s10 = inlined_call_operand.vmem [shape: bf16[2,4,64,16], index: 10, kind: input, shape index: {}]
  %s11 = inlined_call_operand.vmem [shape: f32[2,4,1,16], index: 11, kind: input, shape index: {}]
  %s12 = inlined_call_operand.vmem [shape: bf16[2,4,64,16], index: 12, kind: input, shape index: {}]
  %s13 = inlined_call_operand.vmem [shape: f32[2,4,1,16], index: 13, kind: input, shape index: {}]
  %s14 = inlined_call_operand.vmem [shape: bf16[2,4,16,64], index: 14, kind: input, shape index: {}]
  %s15 = inlined_call_operand.vmem [shape: f32[2,1,64], index: 15, kind: input, shape index: {}]
  %s16 = inlined_call_operand.vmem [shape: f32[2,1,64], index: 16, kind: input, shape index: {}]
  %s17 = inlined_call_operand.vmem [shape: f32[2,1,64], index: 17, kind: input, shape index: {}]
  %s18 = inlined_call_operand.vmem [shape: bf16[2,64,128], index: 18, kind: input, shape index: {}]
  %s19 = inlined_call_operand.vmem [shape: f32[2,1,128], index: 19, kind: input, shape index: {}]
  %s20 = inlined_call_operand.vmem [shape: bf16[2,128,64], index: 20, kind: input, shape index: {}]
  %s21 = inlined_call_operand.vmem [shape: f32[2,1,64], index: 21, kind: input, shape index: {}]
  %s22 = inlined_call_operand.hbm [shape: f32[2,4,64], index: 22, kind: output, shape index: {}]
  %s23 = sld [smem:[#allocation0]]
  $region121: #{clip_vision_tower_forward.1} parent=0
    _
  %s25 = ssub.s32 1, %s23
  %s26 = scalar_select 0, %s25, %s23
  $region1: #{clip_vision_tower_forward.1} parent=0
    #allocation2 [shape = 'u8[4096]{0}', space=vmem, size = 0x1000, scoped, tag = 'output window, operand 0']
    #allocation3 [shape = 's32[2]{0}', space=sflag, size = 0x8, scoped, tag = 'scoped memory for clip_vision_tower_forward.1']
    %27 = vsyncpa [#allocation3], 0
    %s28 = scalar_lea.sflag [#allocation3], 1
    %29 = vsyncpa %s28, 0
    loop: start=0, step=1, limit=4
    $region2: #{clip_vision_tower_forward.1} parent=1 // loop_pre_header
      _
    $region3: #{clip_vision_tower_forward.1} parent=1 // loop_header
      %s31 = sphi 0, %s35
      %p32 = scmp.ge.s32.totalorder %s31, 4
      %s41 = sphi 0, %s43
      %s44 = sphi 0, %s41
      %s45 = sphi 0, %s44
      %s61 = sphi 0, %s45
      %s65 = sphi 0, %s65
      %s67 = sphi 0, %s65
      %s68 = sphi 0, %s67
      %s82 = sphi 0, %s68
      %s86 = sphi 0, %s86
      %s88 = sphi 0, %s86
      %s89 = sphi 0, %s88
      %s103 = sphi 0, %s89
      %s107 = sphi 0, %s107
      %s109 = sphi 0, %s107
      %s110 = sphi 0, %s109
      %s124 = sphi 0, %s110
      %s128 = sphi 0, %s128
      %s130 = sphi 0, %s128
      %s131 = sphi 0, %s130
      %s145 = sphi 0, %s131
      %s149 = sphi 0, %s149
      %s151 = sphi 0, %s149
      %s152 = sphi 0, %s151
      %s166 = sphi 0, %s152
      %s170 = sphi 0, %s170
      %s172 = sphi 0, %s170
      %s173 = sphi 0, %s172
      %s187 = sphi 0, %s173
      %s191 = sphi 0, %s191
      %s193 = sphi 0, %s191
      %s194 = sphi 0, %s193
      %s208 = sphi 0, %s194
      %s212 = sphi 0, %s212
      %s214 = sphi 0, %s212
      %s215 = sphi 0, %s214
      %s229 = sphi 0, %s215
      %s233 = sphi 0, %s233
      %s235 = sphi 0, %s233
      %s236 = sphi 0, %s235
      %s250 = sphi 0, %s236
      %s254 = sphi 0, %s254
      %s256 = sphi 0, %s254
      %s257 = sphi 0, %s256
      %s271 = sphi 0, %s257
      %s275 = sphi 0, %s275
      %s277 = sphi 0, %s275
      %s278 = sphi 0, %s277
      %s292 = sphi 0, %s278
      %s296 = sphi 0, %s296
      %s298 = sphi 0, %s296
      %s299 = sphi 0, %s298
      %s313 = sphi 0, %s299
      %s317 = sphi 0, %s317
      %s319 = sphi 0, %s317
      %s320 = sphi 0, %s319
      %s334 = sphi 0, %s320
      %s338 = sphi 0, %s338
      %s340 = sphi 0, %s338
      %s341 = sphi 0, %s340
      %s355 = sphi 0, %s341
      %s359 = sphi 0, %s359
      %s361 = sphi 0, %s359
      %s362 = sphi 0, %s361
      %s376 = sphi 0, %s362
      %s380 = sphi 0, %s380
      %s382 = sphi 0, %s380
      %s383 = sphi 0, %s382
      %s397 = sphi 0, %s383
      %s401 = sphi 0, %s401
      %s403 = sphi 0, %s401
      %s404 = sphi 0, %s403
      %s418 = sphi 0, %s404
      %s422 = sphi 0, %s422
      %s424 = sphi 0, %s422
      %s425 = sphi 0, %s424
      %s439 = sphi 0, %s425
      %s443 = sphi 0, %s443
      %s445 = sphi 0, %s443
      %s446 = sphi 0, %s445
      %s460 = sphi 0, %s446
      %s464 = sphi 0, %s464
      %s466 = sphi 0, %s464
      %s467 = sphi 0, %s466
      %s481 = sphi 0, %s467
      %s485 = sphi 0, %s485
      %s487 = sphi 0, %s485
      %s488 = sphi 0, %s487
      %s502 = sphi 0, %s488
      %s508 = sphi 0, %s510
      %s511 = sphi 0, %s508
      %s512 = sphi 0, %s511
      %s528 = sphi 0, %s512
    $region4: #{clip_vision_tower_forward.1} parent=1 // loop_header_branch
      %34 = sbr.rel (%p32) target = $region8
    $region5: #{clip_vision_tower_forward.1} parent=1 // loop_body
      %s36 = ssub.s32 %s31, 1
      %s37 = ssub.s32 %s31, 2
      %s38 = sadd.s32 %s31, 1
      %s39 = ssub.s32 %s31, %s38
      %p40 = scmp.eq.s32.totalorder %s39, 0
      %s42 = sadd.s32 %s41, 1
      %s43 = scalar_select %p40, %s41, %s42
      %p46 = pneg %p40
      %p47 = scmp.eq.s32.totalorder %s31, 1
      %p48 = por %p46, %p47
      %p49 = scmp.ne.s32.totalorder %s41, %s44
      %p50 = scmp.eq.s32.totalorder %s31, 0
      %p51 = por %p49, %p50
      %p52 = scmp.ne.s32.totalorder %s41, %s44
      %p53 = scmp.eq.s32.totalorder %s36, 1
      %p54 = por %p52, %p53
      %p55 = scmp.ne.s32.totalorder %s44, %s45
      %p56 = scmp.eq.s32.totalorder %s36, 0
      %p57 = por %p55, %p56
      %p58 = scmp.ne.s32.totalorder %s44, %s45
      %p59 = scmp.eq.s32.totalorder %s37, 1
      %p60 = por %p58, %p59
      %p62 = scmp.ne.s32.totalorder %s45, %s61
      %p63 = scmp.eq.s32.totalorder %s37, 0
      %p64 = por %p62, %p63
      %s66 = sadd.s32 %s65, 1
      %p69 = scmp.eq.s32.totalorder %s31, 1
      %p70 = scmp.ne.s32.totalorder %s65, %s67
      %p71 = scmp.eq.s32.totalorder %s31, 0
      %p72 = por %p70, %p71
      %p73 = scmp.ne.s32.totalorder %s65, %s67
      %p74 = scmp.eq.s32.totalorder %s36, 1
      %p75 = por %p73, %p74
      %p76 = scmp.ne.s32.totalorder %s67, %s68
      %p77 = scmp.eq.s32.totalorder %s36, 0
      %p78 = por %p76, %p77
      %p79 = scmp.ne.s32.totalorder %s67, %s68
      %p80 = scmp.eq.s32.totalorder %s37, 1
      %p81 = por %p79, %p80
      %p83 = scmp.ne.s32.totalorder %s68, %s82
      %p84 = scmp.eq.s32.totalorder %s37, 0
      %p85 = por %p83, %p84
      %s87 = sadd.s32 %s86, 1
      %p90 = scmp.eq.s32.totalorder %s31, 1
      %p91 = scmp.ne.s32.totalorder %s86, %s88
      %p92 = scmp.eq.s32.totalorder %s31, 0
      %p93 = por %p91, %p92
      %p94 = scmp.ne.s32.totalorder %s86, %s88
      %p95 = scmp.eq.s32.totalorder %s36, 1
      %p96 = por %p94, %p95
      %p97 = scmp.ne.s32.totalorder %s88, %s89
      %p98 = scmp.eq.s32.totalorder %s36, 0
      %p99 = por %p97, %p98
      %p100 = scmp.ne.s32.totalorder %s88, %s89
      %p101 = scmp.eq.s32.totalorder %s37, 1
      %p102 = por %p100, %p101
      %p104 = scmp.ne.s32.totalorder %s89, %s103
      %p105 = scmp.eq.s32.totalorder %s37, 0
      %p106 = por %p104, %p105
      %s108 = sadd.s32 %s107, 1
      %p111 = scmp.eq.s32.totalorder %s31, 1
      %p112 = scmp.ne.s32.totalorder %s107, %s109
      %p113 = scmp.eq.s32.totalorder %s31, 0
      %p114 = por %p112, %p113
      %p115 = scmp.ne.s32.totalorder %s107, %s109
      %p116 = scmp.eq.s32.totalorder %s36, 1
      %p117 = por %p115, %p116
      %p118 = scmp.ne.s32.totalorder %s109, %s110
      %p119 = scmp.eq.s32.totalorder %s36, 0
      %p120 = por %p118, %p119
      %p121 = scmp.ne.s32.totalorder %s109, %s110
      %p122 = scmp.eq.s32.totalorder %s37, 1
      %p123 = por %p121, %p122
      %p125 = scmp.ne.s32.totalorder %s110, %s124
      %p126 = scmp.eq.s32.totalorder %s37, 0
      %p127 = por %p125, %p126
      %s129 = sadd.s32 %s128, 1
      %p132 = scmp.eq.s32.totalorder %s31, 1
      %p133 = scmp.ne.s32.totalorder %s128, %s130
      %p134 = scmp.eq.s32.totalorder %s31, 0
      %p135 = por %p133, %p134
      %p136 = scmp.ne.s32.totalorder %s128, %s130
      %p137 = scmp.eq.s32.totalorder %s36, 1
      %p138 = por %p136, %p137
      %p139 = scmp.ne.s32.totalorder %s130, %s131
      %p140 = scmp.eq.s32.totalorder %s36, 0
      %p141 = por %p139, %p140
      %p142 = scmp.ne.s32.totalorder %s130, %s131
      %p143 = scmp.eq.s32.totalorder %s37, 1
      %p144 = por %p142, %p143
      %p146 = scmp.ne.s32.totalorder %s131, %s145
      %p147 = scmp.eq.s32.totalorder %s37, 0
      %p148 = por %p146, %p147
      %s150 = sadd.s32 %s149, 1
      %p153 = scmp.eq.s32.totalorder %s31, 1
      %p154 = scmp.ne.s32.totalorder %s149, %s151
      %p155 = scmp.eq.s32.totalorder %s31, 0
      %p156 = por %p154, %p155
      %p157 = scmp.ne.s32.totalorder %s149, %s151
      %p158 = scmp.eq.s32.totalorder %s36, 1
      %p159 = por %p157, %p158
      %p160 = scmp.ne.s32.totalorder %s151, %s152
      %p161 = scmp.eq.s32.totalorder %s36, 0
      %p162 = por %p160, %p161
      %p163 = scmp.ne.s32.totalorder %s151, %s152
      %p164 = scmp.eq.s32.totalorder %s37, 1
      %p165 = por %p163, %p164
      %p167 = scmp.ne.s32.totalorder %s152, %s166
      %p168 = scmp.eq.s32.totalorder %s37, 0
      %p169 = por %p167, %p168
      %s171 = sadd.s32 %s170, 1
      %p174 = scmp.eq.s32.totalorder %s31, 1
      %p175 = scmp.ne.s32.totalorder %s170, %s172
      %p176 = scmp.eq.s32.totalorder %s31, 0
      %p177 = por %p175, %p176
      %p178 = scmp.ne.s32.totalorder %s170, %s172
      %p179 = scmp.eq.s32.totalorder %s36, 1
      %p180 = por %p178, %p179
      %p181 = scmp.ne.s32.totalorder %s172, %s173
      %p182 = scmp.eq.s32.totalorder %s36, 0
      %p183 = por %p181, %p182
      %p184 = scmp.ne.s32.totalorder %s172, %s173
      %p185 = scmp.eq.s32.totalorder %s37, 1
      %p186 = por %p184, %p185
      %p188 = scmp.ne.s32.totalorder %s173, %s187
      %p189 = scmp.eq.s32.totalorder %s37, 0
      %p190 = por %p188, %p189
      %s192 = sadd.s32 %s191, 1
      %p195 = scmp.eq.s32.totalorder %s31, 1
      %p196 = scmp.ne.s32.totalorder %s191, %s193
      %p197 = scmp.eq.s32.totalorder %s31, 0
      %p198 = por %p196, %p197
      %p199 = scmp.ne.s32.totalorder %s191, %s193
      %p200 = scmp.eq.s32.totalorder %s36, 1
      %p201 = por %p199, %p200
      %p202 = scmp.ne.s32.totalorder %s193, %s194
      %p203 = scmp.eq.s32.totalorder %s36, 0
      %p204 = por %p202, %p203
      %p205 = scmp.ne.s32.totalorder %s193, %s194
      %p206 = scmp.eq.s32.totalorder %s37, 1
      %p207 = por %p205, %p206
      %p209 = scmp.ne.s32.totalorder %s194, %s208
      %p210 = scmp.eq.s32.totalorder %s37, 0
      %p211 = por %p209, %p210
      %s213 = sadd.s32 %s212, 1
      %p216 = scmp.eq.s32.totalorder %s31, 1
      %p217 = scmp.ne.s32.totalorder %s212, %s214
      %p218 = scmp.eq.s32.totalorder %s31, 0
      %p219 = por %p217, %p218
      %p220 = scmp.ne.s32.totalorder %s212, %s214
      %p221 = scmp.eq.s32.totalorder %s36, 1
      %p222 = por %p220, %p221
      %p223 = scmp.ne.s32.totalorder %s214, %s215
      %p224 = scmp.eq.s32.totalorder %s36, 0
      %p225 = por %p223, %p224
      %p226 = scmp.ne.s32.totalorder %s214, %s215
      %p227 = scmp.eq.s32.totalorder %s37, 1
      %p228 = por %p226, %p227
      %p230 = scmp.ne.s32.totalorder %s215, %s229
      %p231 = scmp.eq.s32.totalorder %s37, 0
      %p232 = por %p230, %p231
      %s234 = sadd.s32 %s233, 1
      %p237 = scmp.eq.s32.totalorder %s31, 1
      %p238 = scmp.ne.s32.totalorder %s233, %s235
      %p239 = scmp.eq.s32.totalorder %s31, 0
      %p240 = por %p238, %p239
      %p241 = scmp.ne.s32.totalorder %s233, %s235
      %p242 = scmp.eq.s32.totalorder %s36, 1
      %p243 = por %p241, %p242
      %p244 = scmp.ne.s32.totalorder %s235, %s236
      %p245 = scmp.eq.s32.totalorder %s36, 0
      %p246 = por %p244, %p245
      %p247 = scmp.ne.s32.totalorder %s235, %s236
      %p248 = scmp.eq.s32.totalorder %s37, 1
      %p249 = por %p247, %p248
      %p251 = scmp.ne.s32.totalorder %s236, %s250
      %p252 = scmp.eq.s32.totalorder %s37, 0
      %p253 = por %p251, %p252
      %s255 = sadd.s32 %s254, 1
      %p258 = scmp.eq.s32.totalorder %s31, 1
      %p259 = scmp.ne.s32.totalorder %s254, %s256
      %p260 = scmp.eq.s32.totalorder %s31, 0
      %p261 = por %p259, %p260
      %p262 = scmp.ne.s32.totalorder %s254, %s256
      %p263 = scmp.eq.s32.totalorder %s36, 1
      %p264 = por %p262, %p263
      %p265 = scmp.ne.s32.totalorder %s256, %s257
      %p266 = scmp.eq.s32.totalorder %s36, 0
      %p267 = por %p265, %p266
      %p268 = scmp.ne.s32.totalorder %s256, %s257
      %p269 = scmp.eq.s32.totalorder %s37, 1
      %p270 = por %p268, %p269
      %p272 = scmp.ne.s32.totalorder %s257, %s271
      %p273 = scmp.eq.s32.totalorder %s37, 0
      %p274 = por %p272, %p273
      %s276 = sadd.s32 %s275, 1
      %p279 = scmp.eq.s32.totalorder %s31, 1
      %p280 = scmp.ne.s32.totalorder %s275, %s277
      %p281 = scmp.eq.s32.totalorder %s31, 0
      %p282 = por %p280, %p281
      %p283 = scmp.ne.s32.totalorder %s275, %s277
      %p284 = scmp.eq.s32.totalorder %s36, 1
      %p285 = por %p283, %p284
      %p286 = scmp.ne.s32.totalorder %s277, %s278
      %p287 = scmp.eq.s32.totalorder %s36, 0
      %p288 = por %p286, %p287
      %p289 = scmp.ne.s32.totalorder %s277, %s278
      %p290 = scmp.eq.s32.totalorder %s37, 1
      %p291 = por %p289, %p290
      %p293 = scmp.ne.s32.totalorder %s278, %s292
      %p294 = scmp.eq.s32.totalorder %s37, 0
      %p295 = por %p293, %p294
      %s297 = sadd.s32 %s296, 1
      %p300 = scmp.eq.s32.totalorder %s31, 1
      %p301 = scmp.ne.s32.totalorder %s296, %s298
      %p302 = scmp.eq.s32.totalorder %s31, 0
      %p303 = por %p301, %p302
      %p304 = scmp.ne.s32.totalorder %s296, %s298
      %p305 = scmp.eq.s32.totalorder %s36, 1
      %p306 = por %p304, %p305
      %p307 = scmp.ne.s32.totalorder %s298, %s299
      %p308 = scmp.eq.s32.totalorder %s36, 0
      %p309 = por %p307, %p308
      %p310 = scmp.ne.s32.totalorder %s298, %s299
      %p311 = scmp.eq.s32.totalorder %s37, 1
      %p312 = por %p310, %p311
      %p314 = scmp.ne.s32.totalorder %s299, %s313
      %p315 = scmp.eq.s32.totalorder %s37, 0
      %p316 = por %p314, %p315
      %s318 = sadd.s32 %s317, 1
      %p321 = scmp.eq.s32.totalorder %s31, 1
      %p322 = scmp.ne.s32.totalorder %s317, %s319
      %p323 = scmp.eq.s32.totalorder %s31, 0
      %p324 = por %p322, %p323
      %p325 = scmp.ne.s32.totalorder %s317, %s319
      %p326 = scmp.eq.s32.totalorder %s36, 1
      %p327 = por %p325, %p326
      %p328 = scmp.ne.s32.totalorder %s319, %s320
      %p329 = scmp.eq.s32.totalorder %s36, 0
      %p330 = por %p328, %p329
      %p331 = scmp.ne.s32.totalorder %s319, %s320
      %p332 = scmp.eq.s32.totalorder %s37, 1
      %p333 = por %p331, %p332
      %p335 = scmp.ne.s32.totalorder %s320, %s334
      %p336 = scmp.eq.s32.totalorder %s37, 0
      %p337 = por %p335, %p336
      %s339 = sadd.s32 %s338, 1
      %p342 = scmp.eq.s32.totalorder %s31, 1
      %p343 = scmp.ne.s32.totalorder %s338, %s340
      %p344 = scmp.eq.s32.totalorder %s31, 0
      %p345 = por %p343, %p344
      %p346 = scmp.ne.s32.totalorder %s338, %s340
      %p347 = scmp.eq.s32.totalorder %s36, 1
      %p348 = por %p346, %p347
      %p349 = scmp.ne.s32.totalorder %s340, %s341
      %p350 = scmp.eq.s32.totalorder %s36, 0
      %p351 = por %p349, %p350
      %p352 = scmp.ne.s32.totalorder %s340, %s341
      %p353 = scmp.eq.s32.totalorder %s37, 1
      %p354 = por %p352, %p353
      %p356 = scmp.ne.s32.totalorder %s341, %s355
      %p357 = scmp.eq.s32.totalorder %s37, 0
      %p358 = por %p356, %p357
      %s360 = sadd.s32 %s359, 1
      %p363 = scmp.eq.s32.totalorder %s31, 1
      %p364 = scmp.ne.s32.totalorder %s359, %s361
      %p365 = scmp.eq.s32.totalorder %s31, 0
      %p366 = por %p364, %p365
      %p367 = scmp.ne.s32.totalorder %s359, %s361
      %p368 = scmp.eq.s32.totalorder %s36, 1
      %p369 = por %p367, %p368
      %p370 = scmp.ne.s32.totalorder %s361, %s362
      %p371 = scmp.eq.s32.totalorder %s36, 0
      %p372 = por %p370, %p371
      %p373 = scmp.ne.s32.totalorder %s361, %s362
      %p374 = scmp.eq.s32.totalorder %s37, 1
      %p375 = por %p373, %p374
      %p377 = scmp.ne.s32.totalorder %s362, %s376
      %p378 = scmp.eq.s32.totalorder %s37, 0
      %p379 = por %p377, %p378
      %s381 = sadd.s32 %s380, 1
      %p384 = scmp.eq.s32.totalorder %s31, 1
      %p385 = scmp.ne.s32.totalorder %s380, %s382
      %p386 = scmp.eq.s32.totalorder %s31, 0
      %p387 = por %p385, %p386
      %p388 = scmp.ne.s32.totalorder %s380, %s382
      %p389 = scmp.eq.s32.totalorder %s36, 1
      %p390 = por %p388, %p389
      %p391 = scmp.ne.s32.totalorder %s382, %s383
      %p392 = scmp.eq.s32.totalorder %s36, 0
      %p393 = por %p391, %p392
      %p394 = scmp.ne.s32.totalorder %s382, %s383
      %p395 = scmp.eq.s32.totalorder %s37, 1
      %p396 = por %p394, %p395
      %p398 = scmp.ne.s32.totalorder %s383, %s397
      %p399 = scmp.eq.s32.totalorder %s37, 0
      %p400 = por %p398, %p399
      %s402 = sadd.s32 %s401, 1
      %p405 = scmp.eq.s32.totalorder %s31, 1
      %p406 = scmp.ne.s32.totalorder %s401, %s403
      %p407 = scmp.eq.s32.totalorder %s31, 0
      %p408 = por %p406, %p407
      %p409 = scmp.ne.s32.totalorder %s401, %s403
      %p410 = scmp.eq.s32.totalorder %s36, 1
      %p411 = por %p409, %p410
      %p412 = scmp.ne.s32.totalorder %s403, %s404
      %p413 = scmp.eq.s32.totalorder %s36, 0
      %p414 = por %p412, %p413
      %p415 = scmp.ne.s32.totalorder %s403, %s404
      %p416 = scmp.eq.s32.totalorder %s37, 1
      %p417 = por %p415, %p416
      %p419 = scmp.ne.s32.totalorder %s404, %s418
      %p420 = scmp.eq.s32.totalorder %s37, 0
      %p421 = por %p419, %p420
      %s423 = sadd.s32 %s422, 1
      %p426 = scmp.eq.s32.totalorder %s31, 1
      %p427 = scmp.ne.s32.totalorder %s422, %s424
      %p428 = scmp.eq.s32.totalorder %s31, 0
      %p429 = por %p427, %p428
      %p430 = scmp.ne.s32.totalorder %s422, %s424
      %p431 = scmp.eq.s32.totalorder %s36, 1
      %p432 = por %p430, %p431
      %p433 = scmp.ne.s32.totalorder %s424, %s425
      %p434 = scmp.eq.s32.totalorder %s36, 0
      %p435 = por %p433, %p434
      %p436 = scmp.ne.s32.totalorder %s424, %s425
      %p437 = scmp.eq.s32.totalorder %s37, 1
      %p438 = por %p436, %p437
      %p440 = scmp.ne.s32.totalorder %s425, %s439
      %p441 = scmp.eq.s32.totalorder %s37, 0
      %p442 = por %p440, %p441
      %s444 = sadd.s32 %s443, 1
      %p447 = scmp.eq.s32.totalorder %s31, 1
      %p448 = scmp.ne.s32.totalorder %s443, %s445
      %p449 = scmp.eq.s32.totalorder %s31, 0
      %p450 = por %p448, %p449
      %p451 = scmp.ne.s32.totalorder %s443, %s445
      %p452 = scmp.eq.s32.totalorder %s36, 1
      %p453 = por %p451, %p452
      %p454 = scmp.ne.s32.totalorder %s445, %s446
      %p455 = scmp.eq.s32.totalorder %s36, 0
      %p456 = por %p454, %p455
      %p457 = scmp.ne.s32.totalorder %s445, %s446
      %p458 = scmp.eq.s32.totalorder %s37, 1
      %p459 = por %p457, %p458
      %p461 = scmp.ne.s32.totalorder %s446, %s460
      %p462 = scmp.eq.s32.totalorder %s37, 0
      %p463 = por %p461, %p462
      %s465 = sadd.s32 %s464, 1
      %p468 = scmp.eq.s32.totalorder %s31, 1
      %p469 = scmp.ne.s32.totalorder %s464, %s466
      %p470 = scmp.eq.s32.totalorder %s31, 0
      %p471 = por %p469, %p470
      %p472 = scmp.ne.s32.totalorder %s464, %s466
      %p473 = scmp.eq.s32.totalorder %s36, 1
      %p474 = por %p472, %p473
      %p475 = scmp.ne.s32.totalorder %s466, %s467
      %p476 = scmp.eq.s32.totalorder %s36, 0
      %p477 = por %p475, %p476
      %p478 = scmp.ne.s32.totalorder %s466, %s467
      %p479 = scmp.eq.s32.totalorder %s37, 1
      %p480 = por %p478, %p479
      %p482 = scmp.ne.s32.totalorder %s467, %s481
      %p483 = scmp.eq.s32.totalorder %s37, 0
      %p484 = por %p482, %p483
      %s486 = sadd.s32 %s485, 1
      %p489 = scmp.eq.s32.totalorder %s31, 1
      %p490 = scmp.ne.s32.totalorder %s485, %s487
      %p491 = scmp.eq.s32.totalorder %s31, 0
      %p492 = por %p490, %p491
      %p493 = scmp.ne.s32.totalorder %s485, %s487
      %p494 = scmp.eq.s32.totalorder %s36, 1
      %p495 = por %p493, %p494
      %p496 = scmp.ne.s32.totalorder %s487, %s488
      %p497 = scmp.eq.s32.totalorder %s36, 0
      %p498 = por %p496, %p497
      %p499 = scmp.ne.s32.totalorder %s487, %s488
      %p500 = scmp.eq.s32.totalorder %s37, 1
      %p501 = por %p499, %p500
      %p503 = scmp.ne.s32.totalorder %s488, %s502
      %p504 = scmp.eq.s32.totalorder %s37, 0
      %p505 = por %p503, %p504
      %s506 = ssub.s32 %s31, %s38
      %p507 = scmp.eq.s32.totalorder %s506, 0
      %s509 = sadd.s32 %s508, 1
      %s510 = scalar_select %p507, %s508, %s509
      %p513 = pneg %p507
      %p514 = scmp.eq.s32.totalorder %s31, 1
      %p515 = por %p513, %p514
      %p516 = scmp.ne.s32.totalorder %s508, %s511
      %p517 = scmp.eq.s32.totalorder %s31, 0
      %p518 = por %p516, %p517
      %p519 = scmp.ne.s32.totalorder %s508, %s511
      %p520 = scmp.eq.s32.totalorder %s36, 1
      %p521 = por %p519, %p520
      %p522 = scmp.ne.s32.totalorder %s511, %s512
      %p523 = scmp.eq.s32.totalorder %s36, 0
      %p524 = por %p522, %p523
      %p525 = scmp.ne.s32.totalorder %s511, %s512
      %p526 = scmp.eq.s32.totalorder %s37, 1
      %p527 = por %p525, %p526
      %p529 = scmp.ne.s32.totalorder %s512, %s528
      %p530 = scmp.eq.s32.totalorder %s37, 0
      %p531 = por %p529, %p530
      %p532 = scmp.le.s32.totalorder 1, %s31
      %p533 = scmp.lt.s32.totalorder %s31, 3
      %p534 = pnand %p532, %p533
      %p535 = pneg %p534
      // Predicated region
      $region9: #{clip_vision_tower_forward.1} parent=5 // pred_check
        _
      $region10: #{clip_vision_tower_forward.1} parent=5 // pred_check_branch
        %537 = sbr.rel (%p534) target = $region12
      $region11: #{clip_vision_tower_forward.1} parent=5 // pred_region
        %s538 = ssub.s32 %s31, 1
        // Predicated region
        $region13: #{clip_vision_tower_forward.1} parent=11 // pred_check
          %p539 = pneg %p78
        $region14: #{clip_vision_tower_forward.1} parent=11 // pred_check_branch
          %541 = sbr.rel (%p539) target = $region16
        $region15: #{clip_vision_tower_forward.1} parent=11 // pred_region
          _
        $region16: #{clip_vision_tower_forward.1} parent=11 // pred_fallthru
          _
        // Predicated region
        $region17: #{clip_vision_tower_forward.1} parent=11 // pred_check
          %p542 = pneg %p99
        $region18: #{clip_vision_tower_forward.1} parent=11 // pred_check_branch
          %544 = sbr.rel (%p542) target = $region20
        $region19: #{clip_vision_tower_forward.1} parent=11 // pred_region
          _
        $region20: #{clip_vision_tower_forward.1} parent=11 // pred_fallthru
          _
        // Predicated region
        $region21: #{clip_vision_tower_forward.1} parent=11 // pred_check
          %p545 = pneg %p120
        $region22: #{clip_vision_tower_forward.1} parent=11 // pred_check_branch
          %547 = sbr.rel (%p545) target = $region24
        $region23: #{clip_vision_tower_forward.1} parent=11 // pred_region
          _
        $region24: #{clip_vision_tower_forward.1} parent=11 // pred_fallthru
          _
        // Predicated region
        $region25: #{clip_vision_tower_forward.1} parent=11 // pred_check
          %p548 = pneg %p141
        $region26: #{clip_vision_tower_forward.1} parent=11 // pred_check_branch
          %550 = sbr.rel (%p548) target = $region28
        $region27: #{clip_vision_tower_forward.1} parent=11 // pred_region
          _
        $region28: #{clip_vision_tower_forward.1} parent=11 // pred_fallthru
          _
        // Predicated region
        $region29: #{clip_vision_tower_forward.1} parent=11 // pred_check
          %p551 = pneg %p162
        $region30: #{clip_vision_tower_forward.1} parent=11 // pred_check_branch
          %553 = sbr.rel (%p551) target = $region32
        $region31: #{clip_vision_tower_forward.1} parent=11 // pred_region
          _
        $region32: #{clip_vision_tower_forward.1} parent=11 // pred_fallthru
          _
        // Predicated region
        $region33: #{clip_vision_tower_forward.1} parent=11 // pred_check
          %p554 = pneg %p183
        $region34: #{clip_vision_tower_forward.1} parent=11 // pred_check_branch
          %556 = sbr.rel (%p554) target = $region36
        $region35: #{clip_vision_tower_forward.1} parent=11 // pred_region
          _
        $region36: #{clip_vision_tower_forward.1} parent=11 // pred_fallthru
          _
        // Predicated region
        $region37: #{clip_vision_tower_forward.1} parent=11 // pred_check
          %p557 = pneg %p204
        $region38: #{clip_vision_tower_forward.1} parent=11 // pred_check_branch
          %559 = sbr.rel (%p557) target = $region40
        $region39: #{clip_vision_tower_forward.1} parent=11 // pred_region
          _
        $region40: #{clip_vision_tower_forward.1} parent=11 // pred_fallthru
          _
        // Predicated region
        $region41: #{clip_vision_tower_forward.1} parent=11 // pred_check
          %p560 = pneg %p225
        $region42: #{clip_vision_tower_forward.1} parent=11 // pred_check_branch
          %562 = sbr.rel (%p560) target = $region44
        $region43: #{clip_vision_tower_forward.1} parent=11 // pred_region
          _
        $region44: #{clip_vision_tower_forward.1} parent=11 // pred_fallthru
          _
        // Predicated region
        $region45: #{clip_vision_tower_forward.1} parent=11 // pred_check
          %p563 = pneg %p246
        $region46: #{clip_vision_tower_forward.1} parent=11 // pred_check_branch
          %565 = sbr.rel (%p563) target = $region48
        $region47: #{clip_vision_tower_forward.1} parent=11 // pred_region
          _
        $region48: #{clip_vision_tower_forward.1} parent=11 // pred_fallthru
          _
        // Predicated region
        $region49: #{clip_vision_tower_forward.1} parent=11 // pred_check
          %p566 = pneg %p267
        $region50: #{clip_vision_tower_forward.1} parent=11 // pred_check_branch
          %568 = sbr.rel (%p566) target = $region52
        $region51: #{clip_vision_tower_forward.1} parent=11 // pred_region
          _
        $region52: #{clip_vision_tower_forward.1} parent=11 // pred_fallthru
          _
        // Predicated region
        $region53: #{clip_vision_tower_forward.1} parent=11 // pred_check
          %p569 = pneg %p288
        $region54: #{clip_vision_tower_forward.1} parent=11 // pred_check_branch
          %571 = sbr.rel (%p569) target = $region56
        $region55: #{clip_vision_tower_forward.1} parent=11 // pred_region
          _
        $region56: #{clip_vision_tower_forward.1} parent=11 // pred_fallthru
          _
        // Predicated region
        $region57: #{clip_vision_tower_forward.1} parent=11 // pred_check
          %p572 = pneg %p309
        $region58: #{clip_vision_tower_forward.1} parent=11 // pred_check_branch
          %574 = sbr.rel (%p572) target = $region60
        $region59: #{clip_vision_tower_forward.1} parent=11 // pred_region
          _
        $region60: #{clip_vision_tower_forward.1} parent=11 // pred_fallthru
          _
        // Predicated region
        $region61: #{clip_vision_tower_forward.1} parent=11 // pred_check
          %p575 = pneg %p330
        $region62: #{clip_vision_tower_forward.1} parent=11 // pred_check_branch
          %577 = sbr.rel (%p575) target = $region64
        $region63: #{clip_vision_tower_forward.1} parent=11 // pred_region
          _
        $region64: #{clip_vision_tower_forward.1} parent=11 // pred_fallthru
          _
        // Predicated region
        $region65: #{clip_vision_tower_forward.1} parent=11 // pred_check
          %p578 = pneg %p351
        $region66: #{clip_vision_tower_forward.1} parent=11 // pred_check_branch
          %580 = sbr.rel (%p578) target = $region68
        $region67: #{clip_vision_tower_forward.1} parent=11 // pred_region
          _
        $region68: #{clip_vision_tower_forward.1} parent=11 // pred_fallthru
          _
        // Predicated region
        $region69: #{clip_vision_tower_forward.1} parent=11 // pred_check
          %p581 = pneg %p372
        $region70: #{clip_vision_tower_forward.1} parent=11 // pred_check_branch
          %583 = sbr.rel (%p581) target = $region72
        $region71: #{clip_vision_tower_forward.1} parent=11 // pred_region
          _
        $region72: #{clip_vision_tower_forward.1} parent=11 // pred_fallthru
          _
        // Predicated region
        $region73: #{clip_vision_tower_forward.1} parent=11 // pred_check
          %p584 = pneg %p393
        $region74: #{clip_vision_tower_forward.1} parent=11 // pred_check_branch
          %586 = sbr.rel (%p584) target = $region76
        $region75: #{clip_vision_tower_forward.1} parent=11 // pred_region
          _
        $region76: #{clip_vision_tower_forward.1} parent=11 // pred_fallthru
          _
        // Predicated region
        $region77: #{clip_vision_tower_forward.1} parent=11 // pred_check
          %p587 = pneg %p414
        $region78: #{clip_vision_tower_forward.1} parent=11 // pred_check_branch
          %589 = sbr.rel (%p587) target = $region80
        $region79: #{clip_vision_tower_forward.1} parent=11 // pred_region
          _
        $region80: #{clip_vision_tower_forward.1} parent=11 // pred_fallthru
          _
        // Predicated region
        $region81: #{clip_vision_tower_forward.1} parent=11 // pred_check
          %p590 = pneg %p435
        $region82: #{clip_vision_tower_forward.1} parent=11 // pred_check_branch
          %592 = sbr.rel (%p590) target = $region84
        $region83: #{clip_vision_tower_forward.1} parent=11 // pred_region
          _
        $region84: #{clip_vision_tower_forward.1} parent=11 // pred_fallthru
          _
        // Predicated region
        $region85: #{clip_vision_tower_forward.1} parent=11 // pred_check
          %p593 = pneg %p456
        $region86: #{clip_vision_tower_forward.1} parent=11 // pred_check_branch
          %595 = sbr.rel (%p593) target = $region88
        $region87: #{clip_vision_tower_forward.1} parent=11 // pred_region
          _
        $region88: #{clip_vision_tower_forward.1} parent=11 // pred_fallthru
          _
        // Predicated region
        $region89: #{clip_vision_tower_forward.1} parent=11 // pred_check
          %p596 = pneg %p477
        $region90: #{clip_vision_tower_forward.1} parent=11 // pred_check_branch
          %598 = sbr.rel (%p596) target = $region92
        $region91: #{clip_vision_tower_forward.1} parent=11 // pred_region
          _
        $region92: #{clip_vision_tower_forward.1} parent=11 // pred_fallthru
          _
        // Predicated region
        $region93: #{clip_vision_tower_forward.1} parent=11 // pred_check
          %p599 = pneg %p498
        $region94: #{clip_vision_tower_forward.1} parent=11 // pred_check_branch
          %601 = sbr.rel (%p599) target = $region96
        $region95: #{clip_vision_tower_forward.1} parent=11 // pred_region
          _
        $region96: #{clip_vision_tower_forward.1} parent=11 // pred_fallthru
          _
      $region12: #{clip_vision_tower_forward.1} parent=5 // pred_fallthru
        _
      %p602 = scmp.lt.s32.totalorder %s31, 2
      // Predicated region
      $region97: #{clip_vision_tower_forward.1} parent=5 // pred_check
        %p603 = pneg %p602
      $region98: #{clip_vision_tower_forward.1} parent=5 // pred_check_branch
        %605 = sbr.rel (%p603) target = $region100
      $region99: #{clip_vision_tower_forward.1} parent=5 // pred_region
        // Predicated region
        $region101: #{clip_vision_tower_forward.1} parent=99 // pred_check
          %p606 = pneg %p51
        $region102: #{clip_vision_tower_forward.1} parent=99 // pred_check_branch
          %608 = sbr.rel (%p606) target = $region104
        $region103: #{clip_vision_tower_forward.1} parent=99 // pred_region
          %p609 = scmp.lt.s32.totalorder %s31, 1
          %s610 = scalar_select %p609, %s31, 1
          %s611 = smul.addr %s610, 2
          %s612 = smul.addr %s611, 2
          %s613 = scalar_lea.vmem %s0, %s612
        $region104: #{clip_vision_tower_forward.1} parent=99 // pred_fallthru
          _
      $region100: #{clip_vision_tower_forward.1} parent=5 // pred_fallthru
        _
      %p614 = scmp.le.s32.totalorder 1, %s31
      %p615 = scmp.lt.s32.totalorder %s31, 3
      %p616 = pnand %p614, %p615
      %p617 = pneg %p616
      // Predicated region
      $region105: #{clip_vision_tower_forward.1} parent=5 // pred_check
        _
      $region106: #{clip_vision_tower_forward.1} parent=5 // pred_check_branch
        %619 = sbr.rel (%p616) target = $region108
      $region107: #{clip_vision_tower_forward.1} parent=5 // pred_region
        %s620 = ssub.s32 %s31, 1
        %p621 = scmp.lt.s32.totalorder %s36, 1
        %s622 = scalar_select %p621, %s36, 1
        %s623 = smul.addr %s622, 2
        %s624 = smul.addr %s623, 2
        %s625 = scalar_lea.vmem %s0, %s624
        %p626 = pneg %p57
        %p627 = pneg %p54
        %p628 = pneg %p78
        %p629 = pneg %p75
        %p630 = pneg %p99
        %p631 = pneg %p96
        %p632 = pneg %p120
        %p633 = pneg %p117
        %p634 = pneg %p141
        %p635 = pneg %p138
        %p636 = pneg %p162
        %p637 = pneg %p159
        %p638 = pneg %p183
        %p639 = pneg %p180
        %p640 = pneg %p204
        %p641 = pneg %p201
        %p642 = pneg %p225
        %p643 = pneg %p222
        %p644 = pneg %p246
        %p645 = pneg %p243
        %p646 = pneg %p267
        %p647 = pneg %p264
        %p648 = pneg %p288
        %p649 = pneg %p285
        %p650 = pneg %p309
        %p651 = pneg %p306
        %p652 = pneg %p330
        %p653 = pneg %p327
        %p654 = pneg %p351
        %p655 = pneg %p348
        %p656 = pneg %p372
        %p657 = pneg %p369
        %p658 = pneg %p393
        %p659 = pneg %p390
        %p660 = pneg %p414
        %p661 = pneg %p411
        %p662 = pneg %p435
        %p663 = pneg %p432
        %p664 = pneg %p456
        %p665 = pneg %p453
        %p666 = pneg %p477
        %p667 = pneg %p474
        %p668 = pneg %p498
        %p669 = pneg %p495
        %p670 = pneg %p524
        %p671 = pneg %p521
        %s672 = sand.u32 %s511, 1
        %s673 = scalar_lea.sflag [#allocation3], %s672
        %s674 = sand.u32 %s511, 1
        %s675 = smul.addr %s674, 4
        %s676 = scalar_lea.vmem [#allocation2], %s675
        %p677 = scmp.lt.s32.totalorder %s36, 1
        %s678 = scalar_select %p677, %s36, 1
        %s679 = smul.addr %s678, 2
        %s680 = smul.addr %s679, 2
        %s681 = scalar_lea.vmem %s0, %s680
        %v683 = vld [vmem:[%s681] sm:$0xf]
        %v684 = vld [vmem:[%s1] sm:$0xf]
        %v685 = vld [vmem:[%s1 + $0x4] sm:$0xf]
        %v686 = vld [vmem:[%s1 + $0x8] sm:$0xf]
        %v687 = vld [vmem:[%s1 + $0xc] sm:$0xf]
        %v688 = vld [vmem:[%s1 + $0x10] sm:$0xf]
        %v689 = vld [vmem:[%s1 + $0x14] sm:$0xf]
        %v690 = vld [vmem:[%s1 + $0x18] sm:$0xf]
        %v691 = vld [vmem:[%s1 + $0x1c] sm:$0xf]
        %v692 = vld [vmem:[%s1 + $0x20] sm:$0xf]
        %v693 = vld [vmem:[%s1 + $0x24] sm:$0xf]
        %v694 = vld [vmem:[%s1 + $0x28] sm:$0xf]
        %v695 = vld [vmem:[%s1 + $0x2c] sm:$0xf]
        %v696 = vld [vmem:[%s1 + $0x30] sm:$0xf]
        %v697 = vld [vmem:[%s1 + $0x34] sm:$0xf]
        %v698 = vld [vmem:[%s1 + $0x38] sm:$0xf]
        %v699 = vld [vmem:[%s1 + $0x3c] sm:$0xf]
        %v700 = vld [vmem:[%s1 + $0x40] sm:$0xf]
        %v701 = vld [vmem:[%s1 + $0x44] sm:$0xf]
        %v702 = vld [vmem:[%s1 + $0x48] sm:$0xf]
        %v703 = vld [vmem:[%s1 + $0x4c] sm:$0xf]
        %v704 = vld [vmem:[%s1 + $0x50] sm:$0xf]
        %v705 = vld [vmem:[%s1 + $0x54] sm:$0xf]
        %v706 = vld [vmem:[%s1 + $0x58] sm:$0xf]
        %v707 = vld [vmem:[%s1 + $0x5c] sm:$0xf]
        %v710 = vunpack.c.l.s4 1983009808
        %v711 = vunpack.c.0.s8 %v710
        %v712 = vlaneseq
        %v713 = vshrl.u32 %v712, 7
        %v714 = vsub.s32 %v711, %v713
        %v715 = vrot.slane %v683, %v714
        %v716 = vcombine.high %v715, %v715
        %v742 = vunpack.c.l.b16 %v684
        %v743 = vunpack.c.l.b16 %v685
        %v744 = vunpack.c.l.b16 %v686
        %v745 = vunpack.c.l.b16 %v687
        %v746 = vunpack.c.l.b16 %v688
        %v747 = vunpack.c.l.b16 %v689
        %v748 = vunpack.c.l.b16 %v690
        %v749 = vunpack.c.l.b16 %v691
        %v750 = vunpack.c.l.b16 %v692
        %v751 = vunpack.c.l.b16 %v693
        %v752 = vunpack.c.l.b16 %v694
        %v753 = vunpack.c.l.b16 %v695
        %v754 = vunpack.c.l.b16 %v696
        %v755 = vunpack.c.l.b16 %v697
        %v756 = vunpack.c.l.b16 %v698
        %v757 = vunpack.c.l.b16 %v699
        %v758 = vunpack.c.l.b16 %v700
        %v759 = vunpack.c.l.b16 %v701
        %v760 = vunpack.c.l.b16 %v702
        %v761 = vunpack.c.l.b16 %v703
        %v762 = vunpack.c.l.b16 %v704
        %v763 = vunpack.c.l.b16 %v705
        %v764 = vunpack.c.l.b16 %v706
        %v765 = vunpack.c.l.b16 %v707
        %v766 = vpack.c.b16 %v743, %v742
        %v767 = vpack.c.b16 %v745, %v744
        %v768 = vpack.c.b16 %v747, %v746
        %v769 = vpack.c.b16 %v749, %v748
        %v770 = vpack.c.b16 %v751, %v750
        %v771 = vpack.c.b16 %v753, %v752
        %v772 = vpack.c.b16 %v755, %v754
        %v773 = vpack.c.b16 %v757, %v756
        %v774 = vpack.c.b16 %v759, %v758
        %v775 = vpack.c.b16 %v761, %v760
        %v776 = vpack.c.b16 %v763, %v762
        %v777 = vpack.c.b16 %v765, %v764
        %vm790 = vcmask 523264
        %v792 = vsel %vm790, %v716, 0
        %794 = vmatprep.subr.bf16.mxu0 0
        %795 = vmatpush1.bf16.msra.mxu0 %v766
        %796 = vmatprep.subr.bf16.mxu0 0
        %797 = vmatpush1.bf16.msra.mxu0 %v767
        %798 = vmatprep.subr.bf16.mxu0 0
        %799 = vmatpush1.bf16.msra.mxu0 %v768
        %800 = vmatprep.subr.bf16.mxu0 0
        %801 = vmatpush1.bf16.msra.mxu0 %v769
        %802 = vmatprep.subr.bf16.mxu0 0
        %803 = vmatpush1.bf16.msra.mxu0 %v770
        %804 = vmatprep.subr.bf16.mxu0 0
        %805 = vmatpush1.bf16.msra.mxu0 %v771
        %806 = vmatprep.subr.bf16.mxu0 0
        %807 = vmatpush1.bf16.msra.mxu0 %v772
        %808 = vmatprep.subr.bf16.mxu0 0
        %809 = vmatpush1.bf16.msra.mxu0 %v773
        %810 = vmatprep.subr.bf16.mxu0 0
        %811 = vmatpush1.bf16.msra.mxu0 %v774
        %812 = vmatprep.subr.bf16.mxu0 0
        %813 = vmatpush1.bf16.msra.mxu0 %v775
        %814 = vmatprep.subr.bf16.mxu0 0
        %815 = vmatpush1.bf16.msra.mxu0 %v776
        %816 = vmatprep.subr.bf16.mxu0 0
        %817 = vmatpush1.bf16.msra.mxu0 %v777
        %818 = vmatprep.subr.bf16.mxu0 0
        %819 = vmatpush1.bf16.msra.mxu0 0
        %820 = vmatprep.subr.bf16.mxu0 0
        %821 = vmatpush1.bf16.msra.mxu0 0
        %822 = vmatprep.subr.bf16.mxu0 0
        %823 = vmatpush1.bf16.msra.mxu0 0
        %824 = vmatprep.subr.bf16.mxu0 0
        %825 = vmatpush1.bf16.msra.mxu0 0
        %826 = vmatprep.mubr.bf16.mxu0 %v792
        %827 = vmatmul.mubr.bf16.gmra.mrb[0].mxu0 %v715
        %v828 = vpop.f32.mrb[0].mxu0
        %v829 = vadd.f32 0.0, %v828
        %v830 = vpop.f32.mrb[0].mxu0
        %v831 = vpop.f32.mrb[0].mxu0
        %v832 = vpop.f32.mrb[0].mxu0
        %833 = vdwg.mxu0
        %v834 = vld [vmem:[%s2] sm:$0x1]
        %v836 = vrot.slane %v829, 7
        %vm838 = vcmask 1040384
        %v839 = vsel %vm838, %v834, %v836
        %v840 = vld [vmem:[%s3] sm:$0x1f]
        %v841 = vadd.f32 %v839, %v840
        %v842 = vld [vmem:[%s4] sm:$0x1]
        %v843 = vld [vmem:[%s5] sm:$0x1]
        %vm844 = vcmask 520192
        %v845 = vsel %vm844, %v841, 0.0
        %846 = vadd.xlane.f32.xlu0 %v845
        %v847 = vpop.xlane.xlu0 %846
        %v848 = vrcp.pop 64.0
        %v849 = vmul.f32 %v847, %v848
        %v850 = vsub.f32 %v841, %v849
        %v851 = vmul.f32 %v850, %v850
        %v852 = vsel %vm844, %v851, 0.0
        %853 = vadd.xlane.f32.xlu0 %v852
        %v854 = vpop.xlane.xlu0 %853
        %v855 = vmul.f32 %v854, %v848
        %v856 = vadd.f32 %v855, 1e-05
        %v857 = vrsqrt.pop %v856
        %v858 = vmul.f32 %v850, %v857
        %v860 = vlaneseq
        %v861 = vshrl.u32 %v860, 7
        %v862 = vsub.s32 0, %v861
        %v863 = vrot.slane %v842, %v862
        %v865 = vmul.f32 %v858, %v863
        %v867 = vlaneseq
        %v868 = vshrl.u32 %v867, 7
        %v869 = vsub.s32 0, %v868
        %v870 = vrot.slane %v843, %v869
        %v872 = vadd.f32 %v865, %v870
        %v873 = vld [vmem:[%s6] sm:$0x1]
        %v874 = vld [vmem:[%s7] sm:$0x1]
        %v875 = vsel %vm844, %v872, 0.0
        %876 = vadd.xlane.f32.xlu0 %v875
        %v877 = vpop.xlane.xlu0 %876
        %v878 = vmul.f32 %v877, %v848
        %v879 = vsub.f32 %v872, %v878
        %v880 = vmul.f32 %v879, %v879
        %v881 = vsel %vm844, %v880, 0.0
        %882 = vadd.xlane.f32.xlu0 %v881
        %v883 = vpop.xlane.xlu0 %882
        %v884 = vmul.f32 %v883, %v848
        %v885 = vadd.f32 %v884, 1e-05
        %v886 = vrsqrt.pop %v885
        %v887 = vmul.f32 %v879, %v886
        %v889 = vlaneseq
        %v890 = vshrl.u32 %v889, 7
        %v891 = vsub.s32 0, %v890
        %v892 = vrot.slane %v873, %v891
        %v894 = vmul.f32 %v887, %v892
        %v896 = vlaneseq
        %v897 = vshrl.u32 %v896, 7
        %v898 = vsub.s32 0, %v897
        %v899 = vrot.slane %v874, %v898
        %v901 = vadd.f32 %v894, %v899
        %v902 = vpack.c.bf16 %v901, %v901
        %v903 = vld [vmem:[%s8] sm:$0xf]
        %v904 = vld [vmem:[%s8 + $0x4] sm:$0xf]
        %v905 = vld [vmem:[%s8 + $0x8] sm:$0xf]
        %v906 = vld [vmem:[%s8 + $0xc] sm:$0xf]
        %v907 = vld [vmem:[%s8 + $0x10] sm:$0xf]
        %v908 = vld [vmem:[%s8 + $0x14] sm:$0xf]
        %v909 = vld [vmem:[%s8 + $0x18] sm:$0xf]
        %v910 = vld [vmem:[%s8 + $0x1c] sm:$0xf]
        %v911 = vld [vmem:[%s9] sm:$0x1]
        %v913 = vlaneseq
        %v914 = vshrl.u32 %v913, 7
        %v915 = vsub.s32 0, %v914
        %v916 = vrot.slane %v911, %v915
        %v926 = vunpack.c.l.b16 %v903
        %v927 = vunpack.c.l.b16 %v904
        %v928 = vunpack.c.l.b16 %v905
        %v929 = vunpack.c.l.b16 %v906
        %v930 = vunpack.c.l.b16 %v907
        %v931 = vunpack.c.l.b16 %v908
        %v932 = vunpack.c.l.b16 %v909
        %v933 = vunpack.c.l.b16 %v910
        %v934 = vpack.c.b16 %v927, %v926
        %v935 = vpack.c.b16 %v929, %v928
        %v936 = vpack.c.b16 %v931, %v930
        %v937 = vpack.c.b16 %v933, %v932
        %v943 = vsel %vm790, %v902, 0
        %945 = vmatprep.subr.bf16.mxu0 0
        %946 = vmatpush1.bf16.msra.mxu0 %v934
        %947 = vmatprep.subr.bf16.mxu0 0
        %948 = vmatpush1.bf16.msra.mxu0 %v935
        %949 = vmatprep.subr.bf16.mxu0 0
        %950 = vmatpush1.bf16.msra.mxu0 %v936
        %951 = vmatprep.subr.bf16.mxu0 0
        %952 = vmatpush1.bf16.msra.mxu0 %v937
        %953 = vmatprep.subr.bf16.mxu0 0
        %954 = vmatpush1.bf16.msra.mxu0 0
        %955 = vmatprep.subr.bf16.mxu0 0
        %956 = vmatpush1.bf16.msra.mxu0 0
        %957 = vmatprep.subr.bf16.mxu0 0
        %958 = vmatpush1.bf16.msra.mxu0 0
        %959 = vmatprep.subr.bf16.mxu0 0
        %960 = vmatpush1.bf16.msra.mxu0 0
        %961 = vmatprep.subr.bf16.mxu0 0
        %962 = vmatpush1.bf16.msra.mxu0 0
        %963 = vmatprep.subr.bf16.mxu0 0
        %964 = vmatpush1.bf16.msra.mxu0 0
        %965 = vmatprep.subr.bf16.mxu0 0
        %966 = vmatpush1.bf16.msra.mxu0 0
        %967 = vmatprep.subr.bf16.mxu0 0
        %968 = vmatpush1.bf16.msra.mxu0 0
        %969 = vmatprep.subr.bf16.mxu0 0
        %970 = vmatpush1.bf16.msra.mxu0 0
        %971 = vmatprep.subr.bf16.mxu0 0
        %972 = vmatpush1.bf16.msra.mxu0 0
        %973 = vmatprep.subr.bf16.mxu0 0
        %974 = vmatpush1.bf16.msra.mxu0 0
        %975 = vmatprep.subr.bf16.mxu0 0
        %976 = vmatpush1.bf16.msra.mxu0 0
        %977 = vmatprep.mubr.bf16.mxu0 0
        %978 = vmatmul.mubr.bf16.gmra.mrb[0].mxu0 %v943
        %v979 = vpop.f32.mrb[0].mxu0
        %v980 = vadd.f32 %v916, %v979
        %v981 = vpop.f32.mrb[0].mxu0
        %v982 = vpop.f32.mrb[0].mxu0
        %v983 = vpop.f32.mrb[0].mxu0
        %984 = vdwg.mxu0
        %v985 = vpack.c.bf16 %v980, %v980
        %v986 = vld [vmem:[%s10] sm:$0xf]
        %v987 = vld [vmem:[%s10 + $0x4] sm:$0xf]
        %v988 = vld [vmem:[%s10 + $0x8] sm:$0xf]
        %v989 = vld [vmem:[%s10 + $0xc] sm:$0xf]
        %v990 = vld [vmem:[%s10 + $0x10] sm:$0xf]
        %v991 = vld [vmem:[%s10 + $0x14] sm:$0xf]
        %v992 = vld [vmem:[%s10 + $0x18] sm:$0xf]
        %v993 = vld [vmem:[%s10 + $0x1c] sm:$0xf]
        %v994 = vld [vmem:[%s11] sm:$0x1]
        %v996 = vlaneseq
        %v997 = vshrl.u32 %v996, 7
        %v998 = vsub.s32 0, %v997
        %v999 = vrot.slane %v994, %v998
        %v1009 = vunpack.c.l.b16 %v986
        %v1010 = vunpack.c.l.b16 %v987
        %v1011 = vunpack.c.l.b16 %v988
        %v1012 = vunpack.c.l.b16 %v989
        %v1013 = vunpack.c.l.b16 %v990
        %v1014 = vunpack.c.l.b16 %v991
        %v1015 = vunpack.c.l.b16 %v992
        %v1016 = vunpack.c.l.b16 %v993
        %v1017 = vpack.c.b16 %v1010, %v1009
        %v1018 = vpack.c.b16 %v1012, %v1011
        %v1019 = vpack.c.b16 %v1014, %v1013
        %v1020 = vpack.c.b16 %v1016, %v1015
        %1025 = vmatprep.subr.bf16.mxu0 0
        %1026 = vmatpush1.bf16.msra.mxu0 %v1017
        %1027 = vmatprep.subr.bf16.mxu0 0
        %1028 = vmatpush1.bf16.msra.mxu0 %v1018
        %1029 = vmatprep.subr.bf16.mxu0 0
        %1030 = vmatpush1.bf16.msra.mxu0 %v1019
        %1031 = vmatprep.subr.bf16.mxu0 0
        %1032 = vmatpush1.bf16.msra.mxu0 %v1020
        %1033 = vmatprep.subr.bf16.mxu0 0
        %1034 = vmatpush1.bf16.msra.mxu0 0
        %1035 = vmatprep.subr.bf16.mxu0 0
        %1036 = vmatpush1.bf16.msra.mxu0 0
        %1037 = vmatprep.subr.bf16.mxu0 0
        %1038 = vmatpush1.bf16.msra.mxu0 0
        %1039 = vmatprep.subr.bf16.mxu0 0
        %1040 = vmatpush1.bf16.msra.mxu0 0
        %1041 = vmatprep.subr.bf16.mxu0 0
        %1042 = vmatpush1.bf16.msra.mxu0 0
        %1043 = vmatprep.subr.bf16.mxu0 0
        %1044 = vmatpush1.bf16.msra.mxu0 0
        %1045 = vmatprep.subr.bf16.mxu0 0
        %1046 = vmatpush1.bf16.msra.mxu0 0
        %1047 = vmatprep.subr.bf16.mxu0 0
        %1048 = vmatpush1.bf16.msra.mxu0 0
        %1049 = vmatprep.subr.bf16.mxu0 0
        %1050 = vmatpush1.bf16.msra.mxu0 0
        %1051 = vmatprep.subr.bf16.mxu0 0
        %1052 = vmatpush1.bf16.msra.mxu0 0
        %1053 = vmatprep.subr.bf16.mxu0 0
        %1054 = vmatpush1.bf16.msra.mxu0 0
        %1055 = vmatprep.subr.bf16.mxu0 0
        %1056 = vmatpush1.bf16.msra.mxu0 0
        %1057 = vmatprep.mubr.bf16.mxu0 0
        %1058 = vmatmul.mubr.bf16.gmra.mrb[0].mxu0 %v943
        %v1059 = vpop.f32.mrb[0].mxu0
        %v1060 = vadd.f32 %v999, %v1059
        %v1061 = vpop.f32.mrb[0].mxu0
        %v1062 = vpop.f32.mrb[0].mxu0
        %v1063 = vpop.f32.mrb[0].mxu0
        %1064 = vdwg.mxu0
        %v1065 = vpack.c.bf16 %v1060, %v1060
        %v1066 = vld [vmem:[%s12] sm:$0xf]
        %v1067 = vld [vmem:[%s12 + $0x4] sm:$0xf]
        %v1068 = vld [vmem:[%s12 + $0x8] sm:$0xf]
        %v1069 = vld [vmem:[%s12 + $0xc] sm:$0xf]
        %v1070 = vld [vmem:[%s12 + $0x10] sm:$0xf]
        %v1071 = vld [vmem:[%s12 + $0x14] sm:$0xf]
        %v1072 = vld [vmem:[%s12 + $0x18] sm:$0xf]
        %v1073 = vld [vmem:[%s12 + $0x1c] sm:$0xf]
        %v1074 = vld [vmem:[%s13] sm:$0x1]
        %v1076 = vlaneseq
        %v1077 = vshrl.u32 %v1076, 7
        %v1078 = vsub.s32 0, %v1077
        %v1079 = vrot.slane %v1074, %v1078
        %v1089 = vunpack.c.l.b16 %v1066
        %v1090 = vunpack.c.l.b16 %v1067
        %v1091 = vunpack.c.l.b16 %v1068
        %v1092 = vunpack.c.l.b16 %v1069
        %v1093 = vunpack.c.l.b16 %v1070
        %v1094 = vunpack.c.l.b16 %v1071
        %v1095 = vunpack.c.l.b16 %v1072
        %v1096 = vunpack.c.l.b16 %v1073
        %v1097 = vpack.c.b16 %v1090, %v1089
        %v1098 = vpack.c.b16 %v1092, %v1091
        %v1099 = vpack.c.b16 %v1094, %v1093
        %v1100 = vpack.c.b16 %v1096, %v1095
        %1105 = vmatprep.subr.bf16.mxu0 0
        %1106 = vmatpush1.bf16.msra.mxu0 %v1097
        %1107 = vmatprep.subr.bf16.mxu0 0
        %1108 = vmatpush1.bf16.msra.mxu0 %v1098
        %1109 = vmatprep.subr.bf16.mxu0 0
        %1110 = vmatpush1.bf16.msra.mxu0 %v1099
        %1111 = vmatprep.subr.bf16.mxu0 0
        %1112 = vmatpush1.bf16.msra.mxu0 %v1100
        %1113 = vmatprep.subr.bf16.mxu0 0
        %1114 = vmatpush1.bf16.msra.mxu0 0
        %1115 = vmatprep.subr.bf16.mxu0 0
        %1116 = vmatpush1.bf16.msra.mxu0 0
        %1117 = vmatprep.subr.bf16.mxu0 0
        %1118 = vmatpush1.bf16.msra.mxu0 0
        %1119 = vmatprep.subr.bf16.mxu0 0
        %1120 = vmatpush1.bf16.msra.mxu0 0
        %1121 = vmatprep.subr.bf16.mxu0 0
        %1122 = vmatpush1.bf16.msra.mxu0 0
        %1123 = vmatprep.subr.bf16.mxu0 0
        %1124 = vmatpush1.bf16.msra.mxu0 0
        %1125 = vmatprep.subr.bf16.mxu0 0
        %1126 = vmatpush1.bf16.msra.mxu0 0
        %1127 = vmatprep.subr.bf16.mxu0 0
        %1128 = vmatpush1.bf16.msra.mxu0 0
        %1129 = vmatprep.subr.bf16.mxu0 0
        %1130 = vmatpush1.bf16.msra.mxu0 0
        %1131 = vmatprep.subr.bf16.mxu0 0
        %1132 = vmatpush1.bf16.msra.mxu0 0
        %1133 = vmatprep.subr.bf16.mxu0 0
        %1134 = vmatpush1.bf16.msra.mxu0 0
        %1135 = vmatprep.subr.bf16.mxu0 0
        %1136 = vmatpush1.bf16.msra.mxu0 0
        %1137 = vmatprep.mubr.bf16.mxu0 0
        %1138 = vmatmul.mubr.bf16.gmra.mrb[0].mxu0 %v943
        %v1139 = vpop.f32.mrb[0].mxu0
        %v1140 = vadd.f32 %v1079, %v1139
        %v1141 = vpop.f32.mrb[0].mxu0
        %v1142 = vpop.f32.mrb[0].mxu0
        %v1143 = vpop.f32.mrb[0].mxu0
        %1144 = vdwg.mxu0
        %v1145 = vpack.c.bf16 %v1140, %v1140
        %vm1146 = vcmask 130048
        %v1148 = vsel %vm1146, %v985, 0
        %v1151 = vsel %vm1146, %v1065, 0
        %1153 = vmatprep.subr.bf16.mxu0 0
        %1154 = vmatpush1.bf16.xpose.msra.mxu0 %v1151
        %1155 = vmatprep.subr.bf16.mxu0 0
        %1156 = vmatpush1.bf16.xpose.msra.mxu0 0
        %1157 = vmatprep.subr.bf16.mxu0 0
        %1158 = vmatpush1.bf16.xpose.msra.mxu0 0
        %1159 = vmatprep.subr.bf16.mxu0 0
        %1160 = vmatpush1.bf16.xpose.msra.mxu0 0
        %1161 = vmatprep.subr.bf16.mxu0 0
        %1162 = vmatpush1.bf16.xpose.msra.mxu0 0
        %1163 = vmatprep.subr.bf16.mxu0 0
        %1164 = vmatpush1.bf16.xpose.msra.mxu0 0
        %1165 = vmatprep.subr.bf16.mxu0 0
        %1166 = vmatpush1.bf16.xpose.msra.mxu0 0
        %1167 = vmatprep.subr.bf16.mxu0 0
        %1168 = vmatpush1.bf16.xpose.msra.mxu0 0
        %1169 = vmatprep.subr.bf16.mxu0 0
        %1170 = vmatpush1.bf16.xpose.msra.mxu0 0
        %1171 = vmatprep.subr.bf16.mxu0 0
        %1172 = vmatpush1.bf16.xpose.msra.mxu0 0
        %1173 = vmatprep.subr.bf16.mxu0 0
        %1174 = vmatpush1.bf16.xpose.msra.mxu0 0
        %1175 = vmatprep.subr.bf16.mxu0 0
        %1176 = vmatpush1.bf16.xpose.msra.mxu0 0
        %1177 = vmatprep.subr.bf16.mxu0 0
        %1178 = vmatpush1.bf16.xpose.msra.mxu0 0
        %1179 = vmatprep.subr.bf16.mxu0 0
        %1180 = vmatpush1.bf16.xpose.msra.mxu0 0
        %1181 = vmatprep.subr.bf16.mxu0 0
        %1182 = vmatpush1.bf16.xpose.msra.mxu0 0
        %1183 = vmatprep.subr.bf16.mxu0 0
        %1184 = vmatpush1.bf16.xpose.msra.mxu0 0
        %1185 = vmatprep.mubr.bf16.mxu0 0
        %1186 = vmatmul.mubr.bf16.gmra.mrb[0].mxu0 %v1148
        %v1187 = vpop.f32.mrb[0].mxu0
        %v1188 = vadd.f32 0.0, %v1187
        %v1189 = vpop.f32.mrb[0].mxu0
        %v1190 = vpop.f32.mrb[0].mxu0
        %v1191 = vpop.f32.mrb[0].mxu0
        %1192 = vdwg.mxu0
        %vm1193 = vcmask 36864
        %v1194 = vsel %vm1193, %v1188, -inf
        %1195 = vmax.xlane.f32.xlu0 %v1194
        %v1196 = vpop.xlane.xlu0 %1195
        %v1197 = vsub.f32 %v1188, %v1196
        %v1198 = vmul.f32 %v1197, 1.442695
        %v1199 = vpow.pop %v1198
        %v1200 = vsel %vm1193, %v1199, 0.0
        %1201 = vadd.xlane.f32.xlu0 %v1200
        %v1202 = vpop.xlane.xlu0 %1201
        %v1203 = vrcp.pop %v1202
        %v1204 = vmul.f32 %v1199, %v1203
        %v1205 = vpack.c.bf16 %v1204, %v1204
        %vm1206 = vcmask 39936
        %v1208 = vsel %vm1206, %v1205, 0
        %vm1210 = vcmask 1041408
        %vm1211 = vcmask 1042432
        %v1212 = vsel %vm1210, 4294967295, 65535
        %v1213 = vsel %vm1211, %v1212, 0
        %v1215 = vand.u32 %v1145, %v1213
        %1217 = vmatprep.subr.bf16.mxu0 0
        %1218 = vmatpush1.bf16.msra.mxu0 %v1215
        %1219 = vmatprep.subr.bf16.mxu0 0
        %1220 = vmatpush1.bf16.msra.mxu0 0
        %1221 = vmatprep.subr.bf16.mxu0 0
        %1222 = vmatpush1.bf16.msra.mxu0 0
        %1223 = vmatprep.subr.bf16.mxu0 0
        %1224 = vmatpush1.bf16.msra.mxu0 0
        %1225 = vmatprep.subr.bf16.mxu0 0
        %1226 = vmatpush1.bf16.msra.mxu0 0
        %1227 = vmatprep.subr.bf16.mxu0 0
        %1228 = vmatpush1.bf16.msra.mxu0 0
        %1229 = vmatprep.subr.bf16.mxu0 0
        %1230 = vmatpush1.bf16.msra.mxu0 0
        %1231 = vmatprep.subr.bf16.mxu0 0
        %1232 = vmatpush1.bf16.msra.mxu0 0
        %1233 = vmatprep.subr.bf16.mxu0 0
        %1234 = vmatpush1.bf16.msra.mxu0 0
        %1235 = vmatprep.subr.bf16.mxu0 0
        %1236 = vmatpush1.bf16.msra.mxu0 0
        %1237 = vmatprep.subr.bf16.mxu0 0
        %1238 = vmatpush1.bf16.msra.mxu0 0
        %1239 = vmatprep.subr.bf16.mxu0 0
        %1240 = vmatpush1.bf16.msra.mxu0 0
        %1241 = vmatprep.subr.bf16.mxu0 0
        %1242 = vmatpush1.bf16.msra.mxu0 0
        %1243 = vmatprep.subr.bf16.mxu0 0
        %1244 = vmatpush1.bf16.msra.mxu0 0
        %1245 = vmatprep.subr.bf16.mxu0 0
        %1246 = vmatpush1.bf16.msra.mxu0 0
        %1247 = vmatprep.subr.bf16.mxu0 0
        %1248 = vmatpush1.bf16.msra.mxu0 0
        %1249 = vmatprep.mubr.bf16.mxu0 0
        %1250 = vmatmul.mubr.bf16.gmra.mrb[0].mxu0 %v1208
        %v1251 = vpop.f32.mrb[0].mxu0
        %v1252 = vadd.f32 0.0, %v1251
        %v1253 = vpop.f32.mrb[0].mxu0
        %v1254 = vpop.f32.mrb[0].mxu0
        %v1255 = vpop.f32.mrb[0].mxu0
        %1256 = vdwg.mxu0
        %v1257 = vpack.c.bf16 %v1252, %v1252
        %v1258 = vld [vmem:[%s14] sm:$0xf]
        %v1259 = vld [vmem:[%s14 + $0x4] sm:$0xf]
        %s1260 = scalar_lea.vmem %s8, 32
        %v1261 = vld [vmem:[%s1260] sm:$0xf]
        %v1262 = vld [vmem:[%s1260 + $0x4] sm:$0xf]
        %v1263 = vld [vmem:[%s1260 + $0x8] sm:$0xf]
        %v1264 = vld [vmem:[%s1260 + $0xc] sm:$0xf]
        %v1265 = vld [vmem:[%s1260 + $0x10] sm:$0xf]
        %v1266 = vld [vmem:[%s1260 + $0x14] sm:$0xf]
        %v1267 = vld [vmem:[%s1260 + $0x18] sm:$0xf]
        %v1268 = vld [vmem:[%s1260 + $0x1c] sm:$0xf]
        %s1269 = scalar_lea.vmem %s9, 1
        %v1270 = vld [vmem:[%s1269] sm:$0x1]
        %v1272 = vlaneseq
        %v1273 = vshrl.u32 %v1272, 7
        %v1274 = vsub.s32 0, %v1273
        %v1275 = vrot.slane %v1270, %v1274
        %v1285 = vunpack.c.l.b16 %v1261
        %v1286 = vunpack.c.l.b16 %v1262
        %v1287 = vunpack.c.l.b16 %v1263
        %v1288 = vunpack.c.l.b16 %v1264
        %v1289 = vunpack.c.l.b16 %v1265
        %v1290 = vunpack.c.l.b16 %v1266
        %v1291 = vunpack.c.l.b16 %v1267
        %v1292 = vunpack.c.l.b16 %v1268
        %v1293 = vpack.c.b16 %v1286, %v1285
        %v1294 = vpack.c.b16 %v1288, %v1287
        %v1295 = vpack.c.b16 %v1290, %v1289
        %v1296 = vpack.c.b16 %v1292, %v1291
        %1301 = vmatprep.subr.bf16.mxu0 0
        %1302 = vmatpush1.bf16.msra.mxu0 %v1293
        %1303 = vmatprep.subr.bf16.mxu0 0
        %1304 = vmatpush1.bf16.msra.mxu0 %v1294
        %1305 = vmatprep.subr.bf16.mxu0 0
        %1306 = vmatpush1.bf16.msra.mxu0 %v1295
        %1307 = vmatprep.subr.bf16.mxu0 0
        %1308 = vmatpush1.bf16.msra.mxu0 %v1296
        %1309 = vmatprep.subr.bf16.mxu0 0
        %1310 = vmatpush1.bf16.msra.mxu0 0
        %1311 = vmatprep.subr.bf16.mxu0 0
        %1312 = vmatpush1.bf16.msra.mxu0 0
        %1313 = vmatprep.subr.bf16.mxu0 0
        %1314 = vmatpush1.bf16.msra.mxu0 0
        %1315 = vmatprep.subr.bf16.mxu0 0
        %1316 = vmatpush1.bf16.msra.mxu0 0
        %1317 = vmatprep.subr.bf16.mxu0 0
        %1318 = vmatpush1.bf16.msra.mxu0 0
        %1319 = vmatprep.subr.bf16.mxu0 0
        %1320 = vmatpush1.bf16.msra.mxu0 0
        %1321 = vmatprep.subr.bf16.mxu0 0
        %1322 = vmatpush1.bf16.msra.mxu0 0
        %1323 = vmatprep.subr.bf16.mxu0 0
        %1324 = vmatpush1.bf16.msra.mxu0 0
        %1325 = vmatprep.subr.bf16.mxu0 0
        %1326 = vmatpush1.bf16.msra.mxu0 0
        %1327 = vmatprep.subr.bf16.mxu0 0
        %1328 = vmatpush1.bf16.msra.mxu0 0
        %1329 = vmatprep.subr.bf16.mxu0 0
        %1330 = vmatpush1.bf16.msra.mxu0 0
        %1331 = vmatprep.subr.bf16.mxu0 0
        %1332 = vmatpush1.bf16.msra.mxu0 0
        %1333 = vmatprep.mubr.bf16.mxu0 0
        %1334 = vmatmul.mubr.bf16.gmra.mrb[0].mxu0 %v943
        %v1335 = vpop.f32.mrb[0].mxu0
        %v1336 = vadd.f32 %v1275, %v1335
        %v1337 = vpop.f32.mrb[0].mxu0
        %v1338 = vpop.f32.mrb[0].mxu0
        %v1339 = vpop.f32.mrb[0].mxu0
        %1340 = vdwg.mxu0
        %v1341 = vpack.c.bf16 %v1336, %v1336
        %s1342 = scalar_lea.vmem %s10, 32
        %v1343 = vld [vmem:[%s1342] sm:$0xf]
        %v1344 = vld [vmem:[%s1342 + $0x4] sm:$0xf]
        %v1345 = vld [vmem:[%s1342 + $0x8] sm:$0xf]
        %v1346 = vld [vmem:[%s1342 + $0xc] sm:$0xf]
        %v1347 = vld [vmem:[%s1342 + $0x10] sm:$0xf]
        %v1348 = vld [vmem:[%s1342 + $0x14] sm:$0xf]
        %v1349 = vld [vmem:[%s1342 + $0x18] sm:$0xf]
        %v1350 = vld [vmem:[%s1342 + $0x1c] sm:$0xf]
        %s1351 = scalar_lea.vmem %s11, 1
        %v1352 = vld [vmem:[%s1351] sm:$0x1]
        %v1354 = vlaneseq
        %v1355 = vshrl.u32 %v1354, 7
        %v1356 = vsub.s32 0, %v1355
        %v1357 = vrot.slane %v1352, %v1356
        %v1367 = vunpack.c.l.b16 %v1343
        %v1368 = vunpack.c.l.b16 %v1344
        %v1369 = vunpack.c.l.b16 %v1345
        %v1370 = vunpack.c.l.b16 %v1346
        %v1371 = vunpack.c.l.b16 %v1347
        %v1372 = vunpack.c.l.b16 %v1348
        %v1373 = vunpack.c.l.b16 %v1349
        %v1374 = vunpack.c.l.b16 %v1350
        %v1375 = vpack.c.b16 %v1368, %v1367
        %v1376 = vpack.c.b16 %v1370, %v1369
        %v1377 = vpack.c.b16 %v1372, %v1371
        %v1378 = vpack.c.b16 %v1374, %v1373
        %1383 = vmatprep.subr.bf16.mxu0 0
        %1384 = vmatpush1.bf16.msra.mxu0 %v1375
        %1385 = vmatprep.subr.bf16.mxu0 0
        %1386 = vmatpush1.bf16.msra.mxu0 %v1376
        %1387 = vmatprep.subr.bf16.mxu0 0
        %1388 = vmatpush1.bf16.msra.mxu0 %v1377
        %1389 = vmatprep.subr.bf16.mxu0 0
        %1390 = vmatpush1.bf16.msra.mxu0 %v1378
        %1391 = vmatprep.subr.bf16.mxu0 0
        %1392 = vmatpush1.bf16.msra.mxu0 0
        %1393 = vmatprep.subr.bf16.mxu0 0
        %1394 = vmatpush1.bf16.msra.mxu0 0
        %1395 = vmatprep.subr.bf16.mxu0 0
        %1396 = vmatpush1.bf16.msra.mxu0 0
        %1397 = vmatprep.subr.bf16.mxu0 0
        %1398 = vmatpush1.bf16.msra.mxu0 0
        %1399 = vmatprep.subr.bf16.mxu0 0
        %1400 = vmatpush1.bf16.msra.mxu0 0
        %1401 = vmatprep.subr.bf16.mxu0 0
        %1402 = vmatpush1.bf16.msra.mxu0 0
        %1403 = vmatprep.subr.bf16.mxu0 0
        %1404 = vmatpush1.bf16.msra.mxu0 0
        %1405 = vmatprep.subr.bf16.mxu0 0
        %1406 = vmatpush1.bf16.msra.mxu0 0
        %1407 = vmatprep.subr.bf16.mxu0 0
        %1408 = vmatpush1.bf16.msra.mxu0 0
        %1409 = vmatprep.subr.bf16.mxu0 0
        %1410 = vmatpush1.bf16.msra.mxu0 0
        %1411 = vmatprep.subr.bf16.mxu0 0
        %1412 = vmatpush1.bf16.msra.mxu0 0
        %1413 = vmatprep.subr.bf16.mxu0 0
        %1414 = vmatpush1.bf16.msra.mxu0 0
        %1415 = vmatprep.mubr.bf16.mxu0 0
        %1416 = vmatmul.mubr.bf16.gmra.mrb[0].mxu0 %v943
        %v1417 = vpop.f32.mrb[0].mxu0
        %v1418 = vadd.f32 %v1357, %v1417
        %v1419 = vpop.f32.mrb[0].mxu0
        %v1420 = vpop.f32.mrb[0].mxu0
        %v1421 = vpop.f32.mrb[0].mxu0
        %1422 = vdwg.mxu0
        %v1423 = vpack.c.bf16 %v1418, %v1418
        %s1424 = scalar_lea.vmem %s12, 32
        %v1425 = vld [vmem:[%s1424] sm:$0xf]
        %v1426 = vld [vmem:[%s1424 + $0x4] sm:$0xf]
        %v1427 = vld [vmem:[%s1424 + $0x8] sm:$0xf]
        %v1428 = vld [vmem:[%s1424 + $0xc] sm:$0xf]
        %v1429 = vld [vmem:[%s1424 + $0x10] sm:$0xf]
        %v1430 = vld [vmem:[%s1424 + $0x14] sm:$0xf]
        %v1431 = vld [vmem:[%s1424 + $0x18] sm:$0xf]
        %v1432 = vld [vmem:[%s1424 + $0x1c] sm:$0xf]
        %s1433 = scalar_lea.vmem %s13, 1
        %v1434 = vld [vmem:[%s1433] sm:$0x1]
        %v1436 = vlaneseq
        %v1437 = vshrl.u32 %v1436, 7
        %v1438 = vsub.s32 0, %v1437
        %v1439 = vrot.slane %v1434, %v1438
        %v1449 = vunpack.c.l.b16 %v1425
        %v1450 = vunpack.c.l.b16 %v1426
        %v1451 = vunpack.c.l.b16 %v1427
        %v1452 = vunpack.c.l.b16 %v1428
        %v1453 = vunpack.c.l.b16 %v1429
        %v1454 = vunpack.c.l.b16 %v1430
        %v1455 = vunpack.c.l.b16 %v1431
        %v1456 = vunpack.c.l.b16 %v1432
        %v1457 = vpack.c.b16 %v1450, %v1449
        %v1458 = vpack.c.b16 %v1452, %v1451
        %v1459 = vpack.c.b16 %v1454, %v1453
        %v1460 = vpack.c.b16 %v1456, %v1455
        %1465 = vmatprep.subr.bf16.mxu0 0
        %1466 = vmatpush1.bf16.msra.mxu0 %v1457
        %1467 = vmatprep.subr.bf16.mxu0 0
        %1468 = vmatpush1.bf16.msra.mxu0 %v1458
        %1469 = vmatprep.subr.bf16.mxu0 0
        %1470 = vmatpush1.bf16.msra.mxu0 %v1459
        %1471 = vmatprep.subr.bf16.mxu0 0
        %1472 = vmatpush1.bf16.msra.mxu0 %v1460
        %1473 = vmatprep.subr.bf16.mxu0 0
        %1474 = vmatpush1.bf16.msra.mxu0 0
        %1475 = vmatprep.subr.bf16.mxu0 0
        %1476 = vmatpush1.bf16.msra.mxu0 0
        %1477 = vmatprep.subr.bf16.mxu0 0
        %1478 = vmatpush1.bf16.msra.mxu0 0
        %1479 = vmatprep.subr.bf16.mxu0 0
        %1480 = vmatpush1.bf16.msra.mxu0 0
        %1481 = vmatprep.subr.bf16.mxu0 0
        %1482 = vmatpush1.bf16.msra.mxu0 0
        %1483 = vmatprep.subr.bf16.mxu0 0
        %1484 = vmatpush1.bf16.msra.mxu0 0
        %1485 = vmatprep.subr.bf16.mxu0 0
        %1486 = vmatpush1.bf16.msra.mxu0 0
        %1487 = vmatprep.subr.bf16.mxu0 0
        %1488 = vmatpush1.bf16.msra.mxu0 0
        %1489 = vmatprep.subr.bf16.mxu0 0
        %1490 = vmatpush1.bf16.msra.mxu0 0
        %1491 = vmatprep.subr.bf16.mxu0 0
        %1492 = vmatpush1.bf16.msra.mxu0 0
        %1493 = vmatprep.subr.bf16.mxu0 0
        %1494 = vmatpush1.bf16.msra.mxu0 0
        %1495 = vmatprep.subr.bf16.mxu0 0
        %1496 = vmatpush1.bf16.msra.mxu0 0
        %1497 = vmatprep.mubr.bf16.mxu0 0
        %1498 = vmatmul.mubr.bf16.gmra.mrb[0].mxu0 %v943
        %v1499 = vpop.f32.mrb[0].mxu0
        %v1500 = vadd.f32 %v1439, %v1499
        %v1501 = vpop.f32.mrb[0].mxu0
        %v1502 = vpop.f32.mrb[0].mxu0
        %v1503 = vpop.f32.mrb[0].mxu0
        %1504 = vdwg.mxu0
        %v1505 = vpack.c.bf16 %v1500, %v1500
        %v1507 = vsel %vm1146, %v1341, 0
        %v1510 = vsel %vm1146, %v1423, 0
        %1512 = vmatprep.subr.bf16.mxu0 0
        %1513 = vmatpush1.bf16.xpose.msra.mxu0 %v1510
        %1514 = vmatprep.subr.bf16.mxu0 0
        %1515 = vmatpush1.bf16.xpose.msra.mxu0 0
        %1516 = vmatprep.subr.bf16.mxu0 0
        %1517 = vmatpush1.bf16.xpose.msra.mxu0 0
        %1518 = vmatprep.subr.bf16.mxu0 0
        %1519 = vmatpush1.bf16.xpose.msra.mxu0 0
        %1520 = vmatprep.subr.bf16.mxu0 0
        %1521 = vmatpush1.bf16.xpose.msra.mxu0 0
        %1522 = vmatprep.subr.bf16.mxu0 0
        %1523 = vmatpush1.bf16.xpose.msra.mxu0 0
        %1524 = vmatprep.subr.bf16.mxu0 0
        %1525 = vmatpush1.bf16.xpose.msra.mxu0 0
        %1526 = vmatprep.subr.bf16.mxu0 0
        %1527 = vmatpush1.bf16.xpose.msra.mxu0 0
        %1528 = vmatprep.subr.bf16.mxu0 0
        %1529 = vmatpush1.bf16.xpose.msra.mxu0 0
        %1530 = vmatprep.subr.bf16.mxu0 0
        %1531 = vmatpush1.bf16.xpose.msra.mxu0 0
        %1532 = vmatprep.subr.bf16.mxu0 0
        %1533 = vmatpush1.bf16.xpose.msra.mxu0 0
        %1534 = vmatprep.subr.bf16.mxu0 0
        %1535 = vmatpush1.bf16.xpose.msra.mxu0 0
        %1536 = vmatprep.subr.bf16.mxu0 0
        %1537 = vmatpush1.bf16.xpose.msra.mxu0 0
        %1538 = vmatprep.subr.bf16.mxu0 0
        %1539 = vmatpush1.bf16.xpose.msra.mxu0 0
        %1540 = vmatprep.subr.bf16.mxu0 0
        %1541 = vmatpush1.bf16.xpose.msra.mxu0 0
        %1542 = vmatprep.subr.bf16.mxu0 0
        %1543 = vmatpush1.bf16.xpose.msra.mxu0 0
        %1544 = vmatprep.mubr.bf16.mxu0 0
        %1545 = vmatmul.mubr.bf16.gmra.mrb[0].mxu0 %v1507
        %v1546 = vpop.f32.mrb[0].mxu0
        %v1547 = vadd.f32 0.0, %v1546
        %v1548 = vpop.f32.mrb[0].mxu0
        %v1549 = vpop.f32.mrb[0].mxu0
        %v1550 = vpop.f32.mrb[0].mxu0
        %1551 = vdwg.mxu0
        %v1552 = vsel %vm1193, %v1547, -inf
        %1553 = vmax.xlane.f32.xlu0 %v1552
        %v1554 = vpop.xlane.xlu0 %1553
        %v1555 = vsub.f32 %v1547, %v1554
        %v1556 = vmul.f32 %v1555, 1.442695
        %v1557 = vpow.pop %v1556
        %v1558 = vsel %vm1193, %v1557, 0.0
        %1559 = vadd.xlane.f32.xlu0 %v1558
        %v1560 = vpop.xlane.xlu0 %1559
        %v1561 = vrcp.pop %v1560
        %v1562 = vmul.f32 %v1557, %v1561
        %v1563 = vpack.c.bf16 %v1562, %v1562
        %v1565 = vsel %vm1206, %v1563, 0
        %v1568 = vand.u32 %v1505, %v1213
        %1570 = vmatprep.subr.bf16.mxu0 0
        %1571 = vmatpush1.bf16.msra.mxu0 %v1568
        %1572 = vmatprep.subr.bf16.mxu0 0
        %1573 = vmatpush1.bf16.msra.mxu0 0
        %1574 = vmatprep.subr.bf16.mxu0 0
        %1575 = vmatpush1.bf16.msra.mxu0 0
        %1576 = vmatprep.subr.bf16.mxu0 0
        %1577 = vmatpush1.bf16.msra.mxu0 0
        %1578 = vmatprep.subr.bf16.mxu0 0
        %1579 = vmatpush1.bf16.msra.mxu0 0
        %1580 = vmatprep.subr.bf16.mxu0 0
        %1581 = vmatpush1.bf16.msra.mxu0 0
        %1582 = vmatprep.subr.bf16.mxu0 0
        %1583 = vmatpush1.bf16.msra.mxu0 0
        %1584 = vmatprep.subr.bf16.mxu0 0
        %1585 = vmatpush1.bf16.msra.mxu0 0
        %1586 = vmatprep.subr.bf16.mxu0 0
        %1587 = vmatpush1.bf16.msra.mxu0 0
        %1588 = vmatprep.subr.bf16.mxu0 0
        %1589 = vmatpush1.bf16.msra.mxu0 0
        %1590 = vmatprep.subr.bf16.mxu0 0
        %1591 = vmatpush1.bf16.msra.mxu0 0
        %1592 = vmatprep.subr.bf16.mxu0 0
        %1593 = vmatpush1.bf16.msra.mxu0 0
        %1594 = vmatprep.subr.bf16.mxu0 0
        %1595 = vmatpush1.bf16.msra.mxu0 0
        %1596 = vmatprep.subr.bf16.mxu0 0
        %1597 = vmatpush1.bf16.msra.mxu0 0
        %1598 = vmatprep.subr.bf16.mxu0 0
        %1599 = vmatpush1.bf16.msra.mxu0 0
        %1600 = vmatprep.subr.bf16.mxu0 0
        %1601 = vmatpush1.bf16.msra.mxu0 0
        %1602 = vmatprep.mubr.bf16.mxu0 0
        %1603 = vmatmul.mubr.bf16.gmra.mrb[0].mxu0 %v1565
        %v1604 = vpop.f32.mrb[0].mxu0
        %v1605 = vadd.f32 0.0, %v1604
        %v1606 = vpop.f32.mrb[0].mxu0
        %v1607 = vpop.f32.mrb[0].mxu0
        %v1608 = vpop.f32.mrb[0].mxu0
        %1609 = vdwg.mxu0
        %v1610 = vpack.c.bf16 %v1605, %v1605
        %s1611 = scalar_lea.vmem %s14, 8
        %v1612 = vld [vmem:[%s1611] sm:$0xf]
        %v1613 = vld [vmem:[%s1611 + $0x4] sm:$0xf]
        %v1616 = vunpack.c.l.b16 %v1612
        %v1617 = vunpack.c.l.b16 %v1613
        %v1618 = vpack.c.b16 %v1617, %v1616
        %v1621 = vsel %vm1146, %v1610, 0
        %1623 = vmatprep.subr.bf16.mxu0 0
        %1624 = vmatpush1.bf16.msra.mxu0 %v1618
        %1625 = vmatprep.subr.bf16.mxu0 0
        %1626 = vmatpush1.bf16.msra.mxu0 0
        %1627 = vmatprep.subr.bf16.mxu0 0
        %1628 = vmatpush1.bf16.msra.mxu0 0
        %1629 = vmatprep.subr.bf16.mxu0 0
        %1630 = vmatpush1.bf16.msra.mxu0 0
        %1631 = vmatprep.subr.bf16.mxu0 0
        %1632 = vmatpush1.bf16.msra.mxu0 0
        %1633 = vmatprep.subr.bf16.mxu0 0
        %1634 = vmatpush1.bf16.msra.mxu0 0
        %1635 = vmatprep.subr.bf16.mxu0 0
        %1636 = vmatpush1.bf16.msra.mxu0 0
        %1637 = vmatprep.subr.bf16.mxu0 0
        %1638 = vmatpush1.bf16.msra.mxu0 0
        %1639 = vmatprep.subr.bf16.mxu0 0
        %1640 = vmatpush1.bf16.msra.mxu0 0
        %1641 = vmatprep.subr.bf16.mxu0 0
        %1642 = vmatpush1.bf16.msra.mxu0 0
        %1643 = vmatprep.subr.bf16.mxu0 0
        %1644 = vmatpush1.bf16.msra.mxu0 0
        %1645 = vmatprep.subr.bf16.mxu0 0
        %1646 = vmatpush1.bf16.msra.mxu0 0
        %1647 = vmatprep.subr.bf16.mxu0 0
        %1648 = vmatpush1.bf16.msra.mxu0 0
        %1649 = vmatprep.subr.bf16.mxu0 0
        %1650 = vmatpush1.bf16.msra.mxu0 0
        %1651 = vmatprep.subr.bf16.mxu0 0
        %1652 = vmatpush1.bf16.msra.mxu0 0
        %1653 = vmatprep.subr.bf16.mxu0 0
        %1654 = vmatpush1.bf16.msra.mxu0 0
        %1655 = vmatprep.mubr.bf16.mxu0 0
        %1656 = vmatmul.mubr.bf16.gmra.mrb[0].mxu0 %v1621
        %v1657 = vpop.f32.mrb[0].mxu0
        %v1658 = vadd.f32 0.0, %v1657
        %v1659 = vpop.f32.mrb[0].mxu0
        %v1660 = vpop.f32.mrb[0].mxu0
        %v1661 = vpop.f32.mrb[0].mxu0
        %1662 = vdwg.mxu0
        %v1665 = vunpack.c.l.b16 %v1258
        %v1666 = vunpack.c.l.b16 %v1259
        %v1667 = vpack.c.b16 %v1666, %v1665
        %v1670 = vsel %vm1146, %v1257, 0
        %1672 = vmatprep.subr.bf16.mxu0 0
        %1673 = vmatpush1.bf16.msra.mxu0 %v1667
        %1674 = vmatprep.subr.bf16.mxu0 0
        %1675 = vmatpush1.bf16.msra.mxu0 0
        %1676 = vmatprep.subr.bf16.mxu0 0
        %1677 = vmatpush1.bf16.msra.mxu0 0
        %1678 = vmatprep.subr.bf16.mxu0 0
        %1679 = vmatpush1.bf16.msra.mxu0 0
        %1680 = vmatprep.subr.bf16.mxu0 0
        %1681 = vmatpush1.bf16.msra.mxu0 0
        %1682 = vmatprep.subr.bf16.mxu0 0
        %1683 = vmatpush1.bf16.msra.mxu0 0
        %1684 = vmatprep.subr.bf16.mxu0 0
        %1685 = vmatpush1.bf16.msra.mxu0 0
        %1686 = vmatprep.subr.bf16.mxu0 0
        %1687 = vmatpush1.bf16.msra.mxu0 0
        %1688 = vmatprep.subr.bf16.mxu0 0
        %1689 = vmatpush1.bf16.msra.mxu0 0
        %1690 = vmatprep.subr.bf16.mxu0 0
        %1691 = vmatpush1.bf16.msra.mxu0 0
        %1692 = vmatprep.subr.bf16.mxu0 0
        %1693 = vmatpush1.bf16.msra.mxu0 0
        %1694 = vmatprep.subr.bf16.mxu0 0
        %1695 = vmatpush1.bf16.msra.mxu0 0
        %1696 = vmatprep.subr.bf16.mxu0 0
        %1697 = vmatpush1.bf16.msra.mxu0 0
        %1698 = vmatprep.subr.bf16.mxu0 0
        %1699 = vmatpush1.bf16.msra.mxu0 0
        %1700 = vmatprep.subr.bf16.mxu0 0
        %1701 = vmatpush1.bf16.msra.mxu0 0
        %1702 = vmatprep.subr.bf16.mxu0 0
        %1703 = vmatpush1.bf16.msra.mxu0 0
        %1704 = vmatprep.mubr.bf16.mxu0 0
        %1705 = vmatmul.mubr.bf16.gmra.mrb[0].mxu0 %v1670
        %v1706 = vpop.f32.mrb[0].mxu0
        %v1707 = vadd.f32 %v1658, %v1706
        %v1708 = vpop.f32.mrb[0].mxu0
        %v1709 = vpop.f32.mrb[0].mxu0
        %v1710 = vpop.f32.mrb[0].mxu0
        %1711 = vdwg.mxu0
        %s1712 = scalar_lea.vmem %s8, 64
        %v1713 = vld [vmem:[%s1712] sm:$0xf]
        %v1714 = vld [vmem:[%s1712 + $0x4] sm:$0xf]
        %v1715 = vld [vmem:[%s1712 + $0x8] sm:$0xf]
        %v1716 = vld [vmem:[%s1712 + $0xc] sm:$0xf]
        %v1717 = vld [vmem:[%s1712 + $0x10] sm:$0xf]
        %v1718 = vld [vmem:[%s1712 + $0x14] sm:$0xf]
        %v1719 = vld [vmem:[%s1712 + $0x18] sm:$0xf]
        %v1720 = vld [vmem:[%s1712 + $0x1c] sm:$0xf]
        %s1721 = scalar_lea.vmem %s9, 2
        %v1722 = vld [vmem:[%s1721] sm:$0x1]
        %v1724 = vlaneseq
        %v1725 = vshrl.u32 %v1724, 7
        %v1726 = vsub.s32 0, %v1725
        %v1727 = vrot.slane %v1722, %v1726
        %v1737 = vunpack.c.l.b16 %v1713
        %v1738 = vunpack.c.l.b16 %v1714
        %v1739 = vunpack.c.l.b16 %v1715
        %v1740 = vunpack.c.l.b16 %v1716
        %v1741 = vunpack.c.l.b16 %v1717
        %v1742 = vunpack.c.l.b16 %v1718
        %v1743 = vunpack.c.l.b16 %v1719
        %v1744 = vunpack.c.l.b16 %v1720
        %v1745 = vpack.c.b16 %v1738, %v1737
        %v1746 = vpack.c.b16 %v1740, %v1739
        %v1747 = vpack.c.b16 %v1742, %v1741
        %v1748 = vpack.c.b16 %v1744, %v1743
        %1753 = vmatprep.subr.bf16.mxu0 0
        %1754 = vmatpush1.bf16.msra.mxu0 %v1745
        %1755 = vmatprep.subr.bf16.mxu0 0
        %1756 = vmatpush1.bf16.msra.mxu0 %v1746
        %1757 = vmatprep.subr.bf16.mxu0 0
        %1758 = vmatpush1.bf16.msra.mxu0 %v1747
        %1759 = vmatprep.subr.bf16.mxu0 0
        %1760 = vmatpush1.bf16.msra.mxu0 %v1748
        %1761 = vmatprep.subr.bf16.mxu0 0
        %1762 = vmatpush1.bf16.msra.mxu0 0
        %1763 = vmatprep.subr.bf16.mxu0 0
        %1764 = vmatpush1.bf16.msra.mxu0 0
        %1765 = vmatprep.subr.bf16.mxu0 0
        %1766 = vmatpush1.bf16.msra.mxu0 0
        %1767 = vmatprep.subr.bf16.mxu0 0
        %1768 = vmatpush1.bf16.msra.mxu0 0
        %1769 = vmatprep.subr.bf16.mxu0 0
        %1770 = vmatpush1.bf16.msra.mxu0 0
        %1771 = vmatprep.subr.bf16.mxu0 0
        %1772 = vmatpush1.bf16.msra.mxu0 0
        %1773 = vmatprep.subr.bf16.mxu0 0
        %1774 = vmatpush1.bf16.msra.mxu0 0
        %1775 = vmatprep.subr.bf16.mxu0 0
        %1776 = vmatpush1.bf16.msra.mxu0 0
        %1777 = vmatprep.subr.bf16.mxu0 0
        %1778 = vmatpush1.bf16.msra.mxu0 0
        %1779 = vmatprep.subr.bf16.mxu0 0
        %1780 = vmatpush1.bf16.msra.mxu0 0
        %1781 = vmatprep.subr.bf16.mxu0 0
        %1782 = vmatpush1.bf16.msra.mxu0 0
        %1783 = vmatprep.subr.bf16.mxu0 0
        %1784 = vmatpush1.bf16.msra.mxu0 0
        %1785 = vmatprep.mubr.bf16.mxu0 0
        %1786 = vmatmul.mubr.bf16.gmra.mrb[0].mxu0 %v943
        %v1787 = vpop.f32.mrb[0].mxu0
        %v1788 = vadd.f32 %v1727, %v1787
        %v1789 = vpop.f32.mrb[0].mxu0
        %v1790 = vpop.f32.mrb[0].mxu0
        %v1791 = vpop.f32.mrb[0].mxu0
        %1792 = vdwg.mxu0
        %v1793 = vpack.c.bf16 %v1788, %v1788
        %s1794 = scalar_lea.vmem %s10, 64
        %v1795 = vld [vmem:[%s1794] sm:$0xf]
        %v1796 = vld [vmem:[%s1794 + $0x4] sm:$0xf]
        %v1797 = vld [vmem:[%s1794 + $0x8] sm:$0xf]
        %v1798 = vld [vmem:[%s1794 + $0xc] sm:$0xf]
        %v1799 = vld [vmem:[%s1794 + $0x10] sm:$0xf]
        %v1800 = vld [vmem:[%s1794 + $0x14] sm:$0xf]
        %v1801 = vld [vmem:[%s1794 + $0x18] sm:$0xf]
        %v1802 = vld [vmem:[%s1794 + $0x1c] sm:$0xf]
        %s1803 = scalar_lea.vmem %s11, 2
        %v1804 = vld [vmem:[%s1803] sm:$0x1]
        %v1806 = vlaneseq
        %v1807 = vshrl.u32 %v1806, 7
        %v1808 = vsub.s32 0, %v1807
        %v1809 = vrot.slane %v1804, %v1808
        %v1819 = vunpack.c.l.b16 %v1795
        %v1820 = vunpack.c.l.b16 %v1796
        %v1821 = vunpack.c.l.b16 %v1797
        %v1822 = vunpack.c.l.b16 %v1798
        %v1823 = vunpack.c.l.b16 %v1799
        %v1824 = vunpack.c.l.b16 %v1800
        %v1825 = vunpack.c.l.b16 %v1801
        %v1826 = vunpack.c.l.b16 %v1802
        %v1827 = vpack.c.b16 %v1820, %v1819
        %v1828 = vpack.c.b16 %v1822, %v1821
        %v1829 = vpack.c.b16 %v1824, %v1823
        %v1830 = vpack.c.b16 %v1826, %v1825
        %1835 = vmatprep.subr.bf16.mxu0 0
        %1836 = vmatpush1.bf16.msra.mxu0 %v1827
        %1837 = vmatprep.subr.bf16.mxu0 0
        %1838 = vmatpush1.bf16.msra.mxu0 %v1828
        %1839 = vmatprep.subr.bf16.mxu0 0
        %1840 = vmatpush1.bf16.msra.mxu0 %v1829
        %1841 = vmatprep.subr.bf16.mxu0 0
        %1842 = vmatpush1.bf16.msra.mxu0 %v1830
        %1843 = vmatprep.subr.bf16.mxu0 0
        %1844 = vmatpush1.bf16.msra.mxu0 0
        %1845 = vmatprep.subr.bf16.mxu0 0
        %1846 = vmatpush1.bf16.msra.mxu0 0
        %1847 = vmatprep.subr.bf16.mxu0 0
        %1848 = vmatpush1.bf16.msra.mxu0 0
        %1849 = vmatprep.subr.bf16.mxu0 0
        %1850 = vmatpush1.bf16.msra.mxu0 0
        %1851 = vmatprep.subr.bf16.mxu0 0
        %1852 = vmatpush1.bf16.msra.mxu0 0
        %1853 = vmatprep.subr.bf16.mxu0 0
        %1854 = vmatpush1.bf16.msra.mxu0 0
        %1855 = vmatprep.subr.bf16.mxu0 0
        %1856 = vmatpush1.bf16.msra.mxu0 0
        %1857 = vmatprep.subr.bf16.mxu0 0
        %1858 = vmatpush1.bf16.msra.mxu0 0
        %1859 = vmatprep.subr.bf16.mxu0 0
        %1860 = vmatpush1.bf16.msra.mxu0 0
        %1861 = vmatprep.subr.bf16.mxu0 0
        %1862 = vmatpush1.bf16.msra.mxu0 0
        %1863 = vmatprep.subr.bf16.mxu0 0
        %1864 = vmatpush1.bf16.msra.mxu0 0
        %1865 = vmatprep.subr.bf16.mxu0 0
        %1866 = vmatpush1.bf16.msra.mxu0 0
        %1867 = vmatprep.mubr.bf16.mxu0 0
        %1868 = vmatmul.mubr.bf16.gmra.mrb[0].mxu0 %v943
        %v1869 = vpop.f32.mrb[0].mxu0
        %v1870 = vadd.f32 %v1809, %v1869
        %v1871 = vpop.f32.mrb[0].mxu0
        %v1872 = vpop.f32.mrb[0].mxu0
        %v1873 = vpop.f32.mrb[0].mxu0
        %1874 = vdwg.mxu0
        %v1875 = vpack.c.bf16 %v1870, %v1870
        %s1876 = scalar_lea.vmem %s12, 64
        %v1877 = vld [vmem:[%s1876] sm:$0xf]
        %v1878 = vld [vmem:[%s1876 + $0x4] sm:$0xf]
        %v1879 = vld [vmem:[%s1876 + $0x8] sm:$0xf]
        %v1880 = vld [vmem:[%s1876 + $0xc] sm:$0xf]
        %v1881 = vld [vmem:[%s1876 + $0x10] sm:$0xf]
        %v1882 = vld [vmem:[%s1876 + $0x14] sm:$0xf]
        %v1883 = vld [vmem:[%s1876 + $0x18] sm:$0xf]
        %v1884 = vld [vmem:[%s1876 + $0x1c] sm:$0xf]
        %s1885 = scalar_lea.vmem %s13, 2
        %v1886 = vld [vmem:[%s1885] sm:$0x1]
        %v1888 = vlaneseq
        %v1889 = vshrl.u32 %v1888, 7
        %v1890 = vsub.s32 0, %v1889
        %v1891 = vrot.slane %v1886, %v1890
        %v1901 = vunpack.c.l.b16 %v1877
        %v1902 = vunpack.c.l.b16 %v1878
        %v1903 = vunpack.c.l.b16 %v1879
        %v1904 = vunpack.c.l.b16 %v1880
        %v1905 = vunpack.c.l.b16 %v1881
        %v1906 = vunpack.c.l.b16 %v1882
        %v1907 = vunpack.c.l.b16 %v1883
        %v1908 = vunpack.c.l.b16 %v1884
        %v1909 = vpack.c.b16 %v1902, %v1901
        %v1910 = vpack.c.b16 %v1904, %v1903
        %v1911 = vpack.c.b16 %v1906, %v1905
        %v1912 = vpack.c.b16 %v1908, %v1907
        %1917 = vmatprep.subr.bf16.mxu0 0
        %1918 = vmatpush1.bf16.msra.mxu0 %v1909
        %1919 = vmatprep.subr.bf16.mxu0 0
        %1920 = vmatpush1.bf16.msra.mxu0 %v1910
        %1921 = vmatprep.subr.bf16.mxu0 0
        %1922 = vmatpush1.bf16.msra.mxu0 %v1911
        %1923 = vmatprep.subr.bf16.mxu0 0
        %1924 = vmatpush1.bf16.msra.mxu0 %v1912
        %1925 = vmatprep.subr.bf16.mxu0 0
        %1926 = vmatpush1.bf16.msra.mxu0 0
        %1927 = vmatprep.subr.bf16.mxu0 0
        %1928 = vmatpush1.bf16.msra.mxu0 0
        %1929 = vmatprep.subr.bf16.mxu0 0
        %1930 = vmatpush1.bf16.msra.mxu0 0
        %1931 = vmatprep.subr.bf16.mxu0 0
        %1932 = vmatpush1.bf16.msra.mxu0 0
        %1933 = vmatprep.subr.bf16.mxu0 0
        %1934 = vmatpush1.bf16.msra.mxu0 0
        %1935 = vmatprep.subr.bf16.mxu0 0
        %1936 = vmatpush1.bf16.msra.mxu0 0
        %1937 = vmatprep.subr.bf16.mxu0 0
        %1938 = vmatpush1.bf16.msra.mxu0 0
        %1939 = vmatprep.subr.bf16.mxu0 0
        %1940 = vmatpush1.bf16.msra.mxu0 0
        %1941 = vmatprep.subr.bf16.mxu0 0
        %1942 = vmatpush1.bf16.msra.mxu0 0
        %1943 = vmatprep.subr.bf16.mxu0 0
        %1944 = vmatpush1.bf16.msra.mxu0 0
        %1945 = vmatprep.subr.bf16.mxu0 0
        %1946 = vmatpush1.bf16.msra.mxu0 0
        %1947 = vmatprep.subr.bf16.mxu0 0
        %1948 = vmatpush1.bf16.msra.mxu0 0
        %1949 = vmatprep.mubr.bf16.mxu0 0
        %1950 = vmatmul.mubr.bf16.gmra.mrb[0].mxu0 %v943
        %v1951 = vpop.f32.mrb[0].mxu0
        %v1952 = vadd.f32 %v1891, %v1951
        %v1953 = vpop.f32.mrb[0].mxu0
        %v1954 = vpop.f32.mrb[0].mxu0
        %v1955 = vpop.f32.mrb[0].mxu0
        %1956 = vdwg.mxu0
        %v1957 = vpack.c.bf16 %v1952, %v1952
        %v1959 = vsel %vm1146, %v1793, 0
        %v1962 = vsel %vm1146, %v1875, 0
        %1964 = vmatprep.subr.bf16.mxu0 0
        %1965 = vmatpush1.bf16.xpose.msra.mxu0 %v1962
        %1966 = vmatprep.subr.bf16.mxu0 0
        %1967 = vmatpush1.bf16.xpose.msra.mxu0 0
        %1968 = vmatprep.subr.bf16.mxu0 0
        %1969 = vmatpush1.bf16.xpose.msra.mxu0 0
        %1970 = vmatprep.subr.bf16.mxu0 0
        %1971 = vmatpush1.bf16.xpose.msra.mxu0 0
        %1972 = vmatprep.subr.bf16.mxu0 0
        %1973 = vmatpush1.bf16.xpose.msra.mxu0 0
        %1974 = vmatprep.subr.bf16.mxu0 0
        %1975 = vmatpush1.bf16.xpose.msra.mxu0 0
        %1976 = vmatprep.subr.bf16.mxu0 0
        %1977 = vmatpush1.bf16.xpose.msra.mxu0 0
        %1978 = vmatprep.subr.bf16.mxu0 0
        %1979 = vmatpush1.bf16.xpose.msra.mxu0 0
        %1980 = vmatprep.subr.bf16.mxu0 0
        %1981 = vmatpush1.bf16.xpose.msra.mxu0 0
        %1982 = vmatprep.subr.bf16.mxu0 0
        %1983 = vmatpush1.bf16.xpose.msra.mxu0 0
        %1984 = vmatprep.subr.bf16.mxu0 0
        %1985 = vmatpush1.bf16.xpose.msra.mxu0 0
        %1986 = vmatprep.subr.bf16.mxu0 0
        %1987 = vmatpush1.bf16.xpose.msra.mxu0 0
        %1988 = vmatprep.subr.bf16.mxu0 0
        %1989 = vmatpush1.bf16.xpose.msra.mxu0 0
        %1990 = vmatprep.subr.bf16.mxu0 0
        %1991 = vmatpush1.bf16.xpose.msra.mxu0 0
        %1992 = vmatprep.subr.bf16.mxu0 0
        %1993 = vmatpush1.bf16.xpose.msra.mxu0 0
        %1994 = vmatprep.subr.bf16.mxu0 0
        %1995 = vmatpush1.bf16.xpose.msra.mxu0 0
        %1996 = vmatprep.mubr.bf16.mxu0 0
        %1997 = vmatmul.mubr.bf16.gmra.mrb[0].mxu0 %v1959
        %v1998 = vpop.f32.mrb[0].mxu0
        %v1999 = vadd.f32 0.0, %v1998
        %v2000 = vpop.f32.mrb[0].mxu0
        %v2001 = vpop.f32.mrb[0].mxu0
        %v2002 = vpop.f32.mrb[0].mxu0
        %2003 = vdwg.mxu0
        %v2004 = vsel %vm1193, %v1999, -inf
        %2005 = vmax.xlane.f32.xlu0 %v2004
        %v2006 = vpop.xlane.xlu0 %2005
        %v2007 = vsub.f32 %v1999, %v2006
        %v2008 = vmul.f32 %v2007, 1.442695
        %v2009 = vpow.pop %v2008
        %v2010 = vsel %vm1193, %v2009, 0.0
        %2011 = vadd.xlane.f32.xlu0 %v2010
        %v2012 = vpop.xlane.xlu0 %2011
        %v2013 = vrcp.pop %v2012
        %v2014 = vmul.f32 %v2009, %v2013
        %v2015 = vpack.c.bf16 %v2014, %v2014
        %v2017 = vsel %vm1206, %v2015, 0
        %v2020 = vand.u32 %v1957, %v1213
        %2022 = vmatprep.subr.bf16.mxu0 0
        %2023 = vmatpush1.bf16.msra.mxu0 %v2020
        %2024 = vmatprep.subr.bf16.mxu0 0
        %2025 = vmatpush1.bf16.msra.mxu0 0
        %2026 = vmatprep.subr.bf16.mxu0 0
        %2027 = vmatpush1.bf16.msra.mxu0 0
        %2028 = vmatprep.subr.bf16.mxu0 0
        %2029 = vmatpush1.bf16.msra.mxu0 0
        %2030 = vmatprep.subr.bf16.mxu0 0
        %2031 = vmatpush1.bf16.msra.mxu0 0
        %2032 = vmatprep.subr.bf16.mxu0 0
        %2033 = vmatpush1.bf16.msra.mxu0 0
        %2034 = vmatprep.subr.bf16.mxu0 0
        %2035 = vmatpush1.bf16.msra.mxu0 0
        %2036 = vmatprep.subr.bf16.mxu0 0
        %2037 = vmatpush1.bf16.msra.mxu0 0
        %2038 = vmatprep.subr.bf16.mxu0 0
        %2039 = vmatpush1.bf16.msra.mxu0 0
        %2040 = vmatprep.subr.bf16.mxu0 0
        %2041 = vmatpush1.bf16.msra.mxu0 0
        %2042 = vmatprep.subr.bf16.mxu0 0
        %2043 = vmatpush1.bf16.msra.mxu0 0
        %2044 = vmatprep.subr.bf16.mxu0 0
        %2045 = vmatpush1.bf16.msra.mxu0 0
        %2046 = vmatprep.subr.bf16.mxu0 0
        %2047 = vmatpush1.bf16.msra.mxu0 0
        %2048 = vmatprep.subr.bf16.mxu0 0
        %2049 = vmatpush1.bf16.msra.mxu0 0
        %2050 = vmatprep.subr.bf16.mxu0 0
        %2051 = vmatpush1.bf16.msra.mxu0 0
        %2052 = vmatprep.subr.bf16.mxu0 0
        %2053 = vmatpush1.bf16.msra.mxu0 0
        %2054 = vmatprep.mubr.bf16.mxu0 0
        %2055 = vmatmul.mubr.bf16.gmra.mrb[0].mxu0 %v2017
        %v2056 = vpop.f32.mrb[0].mxu0
        %v2057 = vadd.f32 0.0, %v2056
        %v2058 = vpop.f32.mrb[0].mxu0
        %v2059 = vpop.f32.mrb[0].mxu0
        %v2060 = vpop.f32.mrb[0].mxu0
        %2061 = vdwg.mxu0
        %v2062 = vpack.c.bf16 %v2057, %v2057
        %s2063 = scalar_lea.vmem %s14, 16
        %v2064 = vld [vmem:[%s2063] sm:$0xf]
        %v2065 = vld [vmem:[%s2063 + $0x4] sm:$0xf]
        %v2068 = vunpack.c.l.b16 %v2064
        %v2069 = vunpack.c.l.b16 %v2065
        %v2070 = vpack.c.b16 %v2069, %v2068
        %v2073 = vsel %vm1146, %v2062, 0
        %2075 = vmatprep.subr.bf16.mxu0 0
        %2076 = vmatpush1.bf16.msra.mxu0 %v2070
        %2077 = vmatprep.subr.bf16.mxu0 0
        %2078 = vmatpush1.bf16.msra.mxu0 0
        %2079 = vmatprep.subr.bf16.mxu0 0
        %2080 = vmatpush1.bf16.msra.mxu0 0
        %2081 = vmatprep.subr.bf16.mxu0 0
        %2082 = vmatpush1.bf16.msra.mxu0 0
        %2083 = vmatprep.subr.bf16.mxu0 0
        %2084 = vmatpush1.bf16.msra.mxu0 0
        %2085 = vmatprep.subr.bf16.mxu0 0
        %2086 = vmatpush1.bf16.msra.mxu0 0
        %2087 = vmatprep.subr.bf16.mxu0 0
        %2088 = vmatpush1.bf16.msra.mxu0 0
        %2089 = vmatprep.subr.bf16.mxu0 0
        %2090 = vmatpush1.bf16.msra.mxu0 0
        %2091 = vmatprep.subr.bf16.mxu0 0
        %2092 = vmatpush1.bf16.msra.mxu0 0
        %2093 = vmatprep.subr.bf16.mxu0 0
        %2094 = vmatpush1.bf16.msra.mxu0 0
        %2095 = vmatprep.subr.bf16.mxu0 0
        %2096 = vmatpush1.bf16.msra.mxu0 0
        %2097 = vmatprep.subr.bf16.mxu0 0
        %2098 = vmatpush1.bf16.msra.mxu0 0
        %2099 = vmatprep.subr.bf16.mxu0 0
        %2100 = vmatpush1.bf16.msra.mxu0 0
        %2101 = vmatprep.subr.bf16.mxu0 0
        %2102 = vmatpush1.bf16.msra.mxu0 0
        %2103 = vmatprep.subr.bf16.mxu0 0
        %2104 = vmatpush1.bf16.msra.mxu0 0
        %2105 = vmatprep.subr.bf16.mxu0 0
        %2106 = vmatpush1.bf16.msra.mxu0 0
        %2107 = vmatprep.mubr.bf16.mxu0 0
        %2108 = vmatmul.mubr.bf16.gmra.mrb[0].mxu0 %v2073
        %v2109 = vpop.f32.mrb[0].mxu0
        %v2110 = vadd.f32 0.0, %v2109
        %v2111 = vpop.f32.mrb[0].mxu0
        %v2112 = vpop.f32.mrb[0].mxu0
        %v2113 = vpop.f32.mrb[0].mxu0
        %2114 = vdwg.mxu0
        %v2115 = vadd.f32 %v1707, %v2110
        %s2116 = scalar_lea.vmem %s8, 96
        %v2117 = vld [vmem:[%s2116] sm:$0xf]
        %v2118 = vld [vmem:[%s2116 + $0x4] sm:$0xf]
        %v2119 = vld [vmem:[%s2116 + $0x8] sm:$0xf]
        %v2120 = vld [vmem:[%s2116 + $0xc] sm:$0xf]
        %v2121 = vld [vmem:[%s2116 + $0x10] sm:$0xf]
        %v2122 = vld [vmem:[%s2116 + $0x14] sm:$0xf]
        %v2123 = vld [vmem:[%s2116 + $0x18] sm:$0xf]
        %v2124 = vld [vmem:[%s2116 + $0x1c] sm:$0xf]
        %s2125 = scalar_lea.vmem %s9, 3
        %v2126 = vld [vmem:[%s2125] sm:$0x1]
        %v2128 = vlaneseq
        %v2129 = vshrl.u32 %v2128, 7
        %v2130 = vsub.s32 0, %v2129
        %v2131 = vrot.slane %v2126, %v2130
        %v2141 = vunpack.c.l.b16 %v2117
        %v2142 = vunpack.c.l.b16 %v2118
        %v2143 = vunpack.c.l.b16 %v2119
        %v2144 = vunpack.c.l.b16 %v2120
        %v2145 = vunpack.c.l.b16 %v2121
        %v2146 = vunpack.c.l.b16 %v2122
        %v2147 = vunpack.c.l.b16 %v2123
        %v2148 = vunpack.c.l.b16 %v2124
        %v2149 = vpack.c.b16 %v2142, %v2141
        %v2150 = vpack.c.b16 %v2144, %v2143
        %v2151 = vpack.c.b16 %v2146, %v2145
        %v2152 = vpack.c.b16 %v2148, %v2147
        %2157 = vmatprep.subr.bf16.mxu0 0
        %2158 = vmatpush1.bf16.msra.mxu0 %v2149
        %2159 = vmatprep.subr.bf16.mxu0 0
        %2160 = vmatpush1.bf16.msra.mxu0 %v2150
        %2161 = vmatprep.subr.bf16.mxu0 0
        %2162 = vmatpush1.bf16.msra.mxu0 %v2151
        %2163 = vmatprep.subr.bf16.mxu0 0
        %2164 = vmatpush1.bf16.msra.mxu0 %v2152
        %2165 = vmatprep.subr.bf16.mxu0 0
        %2166 = vmatpush1.bf16.msra.mxu0 0
        %2167 = vmatprep.subr.bf16.mxu0 0
        %2168 = vmatpush1.bf16.msra.mxu0 0
        %2169 = vmatprep.subr.bf16.mxu0 0
        %2170 = vmatpush1.bf16.msra.mxu0 0
        %2171 = vmatprep.subr.bf16.mxu0 0
        %2172 = vmatpush1.bf16.msra.mxu0 0
        %2173 = vmatprep.subr.bf16.mxu0 0
        %2174 = vmatpush1.bf16.msra.mxu0 0
        %2175 = vmatprep.subr.bf16.mxu0 0
        %2176 = vmatpush1.bf16.msra.mxu0 0
        %2177 = vmatprep.subr.bf16.mxu0 0
        %2178 = vmatpush1.bf16.msra.mxu0 0
        %2179 = vmatprep.subr.bf16.mxu0 0
        %2180 = vmatpush1.bf16.msra.mxu0 0
        %2181 = vmatprep.subr.bf16.mxu0 0
        %2182 = vmatpush1.bf16.msra.mxu0 0
        %2183 = vmatprep.subr.bf16.mxu0 0
        %2184 = vmatpush1.bf16.msra.mxu0 0
        %2185 = vmatprep.subr.bf16.mxu0 0
        %2186 = vmatpush1.bf16.msra.mxu0 0
        %2187 = vmatprep.subr.bf16.mxu0 0
        %2188 = vmatpush1.bf16.msra.mxu0 0
        %2189 = vmatprep.mubr.bf16.mxu0 0
        %2190 = vmatmul.mubr.bf16.gmra.mrb[0].mxu0 %v943
        %v2191 = vpop.f32.mrb[0].mxu0
        %v2192 = vadd.f32 %v2131, %v2191
        %v2193 = vpop.f32.mrb[0].mxu0
        %v2194 = vpop.f32.mrb[0].mxu0
        %v2195 = vpop.f32.mrb[0].mxu0
        %2196 = vdwg.mxu0
        %v2197 = vpack.c.bf16 %v2192, %v2192
        %s2198 = scalar_lea.vmem %s10, 96
        %v2199 = vld [vmem:[%s2198] sm:$0xf]
        %v2200 = vld [vmem:[%s2198 + $0x4] sm:$0xf]
        %v2201 = vld [vmem:[%s2198 + $0x8] sm:$0xf]
        %v2202 = vld [vmem:[%s2198 + $0xc] sm:$0xf]
        %v2203 = vld [vmem:[%s2198 + $0x10] sm:$0xf]
        %v2204 = vld [vmem:[%s2198 + $0x14] sm:$0xf]
        %v2205 = vld [vmem:[%s2198 + $0x18] sm:$0xf]
        %v2206 = vld [vmem:[%s2198 + $0x1c] sm:$0xf]
        %s2207 = scalar_lea.vmem %s11, 3
        %v2208 = vld [vmem:[%s2207] sm:$0x1]
        %v2210 = vlaneseq
        %v2211 = vshrl.u32 %v2210, 7
        %v2212 = vsub.s32 0, %v2211
        %v2213 = vrot.slane %v2208, %v2212
        %v2223 = vunpack.c.l.b16 %v2199
        %v2224 = vunpack.c.l.b16 %v2200
        %v2225 = vunpack.c.l.b16 %v2201
        %v2226 = vunpack.c.l.b16 %v2202
        %v2227 = vunpack.c.l.b16 %v2203
        %v2228 = vunpack.c.l.b16 %v2204
        %v2229 = vunpack.c.l.b16 %v2205
        %v2230 = vunpack.c.l.b16 %v2206
        %v2231 = vpack.c.b16 %v2224, %v2223
        %v2232 = vpack.c.b16 %v2226, %v2225
        %v2233 = vpack.c.b16 %v2228, %v2227
        %v2234 = vpack.c.b16 %v2230, %v2229
        %2239 = vmatprep.subr.bf16.mxu0 0
        %2240 = vmatpush1.bf16.msra.mxu0 %v2231
        %2241 = vmatprep.subr.bf16.mxu0 0
        %2242 = vmatpush1.bf16.msra.mxu0 %v2232
        %2243 = vmatprep.subr.bf16.mxu0 0
        %2244 = vmatpush1.bf16.msra.mxu0 %v2233
        %2245 = vmatprep.subr.bf16.mxu0 0
        %2246 = vmatpush1.bf16.msra.mxu0 %v2234
        %2247 = vmatprep.subr.bf16.mxu0 0
        %2248 = vmatpush1.bf16.msra.mxu0 0
        %2249 = vmatprep.subr.bf16.mxu0 0
        %2250 = vmatpush1.bf16.msra.mxu0 0
        %2251 = vmatprep.subr.bf16.mxu0 0
        %2252 = vmatpush1.bf16.msra.mxu0 0
        %2253 = vmatprep.subr.bf16.mxu0 0
        %2254 = vmatpush1.bf16.msra.mxu0 0
        %2255 = vmatprep.subr.bf16.mxu0 0
        %2256 = vmatpush1.bf16.msra.mxu0 0
        %2257 = vmatprep.subr.bf16.mxu0 0
        %2258 = vmatpush1.bf16.msra.mxu0 0
        %2259 = vmatprep.subr.bf16.mxu0 0
        %2260 = vmatpush1.bf16.msra.mxu0 0
        %2261 = vmatprep.subr.bf16.mxu0 0
        %2262 = vmatpush1.bf16.msra.mxu0 0
        %2263 = vmatprep.subr.bf16.mxu0 0
        %2264 = vmatpush1.bf16.msra.mxu0 0
        %2265 = vmatprep.subr.bf16.mxu0 0
        %2266 = vmatpush1.bf16.msra.mxu0 0
        %2267 = vmatprep.subr.bf16.mxu0 0
        %2268 = vmatpush1.bf16.msra.mxu0 0
        %2269 = vmatprep.subr.bf16.mxu0 0
        %2270 = vmatpush1.bf16.msra.mxu0 0
        %2271 = vmatprep.mubr.bf16.mxu0 0
        %2272 = vmatmul.mubr.bf16.gmra.mrb[0].mxu0 %v943
        %v2273 = vpop.f32.mrb[0].mxu0
        %v2274 = vadd.f32 %v2213, %v2273
        %v2275 = vpop.f32.mrb[0].mxu0
        %v2276 = vpop.f32.mrb[0].mxu0
        %v2277 = vpop.f32.mrb[0].mxu0
        %2278 = vdwg.mxu0
        %v2279 = vpack.c.bf16 %v2274, %v2274
        %s2280 = scalar_lea.vmem %s12, 96
        %v2281 = vld [vmem:[%s2280] sm:$0xf]
        %v2282 = vld [vmem:[%s2280 + $0x4] sm:$0xf]
        %v2283 = vld [vmem:[%s2280 + $0x8] sm:$0xf]
        %v2284 = vld [vmem:[%s2280 + $0xc] sm:$0xf]
        %v2285 = vld [vmem:[%s2280 + $0x10] sm:$0xf]
        %v2286 = vld [vmem:[%s2280 + $0x14] sm:$0xf]
        %v2287 = vld [vmem:[%s2280 + $0x18] sm:$0xf]
        %v2288 = vld [vmem:[%s2280 + $0x1c] sm:$0xf]
        %s2289 = scalar_lea.vmem %s13, 3
        %v2290 = vld [vmem:[%s2289] sm:$0x1]
        %v2292 = vlaneseq
        %v2293 = vshrl.u32 %v2292, 7
        %v2294 = vsub.s32 0, %v2293
        %v2295 = vrot.slane %v2290, %v2294
        %v2305 = vunpack.c.l.b16 %v2281
        %v2306 = vunpack.c.l.b16 %v2282
        %v2307 = vunpack.c.l.b16 %v2283
        %v2308 = vunpack.c.l.b16 %v2284
        %v2309 = vunpack.c.l.b16 %v2285
        %v2310 = vunpack.c.l.b16 %v2286
        %v2311 = vunpack.c.l.b16 %v2287
        %v2312 = vunpack.c.l.b16 %v2288
        %v2313 = vpack.c.b16 %v2306, %v2305
        %v2314 = vpack.c.b16 %v2308, %v2307
        %v2315 = vpack.c.b16 %v2310, %v2309
        %v2316 = vpack.c.b16 %v2312, %v2311
        %2321 = vmatprep.subr.bf16.mxu0 0
        %2322 = vmatpush1.bf16.msra.mxu0 %v2313
        %2323 = vmatprep.subr.bf16.mxu0 0
        %2324 = vmatpush1.bf16.msra.mxu0 %v2314
        %2325 = vmatprep.subr.bf16.mxu0 0
        %2326 = vmatpush1.bf16.msra.mxu0 %v2315
        %2327 = vmatprep.subr.bf16.mxu0 0
        %2328 = vmatpush1.bf16.msra.mxu0 %v2316
        %2329 = vmatprep.subr.bf16.mxu0 0
        %2330 = vmatpush1.bf16.msra.mxu0 0
        %2331 = vmatprep.subr.bf16.mxu0 0
        %2332 = vmatpush1.bf16.msra.mxu0 0
        %2333 = vmatprep.subr.bf16.mxu0 0
        %2334 = vmatpush1.bf16.msra.mxu0 0
        %2335 = vmatprep.subr.bf16.mxu0 0
        %2336 = vmatpush1.bf16.msra.mxu0 0
        %2337 = vmatprep.subr.bf16.mxu0 0
        %2338 = vmatpush1.bf16.msra.mxu0 0
        %2339 = vmatprep.subr.bf16.mxu0 0
        %2340 = vmatpush1.bf16.msra.mxu0 0
        %2341 = vmatprep.subr.bf16.mxu0 0
        %2342 = vmatpush1.bf16.msra.mxu0 0
        %2343 = vmatprep.subr.bf16.mxu0 0
        %2344 = vmatpush1.bf16.msra.mxu0 0
        %2345 = vmatprep.subr.bf16.mxu0 0
        %2346 = vmatpush1.bf16.msra.mxu0 0
        %2347 = vmatprep.subr.bf16.mxu0 0
        %2348 = vmatpush1.bf16.msra.mxu0 0
        %2349 = vmatprep.subr.bf16.mxu0 0
        %2350 = vmatpush1.bf16.msra.mxu0 0
        %2351 = vmatprep.subr.bf16.mxu0 0
        %2352 = vmatpush1.bf16.msra.mxu0 0
        %2353 = vmatprep.mubr.bf16.mxu0 0
        %2354 = vmatmul.mubr.bf16.gmra.mrb[0].mxu0 %v943
        %v2355 = vpop.f32.mrb[0].mxu0
        %v2356 = vadd.f32 %v2295, %v2355
        %v2357 = vpop.f32.mrb[0].mxu0
        %v2358 = vpop.f32.mrb[0].mxu0
        %v2359 = vpop.f32.mrb[0].mxu0
        %2360 = vdwg.mxu0
        %v2361 = vpack.c.bf16 %v2356, %v2356
        %v2363 = vsel %vm1146, %v2197, 0
        %v2366 = vsel %vm1146, %v2279, 0
        %2368 = vmatprep.subr.bf16.mxu0 0
        %2369 = vmatpush1.bf16.xpose.msra.mxu0 %v2366
        %2370 = vmatprep.subr.bf16.mxu0 0
        %2371 = vmatpush1.bf16.xpose.msra.mxu0 0
        %2372 = vmatprep.subr.bf16.mxu0 0
        %2373 = vmatpush1.bf16.xpose.msra.mxu0 0
        %2374 = vmatprep.subr.bf16.mxu0 0
        %2375 = vmatpush1.bf16.xpose.msra.mxu0 0
        %2376 = vmatprep.subr.bf16.mxu0 0
        %2377 = vmatpush1.bf16.xpose.msra.mxu0 0
        %2378 = vmatprep.subr.bf16.mxu0 0
        %2379 = vmatpush1.bf16.xpose.msra.mxu0 0
        %2380 = vmatprep.subr.bf16.mxu0 0
        %2381 = vmatpush1.bf16.xpose.msra.mxu0 0
        %2382 = vmatprep.subr.bf16.mxu0 0
        %2383 = vmatpush1.bf16.xpose.msra.mxu0 0
        %2384 = vmatprep.subr.bf16.mxu0 0
        %2385 = vmatpush1.bf16.xpose.msra.mxu0 0
        %2386 = vmatprep.subr.bf16.mxu0 0
        %2387 = vmatpush1.bf16.xpose.msra.mxu0 0
        %2388 = vmatprep.subr.bf16.mxu0 0
        %2389 = vmatpush1.bf16.xpose.msra.mxu0 0
        %2390 = vmatprep.subr.bf16.mxu0 0
        %2391 = vmatpush1.bf16.xpose.msra.mxu0 0
        %2392 = vmatprep.subr.bf16.mxu0 0
        %2393 = vmatpush1.bf16.xpose.msra.mxu0 0
        %2394 = vmatprep.subr.bf16.mxu0 0
        %2395 = vmatpush1.bf16.xpose.msra.mxu0 0
        %2396 = vmatprep.subr.bf16.mxu0 0
        %2397 = vmatpush1.bf16.xpose.msra.mxu0 0
        %2398 = vmatprep.subr.bf16.mxu0 0
        %2399 = vmatpush1.bf16.xpose.msra.mxu0 0
        %2400 = vmatprep.mubr.bf16.mxu0 0
        %2401 = vmatmul.mubr.bf16.gmra.mrb[0].mxu0 %v2363
        %v2402 = vpop.f32.mrb[0].mxu0
        %v2403 = vadd.f32 0.0, %v2402
        %v2404 = vpop.f32.mrb[0].mxu0
        %v2405 = vpop.f32.mrb[0].mxu0
        %v2406 = vpop.f32.mrb[0].mxu0
        %2407 = vdwg.mxu0
        %v2408 = vsel %vm1193, %v2403, -inf
        %2409 = vmax.xlane.f32.xlu0 %v2408
        %v2410 = vpop.xlane.xlu0 %2409
        %v2411 = vsub.f32 %v2403, %v2410
        %v2412 = vmul.f32 %v2411, 1.442695
        %v2413 = vpow.pop %v2412
        %v2414 = vsel %vm1193, %v2413, 0.0
        %2415 = vadd.xlane.f32.xlu0 %v2414
        %v2416 = vpop.xlane.xlu0 %2415
        %v2417 = vrcp.pop %v2416
        %v2418 = vmul.f32 %v2413, %v2417
        %v2419 = vpack.c.bf16 %v2418, %v2418
        %v2421 = vsel %vm1206, %v2419, 0
        %v2424 = vand.u32 %v2361, %v1213
        %2426 = vmatprep.subr.bf16.mxu0 0
        %2427 = vmatpush1.bf16.msra.mxu0 %v2424
        %2428 = vmatprep.subr.bf16.mxu0 0
        %2429 = vmatpush1.bf16.msra.mxu0 0
        %2430 = vmatprep.subr.bf16.mxu0 0
        %2431 = vmatpush1.bf16.msra.mxu0 0
        %2432 = vmatprep.subr.bf16.mxu0 0
        %2433 = vmatpush1.bf16.msra.mxu0 0
        %2434 = vmatprep.subr.bf16.mxu0 0
        %2435 = vmatpush1.bf16.msra.mxu0 0
        %2436 = vmatprep.subr.bf16.mxu0 0
        %2437 = vmatpush1.bf16.msra.mxu0 0
        %2438 = vmatprep.subr.bf16.mxu0 0
        %2439 = vmatpush1.bf16.msra.mxu0 0
        %2440 = vmatprep.subr.bf16.mxu0 0
        %2441 = vmatpush1.bf16.msra.mxu0 0
        %2442 = vmatprep.subr.bf16.mxu0 0
        %2443 = vmatpush1.bf16.msra.mxu0 0
        %2444 = vmatprep.subr.bf16.mxu0 0
        %2445 = vmatpush1.bf16.msra.mxu0 0
        %2446 = vmatprep.subr.bf16.mxu0 0
        %2447 = vmatpush1.bf16.msra.mxu0 0
        %2448 = vmatprep.subr.bf16.mxu0 0
        %2449 = vmatpush1.bf16.msra.mxu0 0
        %2450 = vmatprep.subr.bf16.mxu0 0
        %2451 = vmatpush1.bf16.msra.mxu0 0
        %2452 = vmatprep.subr.bf16.mxu0 0
        %2453 = vmatpush1.bf16.msra.mxu0 0
        %2454 = vmatprep.subr.bf16.mxu0 0
        %2455 = vmatpush1.bf16.msra.mxu0 0
        %2456 = vmatprep.subr.bf16.mxu0 0
        %2457 = vmatpush1.bf16.msra.mxu0 0
        %2458 = vmatprep.mubr.bf16.mxu0 0
        %2459 = vmatmul.mubr.bf16.gmra.mrb[0].mxu0 %v2421
        %v2460 = vpop.f32.mrb[0].mxu0
        %v2461 = vadd.f32 0.0, %v2460
        %v2462 = vpop.f32.mrb[0].mxu0
        %v2463 = vpop.f32.mrb[0].mxu0
        %v2464 = vpop.f32.mrb[0].mxu0
        %2465 = vdwg.mxu0
        %v2466 = vpack.c.bf16 %v2461, %v2461
        %s2467 = scalar_lea.vmem %s14, 24
        %v2468 = vld [vmem:[%s2467] sm:$0xf]
        %v2469 = vld [vmem:[%s2467 + $0x4] sm:$0xf]
        %v2472 = vunpack.c.l.b16 %v2468
        %v2473 = vunpack.c.l.b16 %v2469
        %v2474 = vpack.c.b16 %v2473, %v2472
        %v2477 = vsel %vm1146, %v2466, 0
        %2479 = vmatprep.subr.bf16.mxu0 0
        %2480 = vmatpush1.bf16.msra.mxu0 %v2474
        %2481 = vmatprep.subr.bf16.mxu0 0
        %2482 = vmatpush1.bf16.msra.mxu0 0
        %2483 = vmatprep.subr.bf16.mxu0 0
        %2484 = vmatpush1.bf16.msra.mxu0 0
        %2485 = vmatprep.subr.bf16.mxu0 0
        %2486 = vmatpush1.bf16.msra.mxu0 0
        %2487 = vmatprep.subr.bf16.mxu0 0
        %2488 = vmatpush1.bf16.msra.mxu0 0
        %2489 = vmatprep.subr.bf16.mxu0 0
        %2490 = vmatpush1.bf16.msra.mxu0 0
        %2491 = vmatprep.subr.bf16.mxu0 0
        %2492 = vmatpush1.bf16.msra.mxu0 0
        %2493 = vmatprep.subr.bf16.mxu0 0
        %2494 = vmatpush1.bf16.msra.mxu0 0
        %2495 = vmatprep.subr.bf16.mxu0 0
        %2496 = vmatpush1.bf16.msra.mxu0 0
        %2497 = vmatprep.subr.bf16.mxu0 0
        %2498 = vmatpush1.bf16.msra.mxu0 0
        %2499 = vmatprep.subr.bf16.mxu0 0
        %2500 = vmatpush1.bf16.msra.mxu0 0
        %2501 = vmatprep.subr.bf16.mxu0 0
        %2502 = vmatpush1.bf16.msra.mxu0 0
        %2503 = vmatprep.subr.bf16.mxu0 0
        %2504 = vmatpush1.bf16.msra.mxu0 0
        %2505 = vmatprep.subr.bf16.mxu0 0
        %2506 = vmatpush1.bf16.msra.mxu0 0
        %2507 = vmatprep.subr.bf16.mxu0 0
        %2508 = vmatpush1.bf16.msra.mxu0 0
        %2509 = vmatprep.subr.bf16.mxu0 0
        %2510 = vmatpush1.bf16.msra.mxu0 0
        %2511 = vmatprep.mubr.bf16.mxu0 0
        %2512 = vmatmul.mubr.bf16.gmra.mrb[0].mxu0 %v2477
        %v2513 = vpop.f32.mrb[0].mxu0
        %v2514 = vadd.f32 0.0, %v2513
        %v2515 = vpop.f32.mrb[0].mxu0
        %v2516 = vpop.f32.mrb[0].mxu0
        %v2517 = vpop.f32.mrb[0].mxu0
        %2518 = vdwg.mxu0
        %v2519 = vadd.f32 %v2115, %v2514
        %v2520 = vadd.f32 %v872, %v2519
        %v2521 = vld [vmem:[%s15] sm:$0x1]
        %v2523 = vlaneseq
        %v2524 = vshrl.u32 %v2523, 7
        %v2525 = vsub.s32 0, %v2524
        %v2526 = vrot.slane %v2521, %v2525
        %v2528 = vadd.f32 %v2520, %v2526
        %v2529 = vld [vmem:[%s16] sm:$0x1]
        %v2530 = vld [vmem:[%s17] sm:$0x1]
        %v2531 = vsel %vm844, %v2528, 0.0
        %2532 = vadd.xlane.f32.xlu0 %v2531
        %v2533 = vpop.xlane.xlu0 %2532
        %v2534 = vmul.f32 %v2533, %v848
        %v2535 = vsub.f32 %v2528, %v2534
        %v2536 = vmul.f32 %v2535, %v2535
        %v2537 = vsel %vm844, %v2536, 0.0
        %2538 = vadd.xlane.f32.xlu0 %v2537
        %v2539 = vpop.xlane.xlu0 %2538
        %v2540 = vmul.f32 %v2539, %v848
        %v2541 = vadd.f32 %v2540, 1e-05
        %v2542 = vrsqrt.pop %v2541
        %v2543 = vmul.f32 %v2535, %v2542
        %v2545 = vlaneseq
        %v2546 = vshrl.u32 %v2545, 7
        %v2547 = vsub.s32 0, %v2546
        %v2548 = vrot.slane %v2529, %v2547
        %v2550 = vmul.f32 %v2543, %v2548
        %v2552 = vlaneseq
        %v2553 = vshrl.u32 %v2552, 7
        %v2554 = vsub.s32 0, %v2553
        %v2555 = vrot.slane %v2530, %v2554
        %v2557 = vadd.f32 %v2550, %v2555
        %v2558 = vpack.c.bf16 %v2557, %v2557
        %v2559 = vld [vmem:[%s18] sm:$0xf]
        %v2560 = vld [vmem:[%s18 + $0x4] sm:$0xf]
        %v2561 = vld [vmem:[%s18 + $0x8] sm:$0xf]
        %v2562 = vld [vmem:[%s18 + $0xc] sm:$0xf]
        %v2563 = vld [vmem:[%s18 + $0x10] sm:$0xf]
        %v2564 = vld [vmem:[%s18 + $0x14] sm:$0xf]
        %v2565 = vld [vmem:[%s18 + $0x18] sm:$0xf]
        %v2566 = vld [vmem:[%s18 + $0x1c] sm:$0xf]
        %v2567 = vld [vmem:[%s19] sm:$0x1]
        %v2569 = vlaneseq
        %v2570 = vshrl.u32 %v2569, 7
        %v2571 = vsub.s32 0, %v2570
        %v2572 = vrot.slane %v2567, %v2571
        %v2582 = vunpack.c.l.b16 %v2559
        %v2583 = vunpack.c.l.b16 %v2560
        %v2584 = vunpack.c.l.b16 %v2561
        %v2585 = vunpack.c.l.b16 %v2562
        %v2586 = vunpack.c.l.b16 %v2563
        %v2587 = vunpack.c.l.b16 %v2564
        %v2588 = vunpack.c.l.b16 %v2565
        %v2589 = vunpack.c.l.b16 %v2566
        %v2590 = vpack.c.b16 %v2583, %v2582
        %v2591 = vpack.c.b16 %v2585, %v2584
        %v2592 = vpack.c.b16 %v2587, %v2586
        %v2593 = vpack.c.b16 %v2589, %v2588
        %v2599 = vsel %vm790, %v2558, 0
        %2601 = vmatprep.subr.bf16.mxu0 0
        %2602 = vmatpush1.bf16.msra.mxu0 %v2590
        %2603 = vmatprep.subr.bf16.mxu0 0
        %2604 = vmatpush1.bf16.msra.mxu0 %v2591
        %2605 = vmatprep.subr.bf16.mxu0 0
        %2606 = vmatpush1.bf16.msra.mxu0 %v2592
        %2607 = vmatprep.subr.bf16.mxu0 0
        %2608 = vmatpush1.bf16.msra.mxu0 %v2593
        %2609 = vmatprep.subr.bf16.mxu0 0
        %2610 = vmatpush1.bf16.msra.mxu0 0
        %2611 = vmatprep.subr.bf16.mxu0 0
        %2612 = vmatpush1.bf16.msra.mxu0 0
        %2613 = vmatprep.subr.bf16.mxu0 0
        %2614 = vmatpush1.bf16.msra.mxu0 0
        %2615 = vmatprep.subr.bf16.mxu0 0
        %2616 = vmatpush1.bf16.msra.mxu0 0
        %2617 = vmatprep.subr.bf16.mxu0 0
        %2618 = vmatpush1.bf16.msra.mxu0 0
        %2619 = vmatprep.subr.bf16.mxu0 0
        %2620 = vmatpush1.bf16.msra.mxu0 0
        %2621 = vmatprep.subr.bf16.mxu0 0
        %2622 = vmatpush1.bf16.msra.mxu0 0
        %2623 = vmatprep.subr.bf16.mxu0 0
        %2624 = vmatpush1.bf16.msra.mxu0 0
        %2625 = vmatprep.subr.bf16.mxu0 0
        %2626 = vmatpush1.bf16.msra.mxu0 0
        %2627 = vmatprep.subr.bf16.mxu0 0
        %2628 = vmatpush1.bf16.msra.mxu0 0
        %2629 = vmatprep.subr.bf16.mxu0 0
        %2630 = vmatpush1.bf16.msra.mxu0 0
        %2631 = vmatprep.subr.bf16.mxu0 0
        %2632 = vmatpush1.bf16.msra.mxu0 0
        %2633 = vmatprep.mubr.bf16.mxu0 0
        %2634 = vmatmul.mubr.bf16.gmra.mrb[0].mxu0 %v2599
        %v2635 = vpop.f32.mrb[0].mxu0
        %v2636 = vadd.f32 %v2572, %v2635
        %v2637 = vpop.f32.mrb[0].mxu0
        %v2638 = vpop.f32.mrb[0].mxu0
        %v2639 = vpop.f32.mrb[0].mxu0
        %2640 = vdwg.mxu0
        %v2641 = vmul.f32 %v2636, 1.702
        %v2642 = vxor.u32 %v2641, 2147483648
        %v2643 = vmul.f32 %v2642, 1.442695
        %v2644 = vpow.pop %v2643
        %v2645 = vadd.f32 %v2644, 1.0
        %v2646 = vrcp.pop %v2645
        %v2647 = vmul.f32 1.0, %v2646
        %v2648 = vmul.f32 %v2636, %v2647
        %v2649 = vpack.c.bf16 %v2648, %v2648
        %v2650 = vld [vmem:[%s20] sm:$0xf]
        %v2651 = vld [vmem:[%s20 + $0x4] sm:$0xf]
        %v2652 = vld [vmem:[%s20 + $0x8] sm:$0xf]
        %v2653 = vld [vmem:[%s20 + $0xc] sm:$0xf]
        %v2654 = vld [vmem:[%s20 + $0x10] sm:$0xf]
        %v2655 = vld [vmem:[%s20 + $0x14] sm:$0xf]
        %v2656 = vld [vmem:[%s20 + $0x18] sm:$0xf]
        %v2657 = vld [vmem:[%s20 + $0x1c] sm:$0xf]
        %v2658 = vld [vmem:[%s20 + $0x20] sm:$0xf]
        %v2659 = vld [vmem:[%s20 + $0x24] sm:$0xf]
        %v2660 = vld [vmem:[%s20 + $0x28] sm:$0xf]
        %v2661 = vld [vmem:[%s20 + $0x2c] sm:$0xf]
        %v2662 = vld [vmem:[%s20 + $0x30] sm:$0xf]
        %v2663 = vld [vmem:[%s20 + $0x34] sm:$0xf]
        %v2664 = vld [vmem:[%s20 + $0x38] sm:$0xf]
        %v2665 = vld [vmem:[%s20 + $0x3c] sm:$0xf]
        %v2682 = vunpack.c.l.b16 %v2650
        %v2683 = vunpack.c.l.b16 %v2651
        %v2684 = vunpack.c.l.b16 %v2652
        %v2685 = vunpack.c.l.b16 %v2653
        %v2686 = vunpack.c.l.b16 %v2654
        %v2687 = vunpack.c.l.b16 %v2655
        %v2688 = vunpack.c.l.b16 %v2656
        %v2689 = vunpack.c.l.b16 %v2657
        %v2690 = vunpack.c.l.b16 %v2658
        %v2691 = vunpack.c.l.b16 %v2659
        %v2692 = vunpack.c.l.b16 %v2660
        %v2693 = vunpack.c.l.b16 %v2661
        %v2694 = vunpack.c.l.b16 %v2662
        %v2695 = vunpack.c.l.b16 %v2663
        %v2696 = vunpack.c.l.b16 %v2664
        %v2697 = vunpack.c.l.b16 %v2665
        %v2698 = vpack.c.b16 %v2683, %v2682
        %v2699 = vpack.c.b16 %v2685, %v2684
        %v2700 = vpack.c.b16 %v2687, %v2686
        %v2701 = vpack.c.b16 %v2689, %v2688
        %v2702 = vpack.c.b16 %v2691, %v2690
        %v2703 = vpack.c.b16 %v2693, %v2692
        %v2704 = vpack.c.b16 %v2695, %v2694
        %v2705 = vpack.c.b16 %v2697, %v2696
        %2714 = vmatprep.subr.bf16.mxu0 0
        %2715 = vmatpush1.bf16.msra.mxu0 %v2698
        %2716 = vmatprep.subr.bf16.mxu0 0
        %2717 = vmatpush1.bf16.msra.mxu0 %v2699
        %2718 = vmatprep.subr.bf16.mxu0 0
        %2719 = vmatpush1.bf16.msra.mxu0 %v2700
        %2720 = vmatprep.subr.bf16.mxu0 0
        %2721 = vmatpush1.bf16.msra.mxu0 %v2701
        %2722 = vmatprep.subr.bf16.mxu0 0
        %2723 = vmatpush1.bf16.msra.mxu0 %v2702
        %2724 = vmatprep.subr.bf16.mxu0 0
        %2725 = vmatpush1.bf16.msra.mxu0 %v2703
        %2726 = vmatprep.subr.bf16.mxu0 0
        %2727 = vmatpush1.bf16.msra.mxu0 %v2704
        %2728 = vmatprep.subr.bf16.mxu0 0
        %2729 = vmatpush1.bf16.msra.mxu0 %v2705
        %2730 = vmatprep.subr.bf16.mxu0 0
        %2731 = vmatpush1.bf16.msra.mxu0 0
        %2732 = vmatprep.subr.bf16.mxu0 0
        %2733 = vmatpush1.bf16.msra.mxu0 0
        %2734 = vmatprep.subr.bf16.mxu0 0
        %2735 = vmatpush1.bf16.msra.mxu0 0
        %2736 = vmatprep.subr.bf16.mxu0 0
        %2737 = vmatpush1.bf16.msra.mxu0 0
        %2738 = vmatprep.subr.bf16.mxu0 0
        %2739 = vmatpush1.bf16.msra.mxu0 0
        %2740 = vmatprep.subr.bf16.mxu0 0
        %2741 = vmatpush1.bf16.msra.mxu0 0
        %2742 = vmatprep.subr.bf16.mxu0 0
        %2743 = vmatpush1.bf16.msra.mxu0 0
        %2744 = vmatprep.subr.bf16.mxu0 0
        %2745 = vmatpush1.bf16.msra.mxu0 0
        %2746 = vmatprep.mubr.bf16.mxu0 0
        %2747 = vmatmul.mubr.bf16.gmra.mrb[0].mxu0 %v2649
        %v2748 = vpop.f32.mrb[0].mxu0
        %v2749 = vadd.f32 0.0, %v2748
        %v2750 = vpop.f32.mrb[0].mxu0
        %v2751 = vpop.f32.mrb[0].mxu0
        %v2752 = vpop.f32.mrb[0].mxu0
        %2753 = vdwg.mxu0
        %v2754 = vadd.f32 %v2528, %v2749
        %v2755 = vld [vmem:[%s21] sm:$0x1]
        %v2757 = vlaneseq
        %v2758 = vshrl.u32 %v2757, 7
        %v2759 = vsub.s32 0, %v2758
        %v2760 = vrot.slane %v2755, %v2759
        %v2762 = vadd.f32 %v2754, %v2760
        %s2763 = scalar_lea.vmem %s6, 1
        %v2764 = vld [vmem:[%s2763] sm:$0x1]
        %s2765 = scalar_lea.vmem %s7, 1
        %v2766 = vld [vmem:[%s2765] sm:$0x1]
        %v2767 = vsel %vm844, %v2762, 0.0
        %2768 = vadd.xlane.f32.xlu0 %v2767
        %v2769 = vpop.xlane.xlu0 %2768
        %v2770 = vmul.f32 %v2769, %v848
        %v2771 = vsub.f32 %v2762, %v2770
        %v2772 = vmul.f32 %v2771, %v2771
        %v2773 = vsel %vm844, %v2772, 0.0
        %2774 = vadd.xlane.f32.xlu0 %v2773
        %v2775 = vpop.xlane.xlu0 %2774
        %v2776 = vmul.f32 %v2775, %v848
        %v2777 = vadd.f32 %v2776, 1e-05
        %v2778 = vrsqrt.pop %v2777
        %v2779 = vmul.f32 %v2771, %v2778
        %v2781 = vlaneseq
        %v2782 = vshrl.u32 %v2781, 7
        %v2783 = vsub.s32 0, %v2782
        %v2784 = vrot.slane %v2764, %v2783
        %v2786 = vmul.f32 %v2779, %v2784
        %v2788 = vlaneseq
        %v2789 = vshrl.u32 %v2788, 7
        %v2790 = vsub.s32 0, %v2789
        %v2791 = vrot.slane %v2766, %v2790
        %v2793 = vadd.f32 %v2786, %v2791
        %v2794 = vpack.c.bf16 %v2793, %v2793
        %s2795 = scalar_lea.vmem %s8, 128
        %v2796 = vld [vmem:[%s2795] sm:$0xf]
        %v2797 = vld [vmem:[%s2795 + $0x4] sm:$0xf]
        %v2798 = vld [vmem:[%s2795 + $0x8] sm:$0xf]
        %v2799 = vld [vmem:[%s2795 + $0xc] sm:$0xf]
        %v2800 = vld [vmem:[%s2795 + $0x10] sm:$0xf]
        %v2801 = vld [vmem:[%s2795 + $0x14] sm:$0xf]
        %v2802 = vld [vmem:[%s2795 + $0x18] sm:$0xf]
        %v2803 = vld [vmem:[%s2795 + $0x1c] sm:$0xf]
        %s2804 = scalar_lea.vmem %s9, 4
        %v2805 = vld [vmem:[%s2804] sm:$0x1]
        %v2807 = vlaneseq
        %v2808 = vshrl.u32 %v2807, 7
        %v2809 = vsub.s32 0, %v2808
        %v2810 = vrot.slane %v2805, %v2809
        %v2820 = vunpack.c.l.b16 %v2796
        %v2821 = vunpack.c.l.b16 %v2797
        %v2822 = vunpack.c.l.b16 %v2798
        %v2823 = vunpack.c.l.b16 %v2799
        %v2824 = vunpack.c.l.b16 %v2800
        %v2825 = vunpack.c.l.b16 %v2801
        %v2826 = vunpack.c.l.b16 %v2802
        %v2827 = vunpack.c.l.b16 %v2803
        %v2828 = vpack.c.b16 %v2821, %v2820
        %v2829 = vpack.c.b16 %v2823, %v2822
        %v2830 = vpack.c.b16 %v2825, %v2824
        %v2831 = vpack.c.b16 %v2827, %v2826
        %v2837 = vsel %vm790, %v2794, 0
        %2839 = vmatprep.subr.bf16.mxu0 0
        %2840 = vmatpush1.bf16.msra.mxu0 %v2828
        %2841 = vmatprep.subr.bf16.mxu0 0
        %2842 = vmatpush1.bf16.msra.mxu0 %v2829
        %2843 = vmatprep.subr.bf16.mxu0 0
        %2844 = vmatpush1.bf16.msra.mxu0 %v2830
        %2845 = vmatprep.subr.bf16.mxu0 0
        %2846 = vmatpush1.bf16.msra.mxu0 %v2831
        %2847 = vmatprep.subr.bf16.mxu0 0
        %2848 = vmatpush1.bf16.msra.mxu0 0
        %2849 = vmatprep.subr.bf16.mxu0 0
        %2850 = vmatpush1.bf16.msra.mxu0 0
        %2851 = vmatprep.subr.bf16.mxu0 0
        %2852 = vmatpush1.bf16.msra.mxu0 0
        %2853 = vmatprep.subr.bf16.mxu0 0
        %2854 = vmatpush1.bf16.msra.mxu0 0
        %2855 = vmatprep.subr.bf16.mxu0 0
        %2856 = vmatpush1.bf16.msra.mxu0 0
        %2857 = vmatprep.subr.bf16.mxu0 0
        %2858 = vmatpush1.bf16.msra.mxu0 0
        %2859 = vmatprep.subr.bf16.mxu0 0
        %2860 = vmatpush1.bf16.msra.mxu0 0
        %2861 = vmatprep.subr.bf16.mxu0 0
        %2862 = vmatpush1.bf16.msra.mxu0 0
        %2863 = vmatprep.subr.bf16.mxu0 0
        %2864 = vmatpush1.bf16.msra.mxu0 0
        %2865 = vmatprep.subr.bf16.mxu0 0
        %2866 = vmatpush1.bf16.msra.mxu0 0
        %2867 = vmatprep.subr.bf16.mxu0 0
        %2868 = vmatpush1.bf16.msra.mxu0 0
        %2869 = vmatprep.subr.bf16.mxu0 0
        %2870 = vmatpush1.bf16.msra.mxu0 0
        %2871 = vmatprep.mubr.bf16.mxu0 0
        %2872 = vmatmul.mubr.bf16.gmra.mrb[0].mxu0 %v2837
        %v2873 = vpop.f32.mrb[0].mxu0
        %v2874 = vadd.f32 %v2810, %v2873
        %v2875 = vpop.f32.mrb[0].mxu0
        %v2876 = vpop.f32.mrb[0].mxu0
        %v2877 = vpop.f32.mrb[0].mxu0
        %2878 = vdwg.mxu0
        %v2879 = vpack.c.bf16 %v2874, %v2874
        %s2880 = scalar_lea.vmem %s10, 128
        %v2881 = vld [vmem:[%s2880] sm:$0xf]
        %v2882 = vld [vmem:[%s2880 + $0x4] sm:$0xf]
        %v2883 = vld [vmem:[%s2880 + $0x8] sm:$0xf]
        %v2884 = vld [vmem:[%s2880 + $0xc] sm:$0xf]
        %v2885 = vld [vmem:[%s2880 + $0x10] sm:$0xf]
        %v2886 = vld [vmem:[%s2880 + $0x14] sm:$0xf]
        %v2887 = vld [vmem:[%s2880 + $0x18] sm:$0xf]
        %v2888 = vld [vmem:[%s2880 + $0x1c] sm:$0xf]
        %s2889 = scalar_lea.vmem %s11, 4
        %v2890 = vld [vmem:[%s2889] sm:$0x1]
        %v2892 = vlaneseq
        %v2893 = vshrl.u32 %v2892, 7
        %v2894 = vsub.s32 0, %v2893
        %v2895 = vrot.slane %v2890, %v2894
        %v2905 = vunpack.c.l.b16 %v2881
        %v2906 = vunpack.c.l.b16 %v2882
        %v2907 = vunpack.c.l.b16 %v2883
        %v2908 = vunpack.c.l.b16 %v2884
        %v2909 = vunpack.c.l.b16 %v2885
        %v2910 = vunpack.c.l.b16 %v2886
        %v2911 = vunpack.c.l.b16 %v2887
        %v2912 = vunpack.c.l.b16 %v2888
        %v2913 = vpack.c.b16 %v2906, %v2905
        %v2914 = vpack.c.b16 %v2908, %v2907
        %v2915 = vpack.c.b16 %v2910, %v2909
        %v2916 = vpack.c.b16 %v2912, %v2911
        %2921 = vmatprep.subr.bf16.mxu0 0
        %2922 = vmatpush1.bf16.msra.mxu0 %v2913
        %2923 = vmatprep.subr.bf16.mxu0 0
        %2924 = vmatpush1.bf16.msra.mxu0 %v2914
        %2925 = vmatprep.subr.bf16.mxu0 0
        %2926 = vmatpush1.bf16.msra.mxu0 %v2915
        %2927 = vmatprep.subr.bf16.mxu0 0
        %2928 = vmatpush1.bf16.msra.mxu0 %v2916
        %2929 = vmatprep.subr.bf16.mxu0 0
        %2930 = vmatpush1.bf16.msra.mxu0 0
        %2931 = vmatprep.subr.bf16.mxu0 0
        %2932 = vmatpush1.bf16.msra.mxu0 0
        %2933 = vmatprep.subr.bf16.mxu0 0
        %2934 = vmatpush1.bf16.msra.mxu0 0
        %2935 = vmatprep.subr.bf16.mxu0 0
        %2936 = vmatpush1.bf16.msra.mxu0 0
        %2937 = vmatprep.subr.bf16.mxu0 0
        %2938 = vmatpush1.bf16.msra.mxu0 0
        %2939 = vmatprep.subr.bf16.mxu0 0
        %2940 = vmatpush1.bf16.msra.mxu0 0
        %2941 = vmatprep.subr.bf16.mxu0 0
        %2942 = vmatpush1.bf16.msra.mxu0 0
        %2943 = vmatprep.subr.bf16.mxu0 0
        %2944 = vmatpush1.bf16.msra.mxu0 0
        %2945 = vmatprep.subr.bf16.mxu0 0
        %2946 = vmatpush1.bf16.msra.mxu0 0
        %2947 = vmatprep.subr.bf16.mxu0 0
        %2948 = vmatpush1.bf16.msra.mxu0 0
        %2949 = vmatprep.subr.bf16.mxu0 0
        %2950 = vmatpush1.bf16.msra.mxu0 0
        %2951 = vmatprep.subr.bf16.mxu0 0
        %2952 = vmatpush1.bf16.msra.mxu0 0
        %2953 = vmatprep.mubr.bf16.mxu0 0
        %2954 = vmatmul.mubr.bf16.gmra.mrb[0].mxu0 %v2837
        %v2955 = vpop.f32.mrb[0].mxu0
        %v2956 = vadd.f32 %v2895, %v2955
        %v2957 = vpop.f32.mrb[0].mxu0
        %v2958 = vpop.f32.mrb[0].mxu0
        %v2959 = vpop.f32.mrb[0].mxu0
        %2960 = vdwg.mxu0
        %v2961 = vpack.c.bf16 %v2956, %v2956
        %s2962 = scalar_lea.vmem %s12, 128
        %v2963 = vld [vmem:[%s2962] sm:$0xf]
        %v2964 = vld [vmem:[%s2962 + $0x4] sm:$0xf]
        %v2965 = vld [vmem:[%s2962 + $0x8] sm:$0xf]
        %v2966 = vld [vmem:[%s2962 + $0xc] sm:$0xf]
        %v2967 = vld [vmem:[%s2962 + $0x10] sm:$0xf]
        %v2968 = vld [vmem:[%s2962 + $0x14] sm:$0xf]
        %v2969 = vld [vmem:[%s2962 + $0x18] sm:$0xf]
        %v2970 = vld [vmem:[%s2962 + $0x1c] sm:$0xf]
        %s2971 = scalar_lea.vmem %s13, 4
        %v2972 = vld [vmem:[%s2971] sm:$0x1]
        %v2974 = vlaneseq
        %v2975 = vshrl.u32 %v2974, 7
        %v2976 = vsub.s32 0, %v2975
        %v2977 = vrot.slane %v2972, %v2976
        %v2987 = vunpack.c.l.b16 %v2963
        %v2988 = vunpack.c.l.b16 %v2964
        %v2989 = vunpack.c.l.b16 %v2965
        %v2990 = vunpack.c.l.b16 %v2966
        %v2991 = vunpack.c.l.b16 %v2967
        %v2992 = vunpack.c.l.b16 %v2968
        %v2993 = vunpack.c.l.b16 %v2969
        %v2994 = vunpack.c.l.b16 %v2970
        %v2995 = vpack.c.b16 %v2988, %v2987
        %v2996 = vpack.c.b16 %v2990, %v2989
        %v2997 = vpack.c.b16 %v2992, %v2991
        %v2998 = vpack.c.b16 %v2994, %v2993
        %3003 = vmatprep.subr.bf16.mxu0 0
        %3004 = vmatpush1.bf16.msra.mxu0 %v2995
        %3005 = vmatprep.subr.bf16.mxu0 0
        %3006 = vmatpush1.bf16.msra.mxu0 %v2996
        %3007 = vmatprep.subr.bf16.mxu0 0
        %3008 = vmatpush1.bf16.msra.mxu0 %v2997
        %3009 = vmatprep.subr.bf16.mxu0 0
        %3010 = vmatpush1.bf16.msra.mxu0 %v2998
        %3011 = vmatprep.subr.bf16.mxu0 0
        %3012 = vmatpush1.bf16.msra.mxu0 0
        %3013 = vmatprep.subr.bf16.mxu0 0
        %3014 = vmatpush1.bf16.msra.mxu0 0
        %3015 = vmatprep.subr.bf16.mxu0 0
        %3016 = vmatpush1.bf16.msra.mxu0 0
        %3017 = vmatprep.subr.bf16.mxu0 0
        %3018 = vmatpush1.bf16.msra.mxu0 0
        %3019 = vmatprep.subr.bf16.mxu0 0
        %3020 = vmatpush1.bf16.msra.mxu0 0
        %3021 = vmatprep.subr.bf16.mxu0 0
        %3022 = vmatpush1.bf16.msra.mxu0 0
        %3023 = vmatprep.subr.bf16.mxu0 0
        %3024 = vmatpush1.bf16.msra.mxu0 0
        %3025 = vmatprep.subr.bf16.mxu0 0
        %3026 = vmatpush1.bf16.msra.mxu0 0
        %3027 = vmatprep.subr.bf16.mxu0 0
        %3028 = vmatpush1.bf16.msra.mxu0 0
        %3029 = vmatprep.subr.bf16.mxu0 0
        %3030 = vmatpush1.bf16.msra.mxu0 0
        %3031 = vmatprep.subr.bf16.mxu0 0
        %3032 = vmatpush1.bf16.msra.mxu0 0
        %3033 = vmatprep.subr.bf16.mxu0 0
        %3034 = vmatpush1.bf16.msra.mxu0 0
        %3035 = vmatprep.mubr.bf16.mxu0 0
        %3036 = vmatmul.mubr.bf16.gmra.mrb[0].mxu0 %v2837
        %v3037 = vpop.f32.mrb[0].mxu0
        %v3038 = vadd.f32 %v2977, %v3037
        %v3039 = vpop.f32.mrb[0].mxu0
        %v3040 = vpop.f32.mrb[0].mxu0
        %v3041 = vpop.f32.mrb[0].mxu0
        %3042 = vdwg.mxu0
        %v3043 = vpack.c.bf16 %v3038, %v3038
        %v3045 = vsel %vm1146, %v2879, 0
        %v3048 = vsel %vm1146, %v2961, 0
        %3050 = vmatprep.subr.bf16.mxu0 0
        %3051 = vmatpush1.bf16.xpose.msra.mxu0 %v3048
        %3052 = vmatprep.subr.bf16.mxu0 0
        %3053 = vmatpush1.bf16.xpose.msra.mxu0 0
        %3054 = vmatprep.subr.bf16.mxu0 0
        %3055 = vmatpush1.bf16.xpose.msra.mxu0 0
        %3056 = vmatprep.subr.bf16.mxu0 0
        %3057 = vmatpush1.bf16.xpose.msra.mxu0 0
        %3058 = vmatprep.subr.bf16.mxu0 0
        %3059 = vmatpush1.bf16.xpose.msra.mxu0 0
        %3060 = vmatprep.subr.bf16.mxu0 0
        %3061 = vmatpush1.bf16.xpose.msra.mxu0 0
        %3062 = vmatprep.subr.bf16.mxu0 0
        %3063 = vmatpush1.bf16.xpose.msra.mxu0 0
        %3064 = vmatprep.subr.bf16.mxu0 0
        %3065 = vmatpush1.bf16.xpose.msra.mxu0 0
        %3066 = vmatprep.subr.bf16.mxu0 0
        %3067 = vmatpush1.bf16.xpose.msra.mxu0 0
        %3068 = vmatprep.subr.bf16.mxu0 0
        %3069 = vmatpush1.bf16.xpose.msra.mxu0 0
        %3070 = vmatprep.subr.bf16.mxu0 0
        %3071 = vmatpush1.bf16.xpose.msra.mxu0 0
        %3072 = vmatprep.subr.bf16.mxu0 0
        %3073 = vmatpush1.bf16.xpose.msra.mxu0 0
        %3074 = vmatprep.subr.bf16.mxu0 0
        %3075 = vmatpush1.bf16.xpose.msra.mxu0 0
        %3076 = vmatprep.subr.bf16.mxu0 0
        %3077 = vmatpush1.bf16.xpose.msra.mxu0 0
        %3078 = vmatprep.subr.bf16.mxu0 0
        %3079 = vmatpush1.bf16.xpose.msra.mxu0 0
        %3080 = vmatprep.subr.bf16.mxu0 0
        %3081 = vmatpush1.bf16.xpose.msra.mxu0 0
        %3082 = vmatprep.mubr.bf16.mxu0 0
        %3083 = vmatmul.mubr.bf16.gmra.mrb[0].mxu0 %v3045
        %v3084 = vpop.f32.mrb[0].mxu0
        %v3085 = vadd.f32 0.0, %v3084
        %v3086 = vpop.f32.mrb[0].mxu0
        %v3087 = vpop.f32.mrb[0].mxu0
        %v3088 = vpop.f32.mrb[0].mxu0
        %3089 = vdwg.mxu0
        %v3090 = vsel %vm1193, %v3085, -inf
        %3091 = vmax.xlane.f32.xlu0 %v3090
        %v3092 = vpop.xlane.xlu0 %3091
        %v3093 = vsub.f32 %v3085, %v3092
        %v3094 = vmul.f32 %v3093, 1.442695
        %v3095 = vpow.pop %v3094
        %v3096 = vsel %vm1193, %v3095, 0.0
        %3097 = vadd.xlane.f32.xlu0 %v3096
        %v3098 = vpop.xlane.xlu0 %3097
        %v3099 = vrcp.pop %v3098
        %v3100 = vmul.f32 %v3095, %v3099
        %v3101 = vpack.c.bf16 %v3100, %v3100
        %v3103 = vsel %vm1206, %v3101, 0
        %v3106 = vand.u32 %v3043, %v1213
        %3108 = vmatprep.subr.bf16.mxu0 0
        %3109 = vmatpush1.bf16.msra.mxu0 %v3106
        %3110 = vmatprep.subr.bf16.mxu0 0
        %3111 = vmatpush1.bf16.msra.mxu0 0
        %3112 = vmatprep.subr.bf16.mxu0 0
        %3113 = vmatpush1.bf16.msra.mxu0 0
        %3114 = vmatprep.subr.bf16.mxu0 0
        %3115 = vmatpush1.bf16.msra.mxu0 0
        %3116 = vmatprep.subr.bf16.mxu0 0
        %3117 = vmatpush1.bf16.msra.mxu0 0
        %3118 = vmatprep.subr.bf16.mxu0 0
        %3119 = vmatpush1.bf16.msra.mxu0 0
        %3120 = vmatprep.subr.bf16.mxu0 0
        %3121 = vmatpush1.bf16.msra.mxu0 0
        %3122 = vmatprep.subr.bf16.mxu0 0
        %3123 = vmatpush1.bf16.msra.mxu0 0
        %3124 = vmatprep.subr.bf16.mxu0 0
        %3125 = vmatpush1.bf16.msra.mxu0 0
        %3126 = vmatprep.subr.bf16.mxu0 0
        %3127 = vmatpush1.bf16.msra.mxu0 0
        %3128 = vmatprep.subr.bf16.mxu0 0
        %3129 = vmatpush1.bf16.msra.mxu0 0
        %3130 = vmatprep.subr.bf16.mxu0 0
        %3131 = vmatpush1.bf16.msra.mxu0 0
        %3132 = vmatprep.subr.bf16.mxu0 0
        %3133 = vmatpush1.bf16.msra.mxu0 0
        %3134 = vmatprep.subr.bf16.mxu0 0
        %3135 = vmatpush1.bf16.msra.mxu0 0
        %3136 = vmatprep.subr.bf16.mxu0 0
        %3137 = vmatpush1.bf16.msra.mxu0 0
        %3138 = vmatprep.subr.bf16.mxu0 0
        %3139 = vmatpush1.bf16.msra.mxu0 0
        %3140 = vmatprep.mubr.bf16.mxu0 0
        %3141 = vmatmul.mubr.bf16.gmra.mrb[0].mxu0 %v3103
        %v3142 = vpop.f32.mrb[0].mxu0
        %v3143 = vadd.f32 0.0, %v3142
        %v3144 = vpop.f32.mrb[0].mxu0
        %v3145 = vpop.f32.mrb[0].mxu0
        %v3146 = vpop.f32.mrb[0].mxu0
        %3147 = vdwg.mxu0
        %v3148 = vpack.c.bf16 %v3143, %v3143
        %s3149 = scalar_lea.vmem %s14, 32
        %v3150 = vld [vmem:[%s3149] sm:$0xf]
        %v3151 = vld [vmem:[%s3149 + $0x4] sm:$0xf]
        %s3152 = scalar_lea.vmem %s8, 160
        %v3153 = vld [vmem:[%s3152] sm:$0xf]
        %v3154 = vld [vmem:[%s3152 + $0x4] sm:$0xf]
        %v3155 = vld [vmem:[%s3152 + $0x8] sm:$0xf]
        %v3156 = vld [vmem:[%s3152 + $0xc] sm:$0xf]
        %v3157 = vld [vmem:[%s3152 + $0x10] sm:$0xf]
        %v3158 = vld [vmem:[%s3152 + $0x14] sm:$0xf]
        %v3159 = vld [vmem:[%s3152 + $0x18] sm:$0xf]
        %v3160 = vld [vmem:[%s3152 + $0x1c] sm:$0xf]
        %s3161 = scalar_lea.vmem %s9, 5
        %v3162 = vld [vmem:[%s3161] sm:$0x1]
        %v3164 = vlaneseq
        %v3165 = vshrl.u32 %v3164, 7
        %v3166 = vsub.s32 0, %v3165
        %v3167 = vrot.slane %v3162, %v3166
        %v3177 = vunpack.c.l.b16 %v3153
        %v3178 = vunpack.c.l.b16 %v3154
        %v3179 = vunpack.c.l.b16 %v3155
        %v3180 = vunpack.c.l.b16 %v3156
        %v3181 = vunpack.c.l.b16 %v3157
        %v3182 = vunpack.c.l.b16 %v3158
        %v3183 = vunpack.c.l.b16 %v3159
        %v3184 = vunpack.c.l.b16 %v3160
        %v3185 = vpack.c.b16 %v3178, %v3177
        %v3186 = vpack.c.b16 %v3180, %v3179
        %v3187 = vpack.c.b16 %v3182, %v3181
        %v3188 = vpack.c.b16 %v3184, %v3183
        %3193 = vmatprep.subr.bf16.mxu0 0
        %3194 = vmatpush1.bf16.msra.mxu0 %v3185
        %3195 = vmatprep.subr.bf16.mxu0 0
        %3196 = vmatpush1.bf16.msra.mxu0 %v3186
        %3197 = vmatprep.subr.bf16.mxu0 0
        %3198 = vmatpush1.bf16.msra.mxu0 %v3187
        %3199 = vmatprep.subr.bf16.mxu0 0
        %3200 = vmatpush1.bf16.msra.mxu0 %v3188
        %3201 = vmatprep.subr.bf16.mxu0 0
        %3202 = vmatpush1.bf16.msra.mxu0 0
        %3203 = vmatprep.subr.bf16.mxu0 0
        %3204 = vmatpush1.bf16.msra.mxu0 0
        %3205 = vmatprep.subr.bf16.mxu0 0
        %3206 = vmatpush1.bf16.msra.mxu0 0
        %3207 = vmatprep.subr.bf16.mxu0 0
        %3208 = vmatpush1.bf16.msra.mxu0 0
        %3209 = vmatprep.subr.bf16.mxu0 0
        %3210 = vmatpush1.bf16.msra.mxu0 0
        %3211 = vmatprep.subr.bf16.mxu0 0
        %3212 = vmatpush1.bf16.msra.mxu0 0
        %3213 = vmatprep.subr.bf16.mxu0 0
        %3214 = vmatpush1.bf16.msra.mxu0 0
        %3215 = vmatprep.subr.bf16.mxu0 0
        %3216 = vmatpush1.bf16.msra.mxu0 0
        %3217 = vmatprep.subr.bf16.mxu0 0
        %3218 = vmatpush1.bf16.msra.mxu0 0
        %3219 = vmatprep.subr.bf16.mxu0 0
        %3220 = vmatpush1.bf16.msra.mxu0 0
        %3221 = vmatprep.subr.bf16.mxu0 0
        %3222 = vmatpush1.bf16.msra.mxu0 0
        %3223 = vmatprep.subr.bf16.mxu0 0
        %3224 = vmatpush1.bf16.msra.mxu0 0
        %3225 = vmatprep.mubr.bf16.mxu0 0
        %3226 = vmatmul.mubr.bf16.gmra.mrb[0].mxu0 %v2837
        %v3227 = vpop.f32.mrb[0].mxu0
        %v3228 = vadd.f32 %v3167, %v3227
        %v3229 = vpop.f32.mrb[0].mxu0
        %v3230 = vpop.f32.mrb[0].mxu0
        %v3231 = vpop.f32.mrb[0].mxu0
        %3232 = vdwg.mxu0
        %v3233 = vpack.c.bf16 %v3228, %v3228
        %s3234 = scalar_lea.vmem %s10, 160
        %v3235 = vld [vmem:[%s3234] sm:$0xf]
        %v3236 = vld [vmem:[%s3234 + $0x4] sm:$0xf]
        %v3237 = vld [vmem:[%s3234 + $0x8] sm:$0xf]
        %v3238 = vld [vmem:[%s3234 + $0xc] sm:$0xf]
        %v3239 = vld [vmem:[%s3234 + $0x10] sm:$0xf]
        %v3240 = vld [vmem:[%s3234 + $0x14] sm:$0xf]
        %v3241 = vld [vmem:[%s3234 + $0x18] sm:$0xf]
        %v3242 = vld [vmem:[%s3234 + $0x1c] sm:$0xf]
        %s3243 = scalar_lea.vmem %s11, 5
        %v3244 = vld [vmem:[%s3243] sm:$0x1]
        %v3246 = vlaneseq
        %v3247 = vshrl.u32 %v3246, 7
        %v3248 = vsub.s32 0, %v3247
        %v3249 = vrot.slane %v3244, %v3248
        %v3259 = vunpack.c.l.b16 %v3235
        %v3260 = vunpack.c.l.b16 %v3236
        %v3261 = vunpack.c.l.b16 %v3237
        %v3262 = vunpack.c.l.b16 %v3238
        %v3263 = vunpack.c.l.b16 %v3239
        %v3264 = vunpack.c.l.b16 %v3240
        %v3265 = vunpack.c.l.b16 %v3241
        %v3266 = vunpack.c.l.b16 %v3242
        %v3267 = vpack.c.b16 %v3260, %v3259
        %v3268 = vpack.c.b16 %v3262, %v3261
        %v3269 = vpack.c.b16 %v3264, %v3263
        %v3270 = vpack.c.b16 %v3266, %v3265
        %3275 = vmatprep.subr.bf16.mxu0 0
        %3276 = vmatpush1.bf16.msra.mxu0 %v3267
        %3277 = vmatprep.subr.bf16.mxu0 0
        %3278 = vmatpush1.bf16.msra.mxu0 %v3268
        %3279 = vmatprep.subr.bf16.mxu0 0
        %3280 = vmatpush1.bf16.msra.mxu0 %v3269
        %3281 = vmatprep.subr.bf16.mxu0 0
        %3282 = vmatpush1.bf16.msra.mxu0 %v3270
        %3283 = vmatprep.subr.bf16.mxu0 0
        %3284 = vmatpush1.bf16.msra.mxu0 0
        %3285 = vmatprep.subr.bf16.mxu0 0
        %3286 = vmatpush1.bf16.msra.mxu0 0
        %3287 = vmatprep.subr.bf16.mxu0 0
        %3288 = vmatpush1.bf16.msra.mxu0 0
        %3289 = vmatprep.subr.bf16.mxu0 0
        %3290 = vmatpush1.bf16.msra.mxu0 0
        %3291 = vmatprep.subr.bf16.mxu0 0
        %3292 = vmatpush1.bf16.msra.mxu0 0
        %3293 = vmatprep.subr.bf16.mxu0 0
        %3294 = vmatpush1.bf16.msra.mxu0 0
        %3295 = vmatprep.subr.bf16.mxu0 0
        %3296 = vmatpush1.bf16.msra.mxu0 0
        %3297 = vmatprep.subr.bf16.mxu0 0
        %3298 = vmatpush1.bf16.msra.mxu0 0
        %3299 = vmatprep.subr.bf16.mxu0 0
        %3300 = vmatpush1.bf16.msra.mxu0 0
        %3301 = vmatprep.subr.bf16.mxu0 0
        %3302 = vmatpush1.bf16.msra.mxu0 0
        %3303 = vmatprep.subr.bf16.mxu0 0
        %3304 = vmatpush1.bf16.msra.mxu0 0
        %3305 = vmatprep.subr.bf16.mxu0 0
        %3306 = vmatpush1.bf16.msra.mxu0 0
        %3307 = vmatprep.mubr.bf16.mxu0 0
        %3308 = vmatmul.mubr.bf16.gmra.mrb[0].mxu0 %v2837
        %v3309 = vpop.f32.mrb[0].mxu0
        %v3310 = vadd.f32 %v3249, %v3309
        %v3311 = vpop.f32.mrb[0].mxu0
        %v3312 = vpop.f32.mrb[0].mxu0
        %v3313 = vpop.f32.mrb[0].mxu0
        %3314 = vdwg.mxu0
        %v3315 = vpack.c.bf16 %v3310, %v3310
        %s3316 = scalar_lea.vmem %s12, 160
        %v3317 = vld [vmem:[%s3316] sm:$0xf]
        %v3318 = vld [vmem:[%s3316 + $0x4] sm:$0xf]
        %v3319 = vld [vmem:[%s3316 + $0x8] sm:$0xf]
        %v3320 = vld [vmem:[%s3316 + $0xc] sm:$0xf]
        %v3321 = vld [vmem:[%s3316 + $0x10] sm:$0xf]
        %v3322 = vld [vmem:[%s3316 + $0x14] sm:$0xf]
        %v3323 = vld [vmem:[%s3316 + $0x18] sm:$0xf]
        %v3324 = vld [vmem:[%s3316 + $0x1c] sm:$0xf]
        %s3325 = scalar_lea.vmem %s13, 5
        %v3326 = vld [vmem:[%s3325] sm:$0x1]
        %v3328 = vlaneseq
        %v3329 = vshrl.u32 %v3328, 7
        %v3330 = vsub.s32 0, %v3329
        %v3331 = vrot.slane %v3326, %v3330
        %v3341 = vunpack.c.l.b16 %v3317
        %v3342 = vunpack.c.l.b16 %v3318
        %v3343 = vunpack.c.l.b16 %v3319
        %v3344 = vunpack.c.l.b16 %v3320
        %v3345 = vunpack.c.l.b16 %v3321
        %v3346 = vunpack.c.l.b16 %v3322
        %v3347 = vunpack.c.l.b16 %v3323
        %v3348 = vunpack.c.l.b16 %v3324
        %v3349 = vpack.c.b16 %v3342, %v3341
        %v3350 = vpack.c.b16 %v3344, %v3343
        %v3351 = vpack.c.b16 %v3346, %v3345
        %v3352 = vpack.c.b16 %v3348, %v3347
        %3357 = vmatprep.subr.bf16.mxu0 0
        %3358 = vmatpush1.bf16.msra.mxu0 %v3349
        %3359 = vmatprep.subr.bf16.mxu0 0
        %3360 = vmatpush1.bf16.msra.mxu0 %v3350
        %3361 = vmatprep.subr.bf16.mxu0 0
        %3362 = vmatpush1.bf16.msra.mxu0 %v3351
        %3363 = vmatprep.subr.bf16.mxu0 0
        %3364 = vmatpush1.bf16.msra.mxu0 %v3352
        %3365 = vmatprep.subr.bf16.mxu0 0
        %3366 = vmatpush1.bf16.msra.mxu0 0
        %3367 = vmatprep.subr.bf16.mxu0 0
        %3368 = vmatpush1.bf16.msra.mxu0 0
        %3369 = vmatprep.subr.bf16.mxu0 0
        %3370 = vmatpush1.bf16.msra.mxu0 0
        %3371 = vmatprep.subr.bf16.mxu0 0
        %3372 = vmatpush1.bf16.msra.mxu0 0
        %3373 = vmatprep.subr.bf16.mxu0 0
        %3374 = vmatpush1.bf16.msra.mxu0 0
        %3375 = vmatprep.subr.bf16.mxu0 0
        %3376 = vmatpush1.bf16.msra.mxu0 0
        %3377 = vmatprep.subr.bf16.mxu0 0
        %3378 = vmatpush1.bf16.msra.mxu0 0
        %3379 = vmatprep.subr.bf16.mxu0 0
        %3380 = vmatpush1.bf16.msra.mxu0 0
        %3381 = vmatprep.subr.bf16.mxu0 0
        %3382 = vmatpush1.bf16.msra.mxu0 0
        %3383 = vmatprep.subr.bf16.mxu0 0
        %3384 = vmatpush1.bf16.msra.mxu0 0
        %3385 = vmatprep.subr.bf16.mxu0 0
        %3386 = vmatpush1.bf16.msra.mxu0 0
        %3387 = vmatprep.subr.bf16.mxu0 0
        %3388 = vmatpush1.bf16.msra.mxu0 0
        %3389 = vmatprep.mubr.bf16.mxu0 0
        %3390 = vmatmul.mubr.bf16.gmra.mrb[0].mxu0 %v2837
        %v3391 = vpop.f32.mrb[0].mxu0
        %v3392 = vadd.f32 %v3331, %v3391
        %v3393 = vpop.f32.mrb[0].mxu0
        %v3394 = vpop.f32.mrb[0].mxu0
        %v3395 = vpop.f32.mrb[0].mxu0
        %3396 = vdwg.mxu0
        %v3397 = vpack.c.bf16 %v3392, %v3392
        %v3399 = vsel %vm1146, %v3233, 0
        %v3402 = vsel %vm1146, %v3315, 0
        %3404 = vmatprep.subr.bf16.mxu0 0
        %3405 = vmatpush1.bf16.xpose.msra.mxu0 %v3402
        %3406 = vmatprep.subr.bf16.mxu0 0
        %3407 = vmatpush1.bf16.xpose.msra.mxu0 0
        %3408 = vmatprep.subr.bf16.mxu0 0
        %3409 = vmatpush1.bf16.xpose.msra.mxu0 0
        %3410 = vmatprep.subr.bf16.mxu0 0
        %3411 = vmatpush1.bf16.xpose.msra.mxu0 0
        %3412 = vmatprep.subr.bf16.mxu0 0
        %3413 = vmatpush1.bf16.xpose.msra.mxu0 0
        %3414 = vmatprep.subr.bf16.mxu0 0
        %3415 = vmatpush1.bf16.xpose.msra.mxu0 0
        %3416 = vmatprep.subr.bf16.mxu0 0
        %3417 = vmatpush1.bf16.xpose.msra.mxu0 0
        %3418 = vmatprep.subr.bf16.mxu0 0
        %3419 = vmatpush1.bf16.xpose.msra.mxu0 0
        %3420 = vmatprep.subr.bf16.mxu0 0
        %3421 = vmatpush1.bf16.xpose.msra.mxu0 0
        %3422 = vmatprep.subr.bf16.mxu0 0
        %3423 = vmatpush1.bf16.xpose.msra.mxu0 0
        %3424 = vmatprep.subr.bf16.mxu0 0
        %3425 = vmatpush1.bf16.xpose.msra.mxu0 0
        %3426 = vmatprep.subr.bf16.mxu0 0
        %3427 = vmatpush1.bf16.xpose.msra.mxu0 0
        %3428 = vmatprep.subr.bf16.mxu0 0
        %3429 = vmatpush1.bf16.xpose.msra.mxu0 0
        %3430 = vmatprep.subr.bf16.mxu0 0
        %3431 = vmatpush1.bf16.xpose.msra.mxu0 0
        %3432 = vmatprep.subr.bf16.mxu0 0
        %3433 = vmatpush1.bf16.xpose.msra.mxu0 0
        %3434 = vmatprep.subr.bf16.mxu0 0
        %3435 = vmatpush1.bf16.xpose.msra.mxu0 0
        %3436 = vmatprep.mubr.bf16.mxu0 0
        %3437 = vmatmul.mubr.bf16.gmra.mrb[0].mxu0 %v3399
        %v3438 = vpop.f32.mrb[0].mxu0
        %v3439 = vadd.f32 0.0, %v3438
        %v3440 = vpop.f32.mrb[0].mxu0
        %v3441 = vpop.f32.mrb[0].mxu0
        %v3442 = vpop.f32.mrb[0].mxu0
        %3443 = vdwg.mxu0
        %v3444 = vsel %vm1193, %v3439, -inf
        %3445 = vmax.xlane.f32.xlu0 %v3444
        %v3446 = vpop.xlane.xlu0 %3445
        %v3447 = vsub.f32 %v3439, %v3446
        %v3448 = vmul.f32 %v3447, 1.442695
        %v3449 = vpow.pop %v3448
        %v3450 = vsel %vm1193, %v3449, 0.0
        %3451 = vadd.xlane.f32.xlu0 %v3450
        %v3452 = vpop.xlane.xlu0 %3451
        %v3453 = vrcp.pop %v3452
        %v3454 = vmul.f32 %v3449, %v3453
        %v3455 = vpack.c.bf16 %v3454, %v3454
        %v3457 = vsel %vm1206, %v3455, 0
        %v3460 = vand.u32 %v3397, %v1213
        %3462 = vmatprep.subr.bf16.mxu0 0
        %3463 = vmatpush1.bf16.msra.mxu0 %v3460
        %3464 = vmatprep.subr.bf16.mxu0 0
        %3465 = vmatpush1.bf16.msra.mxu0 0
        %3466 = vmatprep.subr.bf16.mxu0 0
        %3467 = vmatpush1.bf16.msra.mxu0 0
        %3468 = vmatprep.subr.bf16.mxu0 0
        %3469 = vmatpush1.bf16.msra.mxu0 0
        %3470 = vmatprep.subr.bf16.mxu0 0
        %3471 = vmatpush1.bf16.msra.mxu0 0
        %3472 = vmatprep.subr.bf16.mxu0 0
        %3473 = vmatpush1.bf16.msra.mxu0 0
        %3474 = vmatprep.subr.bf16.mxu0 0
        %3475 = vmatpush1.bf16.msra.mxu0 0
        %3476 = vmatprep.subr.bf16.mxu0 0
        %3477 = vmatpush1.bf16.msra.mxu0 0
        %3478 = vmatprep.subr.bf16.mxu0 0
        %3479 = vmatpush1.bf16.msra.mxu0 0
        %3480 = vmatprep.subr.bf16.mxu0 0
        %3481 = vmatpush1.bf16.msra.mxu0 0
        %3482 = vmatprep.subr.bf16.mxu0 0
        %3483 = vmatpush1.bf16.msra.mxu0 0
        %3484 = vmatprep.subr.bf16.mxu0 0
        %3485 = vmatpush1.bf16.msra.mxu0 0
        %3486 = vmatprep.subr.bf16.mxu0 0
        %3487 = vmatpush1.bf16.msra.mxu0 0
        %3488 = vmatprep.subr.bf16.mxu0 0
        %3489 = vmatpush1.bf16.msra.mxu0 0
        %3490 = vmatprep.subr.bf16.mxu0 0
        %3491 = vmatpush1.bf16.msra.mxu0 0
        %3492 = vmatprep.subr.bf16.mxu0 0
        %3493 = vmatpush1.bf16.msra.mxu0 0
        %3494 = vmatprep.mubr.bf16.mxu0 0
        %3495 = vmatmul.mubr.bf16.gmra.mrb[0].mxu0 %v3457
        %v3496 = vpop.f32.mrb[0].mxu0
        %v3497 = vadd.f32 0.0, %v3496
        %v3498 = vpop.f32.mrb[0].mxu0
        %v3499 = vpop.f32.mrb[0].mxu0
        %v3500 = vpop.f32.mrb[0].mxu0
        %3501 = vdwg.mxu0
        %v3502 = vpack.c.bf16 %v3497, %v3497
        %s3503 = scalar_lea.vmem %s14, 40
        %v3504 = vld [vmem:[%s3503] sm:$0xf]
        %v3505 = vld [vmem:[%s3503 + $0x4] sm:$0xf]
        %v3508 = vunpack.c.l.b16 %v3504
        %v3509 = vunpack.c.l.b16 %v3505
        %v3510 = vpack.c.b16 %v3509, %v3508
        %v3513 = vsel %vm1146, %v3502, 0
        %3515 = vmatprep.subr.bf16.mxu0 0
        %3516 = vmatpush1.bf16.msra.mxu0 %v3510
        %3517 = vmatprep.subr.bf16.mxu0 0
        %3518 = vmatpush1.bf16.msra.mxu0 0
        %3519 = vmatprep.subr.bf16.mxu0 0
        %3520 = vmatpush1.bf16.msra.mxu0 0
        %3521 = vmatprep.subr.bf16.mxu0 0
        %3522 = vmatpush1.bf16.msra.mxu0 0
        %3523 = vmatprep.subr.bf16.mxu0 0
        %3524 = vmatpush1.bf16.msra.mxu0 0
        %3525 = vmatprep.subr.bf16.mxu0 0
        %3526 = vmatpush1.bf16.msra.mxu0 0
        %3527 = vmatprep.subr.bf16.mxu0 0
        %3528 = vmatpush1.bf16.msra.mxu0 0
        %3529 = vmatprep.subr.bf16.mxu0 0
        %3530 = vmatpush1.bf16.msra.mxu0 0
        %3531 = vmatprep.subr.bf16.mxu0 0
        %3532 = vmatpush1.bf16.msra.mxu0 0
        %3533 = vmatprep.subr.bf16.mxu0 0
        %3534 = vmatpush1.bf16.msra.mxu0 0
        %3535 = vmatprep.subr.bf16.mxu0 0
        %3536 = vmatpush1.bf16.msra.mxu0 0
        %3537 = vmatprep.subr.bf16.mxu0 0
        %3538 = vmatpush1.bf16.msra.mxu0 0
        %3539 = vmatprep.subr.bf16.mxu0 0
        %3540 = vmatpush1.bf16.msra.mxu0 0
        %3541 = vmatprep.subr.bf16.mxu0 0
        %3542 = vmatpush1.bf16.msra.mxu0 0
        %3543 = vmatprep.subr.bf16.mxu0 0
        %3544 = vmatpush1.bf16.msra.mxu0 0
        %3545 = vmatprep.subr.bf16.mxu0 0
        %3546 = vmatpush1.bf16.msra.mxu0 0
        %3547 = vmatprep.mubr.bf16.mxu0 0
        %3548 = vmatmul.mubr.bf16.gmra.mrb[0].mxu0 %v3513
        %v3549 = vpop.f32.mrb[0].mxu0
        %v3550 = vadd.f32 0.0, %v3549
        %v3551 = vpop.f32.mrb[0].mxu0
        %v3552 = vpop.f32.mrb[0].mxu0
        %v3553 = vpop.f32.mrb[0].mxu0
        %3554 = vdwg.mxu0
        %v3557 = vunpack.c.l.b16 %v3150
        %v3558 = vunpack.c.l.b16 %v3151
        %v3559 = vpack.c.b16 %v3558, %v3557
        %v3562 = vsel %vm1146, %v3148, 0
        %3564 = vmatprep.subr.bf16.mxu0 0
        %3565 = vmatpush1.bf16.msra.mxu0 %v3559
        %3566 = vmatprep.subr.bf16.mxu0 0
        %3567 = vmatpush1.bf16.msra.mxu0 0
        %3568 = vmatprep.subr.bf16.mxu0 0
        %3569 = vmatpush1.bf16.msra.mxu0 0
        %3570 = vmatprep.subr.bf16.mxu0 0
        %3571 = vmatpush1.bf16.msra.mxu0 0
        %3572 = vmatprep.subr.bf16.mxu0 0
        %3573 = vmatpush1.bf16.msra.mxu0 0
        %3574 = vmatprep.subr.bf16.mxu0 0
        %3575 = vmatpush1.bf16.msra.mxu0 0
        %3576 = vmatprep.subr.bf16.mxu0 0
        %3577 = vmatpush1.bf16.msra.mxu0 0
        %3578 = vmatprep.subr.bf16.mxu0 0
        %3579 = vmatpush1.bf16.msra.mxu0 0
        %3580 = vmatprep.subr.bf16.mxu0 0
        %3581 = vmatpush1.bf16.msra.mxu0 0
        %3582 = vmatprep.subr.bf16.mxu0 0
        %3583 = vmatpush1.bf16.msra.mxu0 0
        %3584 = vmatprep.subr.bf16.mxu0 0
        %3585 = vmatpush1.bf16.msra.mxu0 0
        %3586 = vmatprep.subr.bf16.mxu0 0
        %3587 = vmatpush1.bf16.msra.mxu0 0
        %3588 = vmatprep.subr.bf16.mxu0 0
        %3589 = vmatpush1.bf16.msra.mxu0 0
        %3590 = vmatprep.subr.bf16.mxu0 0
        %3591 = vmatpush1.bf16.msra.mxu0 0
        %3592 = vmatprep.subr.bf16.mxu0 0
        %3593 = vmatpush1.bf16.msra.mxu0 0
        %3594 = vmatprep.subr.bf16.mxu0 0
        %3595 = vmatpush1.bf16.msra.mxu0 0
        %3596 = vmatprep.mubr.bf16.mxu0 0
        %3597 = vmatmul.mubr.bf16.gmra.mrb[0].mxu0 %v3562
        %v3598 = vpop.f32.mrb[0].mxu0
        %v3599 = vadd.f32 %v3550, %v3598
        %v3600 = vpop.f32.mrb[0].mxu0
        %v3601 = vpop.f32.mrb[0].mxu0
        %v3602 = vpop.f32.mrb[0].mxu0
        %3603 = vdwg.mxu0
        %s3604 = scalar_lea.vmem %s8, 192
        %v3605 = vld [vmem:[%s3604] sm:$0xf]
        %v3606 = vld [vmem:[%s3604 + $0x4] sm:$0xf]
        %v3607 = vld [vmem:[%s3604 + $0x8] sm:$0xf]
        %v3608 = vld [vmem:[%s3604 + $0xc] sm:$0xf]
        %v3609 = vld [vmem:[%s3604 + $0x10] sm:$0xf]
        %v3610 = vld [vmem:[%s3604 + $0x14] sm:$0xf]
        %v3611 = vld [vmem:[%s3604 + $0x18] sm:$0xf]
        %v3612 = vld [vmem:[%s3604 + $0x1c] sm:$0xf]
        %s3613 = scalar_lea.vmem %s9, 6
        %v3614 = vld [vmem:[%s3613] sm:$0x1]
        %v3616 = vlaneseq
        %v3617 = vshrl.u32 %v3616, 7
        %v3618 = vsub.s32 0, %v3617
        %v3619 = vrot.slane %v3614, %v3618
        %v3629 = vunpack.c.l.b16 %v3605
        %v3630 = vunpack.c.l.b16 %v3606
        %v3631 = vunpack.c.l.b16 %v3607
        %v3632 = vunpack.c.l.b16 %v3608
        %v3633 = vunpack.c.l.b16 %v3609
        %v3634 = vunpack.c.l.b16 %v3610
        %v3635 = vunpack.c.l.b16 %v3611
        %v3636 = vunpack.c.l.b16 %v3612
        %v3637 = vpack.c.b16 %v3630, %v3629
        %v3638 = vpack.c.b16 %v3632, %v3631
        %v3639 = vpack.c.b16 %v3634, %v3633
        %v3640 = vpack.c.b16 %v3636, %v3635
        %3645 = vmatprep.subr.bf16.mxu0 0
        %3646 = vmatpush1.bf16.msra.mxu0 %v3637
        %3647 = vmatprep.subr.bf16.mxu0 0
        %3648 = vmatpush1.bf16.msra.mxu0 %v3638
        %3649 = vmatprep.subr.bf16.mxu0 0
        %3650 = vmatpush1.bf16.msra.mxu0 %v3639
        %3651 = vmatprep.subr.bf16.mxu0 0
        %3652 = vmatpush1.bf16.msra.mxu0 %v3640
        %3653 = vmatprep.subr.bf16.mxu0 0
        %3654 = vmatpush1.bf16.msra.mxu0 0
        %3655 = vmatprep.subr.bf16.mxu0 0
        %3656 = vmatpush1.bf16.msra.mxu0 0
        %3657 = vmatprep.subr.bf16.mxu0 0
        %3658 = vmatpush1.bf16.msra.mxu0 0
        %3659 = vmatprep.subr.bf16.mxu0 0
        %3660 = vmatpush1.bf16.msra.mxu0 0
        %3661 = vmatprep.subr.bf16.mxu0 0
        %3662 = vmatpush1.bf16.msra.mxu0 0
        %3663 = vmatprep.subr.bf16.mxu0 0
        %3664 = vmatpush1.bf16.msra.mxu0 0
        %3665 = vmatprep.subr.bf16.mxu0 0
        %3666 = vmatpush1.bf16.msra.mxu0 0
        %3667 = vmatprep.subr.bf16.mxu0 0
        %3668 = vmatpush1.bf16.msra.mxu0 0
        %3669 = vmatprep.subr.bf16.mxu0 0
        %3670 = vmatpush1.bf16.msra.mxu0 0
        %3671 = vmatprep.subr.bf16.mxu0 0
        %3672 = vmatpush1.bf16.msra.mxu0 0
        %3673 = vmatprep.subr.bf16.mxu0 0
        %3674 = vmatpush1.bf16.msra.mxu0 0
        %3675 = vmatprep.subr.bf16.mxu0 0
        %3676 = vmatpush1.bf16.msra.mxu0 0
        %3677 = vmatprep.mubr.bf16.mxu0 0
        %3678 = vmatmul.mubr.bf16.gmra.mrb[0].mxu0 %v2837
        %v3679 = vpop.f32.mrb[0].mxu0
        %v3680 = vadd.f32 %v3619, %v3679
        %v3681 = vpop.f32.mrb[0].mxu0
        %v3682 = vpop.f32.mrb[0].mxu0
        %v3683 = vpop.f32.mrb[0].mxu0
        %3684 = vdwg.mxu0
        %v3685 = vpack.c.bf16 %v3680, %v3680
        %s3686 = scalar_lea.vmem %s10, 192
        %v3687 = vld [vmem:[%s3686] sm:$0xf]
        %v3688 = vld [vmem:[%s3686 + $0x4] sm:$0xf]
        %v3689 = vld [vmem:[%s3686 + $0x8] sm:$0xf]
        %v3690 = vld [vmem:[%s3686 + $0xc] sm:$0xf]
        %v3691 = vld [vmem:[%s3686 + $0x10] sm:$0xf]
        %v3692 = vld [vmem:[%s3686 + $0x14] sm:$0xf]
        %v3693 = vld [vmem:[%s3686 + $0x18] sm:$0xf]
        %v3694 = vld [vmem:[%s3686 + $0x1c] sm:$0xf]
        %s3695 = scalar_lea.vmem %s11, 6
        %v3696 = vld [vmem:[%s3695] sm:$0x1]
        %v3698 = vlaneseq
        %v3699 = vshrl.u32 %v3698, 7
        %v3700 = vsub.s32 0, %v3699
        %v3701 = vrot.slane %v3696, %v3700
        %v3711 = vunpack.c.l.b16 %v3687
        %v3712 = vunpack.c.l.b16 %v3688
        %v3713 = vunpack.c.l.b16 %v3689
        %v3714 = vunpack.c.l.b16 %v3690
        %v3715 = vunpack.c.l.b16 %v3691
        %v3716 = vunpack.c.l.b16 %v3692
        %v3717 = vunpack.c.l.b16 %v3693
        %v3718 = vunpack.c.l.b16 %v3694
        %v3719 = vpack.c.b16 %v3712, %v3711
        %v3720 = vpack.c.b16 %v3714, %v3713
        %v3721 = vpack.c.b16 %v3716, %v3715
        %v3722 = vpack.c.b16 %v3718, %v3717
        %3727 = vmatprep.subr.bf16.mxu0 0
        %3728 = vmatpush1.bf16.msra.mxu0 %v3719
        %3729 = vmatprep.subr.bf16.mxu0 0
        %3730 = vmatpush1.bf16.msra.mxu0 %v3720
        %3731 = vmatprep.subr.bf16.mxu0 0
        %3732 = vmatpush1.bf16.msra.mxu0 %v3721
        %3733 = vmatprep.subr.bf16.mxu0 0
        %3734 = vmatpush1.bf16.msra.mxu0 %v3722
        %3735 = vmatprep.subr.bf16.mxu0 0
        %3736 = vmatpush1.bf16.msra.mxu0 0
        %3737 = vmatprep.subr.bf16.mxu0 0
        %3738 = vmatpush1.bf16.msra.mxu0 0
        %3739 = vmatprep.subr.bf16.mxu0 0
        %3740 = vmatpush1.bf16.msra.mxu0 0
        %3741 = vmatprep.subr.bf16.mxu0 0
        %3742 = vmatpush1.bf16.msra.mxu0 0
        %3743 = vmatprep.subr.bf16.mxu0 0
        %3744 = vmatpush1.bf16.msra.mxu0 0
        %3745 = vmatprep.subr.bf16.mxu0 0
        %3746 = vmatpush1.bf16.msra.mxu0 0
        %3747 = vmatprep.subr.bf16.mxu0 0
        %3748 = vmatpush1.bf16.msra.mxu0 0
        %3749 = vmatprep.subr.bf16.mxu0 0
        %3750 = vmatpush1.bf16.msra.mxu0 0
        %3751 = vmatprep.subr.bf16.mxu0 0
        %3752 = vmatpush1.bf16.msra.mxu0 0
        %3753 = vmatprep.subr.bf16.mxu0 0
        %3754 = vmatpush1.bf16.msra.mxu0 0
        %3755 = vmatprep.subr.bf16.mxu0 0
        %3756 = vmatpush1.bf16.msra.mxu0 0
        %3757 = vmatprep.subr.bf16.mxu0 0
        %3758 = vmatpush1.bf16.msra.mxu0 0
        %3759 = vmatprep.mubr.bf16.mxu0 0
        %3760 = vmatmul.mubr.bf16.gmra.mrb[0].mxu0 %v2837
        %v3761 = vpop.f32.mrb[0].mxu0
        %v3762 = vadd.f32 %v3701, %v3761
        %v3763 = vpop.f32.mrb[0].mxu0
        %v3764 = vpop.f32.mrb[0].mxu0
        %v3765 = vpop.f32.mrb[0].mxu0
        %3766 = vdwg.mxu0
        %v3767 = vpack.c.bf16 %v3762, %v3762
        %s3768 = scalar_lea.vmem %s12, 192
        %v3769 = vld [vmem:[%s3768] sm:$0xf]
        %v3770 = vld [vmem:[%s3768 + $0x4] sm:$0xf]
        %v3771 = vld [vmem:[%s3768 + $0x8] sm:$0xf]
        %v3772 = vld [vmem:[%s3768 + $0xc] sm:$0xf]
        %v3773 = vld [vmem:[%s3768 + $0x10] sm:$0xf]
        %v3774 = vld [vmem:[%s3768 + $0x14] sm:$0xf]
        %v3775 = vld [vmem:[%s3768 + $0x18] sm:$0xf]
        %v3776 = vld [vmem:[%s3768 + $0x1c] sm:$0xf]
        %s3777 = scalar_lea.vmem %s13, 6
        %v3778 = vld [vmem:[%s3777] sm:$0x1]
        %v3780 = vlaneseq
        %v3781 = vshrl.u32 %v3780, 7
        %v3782 = vsub.s32 0, %v3781
        %v3783 = vrot.slane %v3778, %v3782
        %v3793 = vunpack.c.l.b16 %v3769
        %v3794 = vunpack.c.l.b16 %v3770
        %v3795 = vunpack.c.l.b16 %v3771
        %v3796 = vunpack.c.l.b16 %v3772
        %v3797 = vunpack.c.l.b16 %v3773
        %v3798 = vunpack.c.l.b16 %v3774
        %v3799 = vunpack.c.l.b16 %v3775
        %v3800 = vunpack.c.l.b16 %v3776
        %v3801 = vpack.c.b16 %v3794, %v3793
        %v3802 = vpack.c.b16 %v3796, %v3795
        %v3803 = vpack.c.b16 %v3798, %v3797
        %v3804 = vpack.c.b16 %v3800, %v3799
        %3809 = vmatprep.subr.bf16.mxu0 0
        %3810 = vmatpush1.bf16.msra.mxu0 %v3801
        %3811 = vmatprep.subr.bf16.mxu0 0
        %3812 = vmatpush1.bf16.msra.mxu0 %v3802
        %3813 = vmatprep.subr.bf16.mxu0 0
        %3814 = vmatpush1.bf16.msra.mxu0 %v3803
        %3815 = vmatprep.subr.bf16.mxu0 0
        %3816 = vmatpush1.bf16.msra.mxu0 %v3804
        %3817 = vmatprep.subr.bf16.mxu0 0
        %3818 = vmatpush1.bf16.msra.mxu0 0
        %3819 = vmatprep.subr.bf16.mxu0 0
        %3820 = vmatpush1.bf16.msra.mxu0 0
        %3821 = vmatprep.subr.bf16.mxu0 0
        %3822 = vmatpush1.bf16.msra.mxu0 0
        %3823 = vmatprep.subr.bf16.mxu0 0
        %3824 = vmatpush1.bf16.msra.mxu0 0
        %3825 = vmatprep.subr.bf16.mxu0 0
        %3826 = vmatpush1.bf16.msra.mxu0 0
        %3827 = vmatprep.subr.bf16.mxu0 0
        %3828 = vmatpush1.bf16.msra.mxu0 0
        %3829 = vmatprep.subr.bf16.mxu0 0
        %3830 = vmatpush1.bf16.msra.mxu0 0
        %3831 = vmatprep.subr.bf16.mxu0 0
        %3832 = vmatpush1.bf16.msra.mxu0 0
        %3833 = vmatprep.subr.bf16.mxu0 0
        %3834 = vmatpush1.bf16.msra.mxu0 0
        %3835 = vmatprep.subr.bf16.mxu0 0
        %3836 = vmatpush1.bf16.msra.mxu0 0
        %3837 = vmatprep.subr.bf16.mxu0 0
        %3838 = vmatpush1.bf16.msra.mxu0 0
        %3839 = vmatprep.subr.bf16.mxu0 0
        %3840 = vmatpush1.bf16.msra.mxu0 0
        %3841 = vmatprep.mubr.bf16.mxu0 0
        %3842 = vmatmul.mubr.bf16.gmra.mrb[0].mxu0 %v2837
        %v3843 = vpop.f32.mrb[0].mxu0
        %v3844 = vadd.f32 %v3783, %v3843
        %v3845 = vpop.f32.mrb[0].mxu0
        %v3846 = vpop.f32.mrb[0].mxu0
        %v3847 = vpop.f32.mrb[0].mxu0
        %3848 = vdwg.mxu0
        %v3849 = vpack.c.bf16 %v3844, %v3844
        %v3851 = vsel %vm1146, %v3685, 0
        %v3854 = vsel %vm1146, %v3767, 0
        %3856 = vmatprep.subr.bf16.mxu0 0
        %3857 = vmatpush1.bf16.xpose.msra.mxu0 %v3854
        %3858 = vmatprep.subr.bf16.mxu0 0
        %3859 = vmatpush1.bf16.xpose.msra.mxu0 0
        %3860 = vmatprep.subr.bf16.mxu0 0
        %3861 = vmatpush1.bf16.xpose.msra.mxu0 0
        %3862 = vmatprep.subr.bf16.mxu0 0
        %3863 = vmatpush1.bf16.xpose.msra.mxu0 0
        %3864 = vmatprep.subr.bf16.mxu0 0
        %3865 = vmatpush1.bf16.xpose.msra.mxu0 0
        %3866 = vmatprep.subr.bf16.mxu0 0
        %3867 = vmatpush1.bf16.xpose.msra.mxu0 0
        %3868 = vmatprep.subr.bf16.mxu0 0
        %3869 = vmatpush1.bf16.xpose.msra.mxu0 0
        %3870 = vmatprep.subr.bf16.mxu0 0
        %3871 = vmatpush1.bf16.xpose.msra.mxu0 0
        %3872 = vmatprep.subr.bf16.mxu0 0
        %3873 = vmatpush1.bf16.xpose.msra.mxu0 0
        %3874 = vmatprep.subr.bf16.mxu0 0
        %3875 = vmatpush1.bf16.xpose.msra.mxu0 0
        %3876 = vmatprep.subr.bf16.mxu0 0
        %3877 = vmatpush1.bf16.xpose.msra.mxu0 0
        %3878 = vmatprep.subr.bf16.mxu0 0
        %3879 = vmatpush1.bf16.xpose.msra.mxu0 0
        %3880 = vmatprep.subr.bf16.mxu0 0
        %3881 = vmatpush1.bf16.xpose.msra.mxu0 0
        %3882 = vmatprep.subr.bf16.mxu0 0
        %3883 = vmatpush1.bf16.xpose.msra.mxu0 0
        %3884 = vmatprep.subr.bf16.mxu0 0
        %3885 = vmatpush1.bf16.xpose.msra.mxu0 0
        %3886 = vmatprep.subr.bf16.mxu0 0
        %3887 = vmatpush1.bf16.xpose.msra.mxu0 0
        %3888 = vmatprep.mubr.bf16.mxu0 0
        %3889 = vmatmul.mubr.bf16.gmra.mrb[0].mxu0 %v3851
        %v3890 = vpop.f32.mrb[0].mxu0
        %v3891 = vadd.f32 0.0, %v3890
        %v3892 = vpop.f32.mrb[0].mxu0
        %v3893 = vpop.f32.mrb[0].mxu0
        %v3894 = vpop.f32.mrb[0].mxu0
        %3895 = vdwg.mxu0
        %v3896 = vsel %vm1193, %v3891, -inf
        %3897 = vmax.xlane.f32.xlu0 %v3896
        %v3898 = vpop.xlane.xlu0 %3897
        %v3899 = vsub.f32 %v3891, %v3898
        %v3900 = vmul.f32 %v3899, 1.442695
        %v3901 = vpow.pop %v3900
        %v3902 = vsel %vm1193, %v3901, 0.0
        %3903 = vadd.xlane.f32.xlu0 %v3902
        %v3904 = vpop.xlane.xlu0 %3903
        %v3905 = vrcp.pop %v3904
        %v3906 = vmul.f32 %v3901, %v3905
        %v3907 = vpack.c.bf16 %v3906, %v3906
        %v3909 = vsel %vm1206, %v3907, 0
        %v3912 = vand.u32 %v3849, %v1213
        %3914 = vmatprep.subr.bf16.mxu0 0
        %3915 = vmatpush1.bf16.msra.mxu0 %v3912
        %3916 = vmatprep.subr.bf16.mxu0 0
        %3917 = vmatpush1.bf16.msra.mxu0 0
        %3918 = vmatprep.subr.bf16.mxu0 0
        %3919 = vmatpush1.bf16.msra.mxu0 0
        %3920 = vmatprep.subr.bf16.mxu0 0
        %3921 = vmatpush1.bf16.msra.mxu0 0
        %3922 = vmatprep.subr.bf16.mxu0 0
        %3923 = vmatpush1.bf16.msra.mxu0 0
        %3924 = vmatprep.subr.bf16.mxu0 0
        %3925 = vmatpush1.bf16.msra.mxu0 0
        %3926 = vmatprep.subr.bf16.mxu0 0
        %3927 = vmatpush1.bf16.msra.mxu0 0
        %3928 = vmatprep.subr.bf16.mxu0 0
        %3929 = vmatpush1.bf16.msra.mxu0 0
        %3930 = vmatprep.subr.bf16.mxu0 0
        %3931 = vmatpush1.bf16.msra.mxu0 0
        %3932 = vmatprep.subr.bf16.mxu0 0
        %3933 = vmatpush1.bf16.msra.mxu0 0
        %3934 = vmatprep.subr.bf16.mxu0 0
        %3935 = vmatpush1.bf16.msra.mxu0 0
        %3936 = vmatprep.subr.bf16.mxu0 0
        %3937 = vmatpush1.bf16.msra.mxu0 0
        %3938 = vmatprep.subr.bf16.mxu0 0
        %3939 = vmatpush1.bf16.msra.mxu0 0
        %3940 = vmatprep.subr.bf16.mxu0 0
        %3941 = vmatpush1.bf16.msra.mxu0 0
        %3942 = vmatprep.subr.bf16.mxu0 0
        %3943 = vmatpush1.bf16.msra.mxu0 0
        %3944 = vmatprep.subr.bf16.mxu0 0
        %3945 = vmatpush1.bf16.msra.mxu0 0
        %3946 = vmatprep.mubr.bf16.mxu0 0
        %3947 = vmatmul.mubr.bf16.gmra.mrb[0].mxu0 %v3909
        %v3948 = vpop.f32.mrb[0].mxu0
        %v3949 = vadd.f32 0.0, %v3948
        %v3950 = vpop.f32.mrb[0].mxu0
        %v3951 = vpop.f32.mrb[0].mxu0
        %v3952 = vpop.f32.mrb[0].mxu0
        %3953 = vdwg.mxu0
        %v3954 = vpack.c.bf16 %v3949, %v3949
        %s3955 = scalar_lea.vmem %s14, 48
        %v3956 = vld [vmem:[%s3955] sm:$0xf]
        %v3957 = vld [vmem:[%s3955 + $0x4] sm:$0xf]
        %v3960 = vunpack.c.l.b16 %v3956
        %v3961 = vunpack.c.l.b16 %v3957
        %v3962 = vpack.c.b16 %v3961, %v3960
        %v3965 = vsel %vm1146, %v3954, 0
        %3967 = vmatprep.subr.bf16.mxu0 0
        %3968 = vmatpush1.bf16.msra.mxu0 %v3962
        %3969 = vmatprep.subr.bf16.mxu0 0
        %3970 = vmatpush1.bf16.msra.mxu0 0
        %3971 = vmatprep.subr.bf16.mxu0 0
        %3972 = vmatpush1.bf16.msra.mxu0 0
        %3973 = vmatprep.subr.bf16.mxu0 0
        %3974 = vmatpush1.bf16.msra.mxu0 0
        %3975 = vmatprep.subr.bf16.mxu0 0
        %3976 = vmatpush1.bf16.msra.mxu0 0
        %3977 = vmatprep.subr.bf16.mxu0 0
        %3978 = vmatpush1.bf16.msra.mxu0 0
        %3979 = vmatprep.subr.bf16.mxu0 0
        %3980 = vmatpush1.bf16.msra.mxu0 0
        %3981 = vmatprep.subr.bf16.mxu0 0
        %3982 = vmatpush1.bf16.msra.mxu0 0
        %3983 = vmatprep.subr.bf16.mxu0 0
        %3984 = vmatpush1.bf16.msra.mxu0 0
        %3985 = vmatprep.subr.bf16.mxu0 0
        %3986 = vmatpush1.bf16.msra.mxu0 0
        %3987 = vmatprep.subr.bf16.mxu0 0
        %3988 = vmatpush1.bf16.msra.mxu0 0
        %3989 = vmatprep.subr.bf16.mxu0 0
        %3990 = vmatpush1.bf16.msra.mxu0 0
        %3991 = vmatprep.subr.bf16.mxu0 0
        %3992 = vmatpush1.bf16.msra.mxu0 0
        %3993 = vmatprep.subr.bf16.mxu0 0
        %3994 = vmatpush1.bf16.msra.mxu0 0
        %3995 = vmatprep.subr.bf16.mxu0 0
        %3996 = vmatpush1.bf16.msra.mxu0 0
        %3997 = vmatprep.subr.bf16.mxu0 0
        %3998 = vmatpush1.bf16.msra.mxu0 0
        %3999 = vmatprep.mubr.bf16.mxu0 0
        %4000 = vmatmul.mubr.bf16.gmra.mrb[0].mxu0 %v3965
        %v4001 = vpop.f32.mrb[0].mxu0
        %v4002 = vadd.f32 0.0, %v4001
        %v4003 = vpop.f32.mrb[0].mxu0
        %v4004 = vpop.f32.mrb[0].mxu0
        %v4005 = vpop.f32.mrb[0].mxu0
        %4006 = vdwg.mxu0
        %v4007 = vadd.f32 %v3599, %v4002
        %s4008 = scalar_lea.vmem %s8, 224
        %v4009 = vld [vmem:[%s4008] sm:$0xf]
        %v4010 = vld [vmem:[%s4008 + $0x4] sm:$0xf]
        %v4011 = vld [vmem:[%s4008 + $0x8] sm:$0xf]
        %v4012 = vld [vmem:[%s4008 + $0xc] sm:$0xf]
        %v4013 = vld [vmem:[%s4008 + $0x10] sm:$0xf]
        %v4014 = vld [vmem:[%s4008 + $0x14] sm:$0xf]
        %v4015 = vld [vmem:[%s4008 + $0x18] sm:$0xf]
        %v4016 = vld [vmem:[%s4008 + $0x1c] sm:$0xf]
        %s4017 = scalar_lea.vmem %s9, 7
        %v4018 = vld [vmem:[%s4017] sm:$0x1]
        %v4020 = vlaneseq
        %v4021 = vshrl.u32 %v4020, 7
        %v4022 = vsub.s32 0, %v4021
        %v4023 = vrot.slane %v4018, %v4022
        %v4033 = vunpack.c.l.b16 %v4009
        %v4034 = vunpack.c.l.b16 %v4010
        %v4035 = vunpack.c.l.b16 %v4011
        %v4036 = vunpack.c.l.b16 %v4012
        %v4037 = vunpack.c.l.b16 %v4013
        %v4038 = vunpack.c.l.b16 %v4014
        %v4039 = vunpack.c.l.b16 %v4015
        %v4040 = vunpack.c.l.b16 %v4016
        %v4041 = vpack.c.b16 %v4034, %v4033
        %v4042 = vpack.c.b16 %v4036, %v4035
        %v4043 = vpack.c.b16 %v4038, %v4037
        %v4044 = vpack.c.b16 %v4040, %v4039
        %4049 = vmatprep.subr.bf16.mxu0 0
        %4050 = vmatpush1.bf16.msra.mxu0 %v4041
        %4051 = vmatprep.subr.bf16.mxu0 0
        %4052 = vmatpush1.bf16.msra.mxu0 %v4042
        %4053 = vmatprep.subr.bf16.mxu0 0
        %4054 = vmatpush1.bf16.msra.mxu0 %v4043
        %4055 = vmatprep.subr.bf16.mxu0 0
        %4056 = vmatpush1.bf16.msra.mxu0 %v4044
        %4057 = vmatprep.subr.bf16.mxu0 0
        %4058 = vmatpush1.bf16.msra.mxu0 0
        %4059 = vmatprep.subr.bf16.mxu0 0
        %4060 = vmatpush1.bf16.msra.mxu0 0
        %4061 = vmatprep.subr.bf16.mxu0 0
        %4062 = vmatpush1.bf16.msra.mxu0 0
        %4063 = vmatprep.subr.bf16.mxu0 0
        %4064 = vmatpush1.bf16.msra.mxu0 0
        %4065 = vmatprep.subr.bf16.mxu0 0
        %4066 = vmatpush1.bf16.msra.mxu0 0
        %4067 = vmatprep.subr.bf16.mxu0 0
        %4068 = vmatpush1.bf16.msra.mxu0 0
        %4069 = vmatprep.subr.bf16.mxu0 0
        %4070 = vmatpush1.bf16.msra.mxu0 0
        %4071 = vmatprep.subr.bf16.mxu0 0
        %4072 = vmatpush1.bf16.msra.mxu0 0
        %4073 = vmatprep.subr.bf16.mxu0 0
        %4074 = vmatpush1.bf16.msra.mxu0 0
        %4075 = vmatprep.subr.bf16.mxu0 0
        %4076 = vmatpush1.bf16.msra.mxu0 0
        %4077 = vmatprep.subr.bf16.mxu0 0
        %4078 = vmatpush1.bf16.msra.mxu0 0
        %4079 = vmatprep.subr.bf16.mxu0 0
        %4080 = vmatpush1.bf16.msra.mxu0 0
        %4081 = vmatprep.mubr.bf16.mxu0 0
        %4082 = vmatmul.mubr.bf16.gmra.mrb[0].mxu0 %v2837
        %v4083 = vpop.f32.mrb[0].mxu0
        %v4084 = vadd.f32 %v4023, %v4083
        %v4085 = vpop.f32.mrb[0].mxu0
        %v4086 = vpop.f32.mrb[0].mxu0
        %v4087 = vpop.f32.mrb[0].mxu0
        %4088 = vdwg.mxu0
        %v4089 = vpack.c.bf16 %v4084, %v4084
        %s4090 = scalar_lea.vmem %s10, 224
        %v4091 = vld [vmem:[%s4090] sm:$0xf]
        %v4092 = vld [vmem:[%s4090 + $0x4] sm:$0xf]
        %v4093 = vld [vmem:[%s4090 + $0x8] sm:$0xf]
        %v4094 = vld [vmem:[%s4090 + $0xc] sm:$0xf]
        %v4095 = vld [vmem:[%s4090 + $0x10] sm:$0xf]
        %v4096 = vld [vmem:[%s4090 + $0x14] sm:$0xf]
        %v4097 = vld [vmem:[%s4090 + $0x18] sm:$0xf]
        %v4098 = vld [vmem:[%s4090 + $0x1c] sm:$0xf]
        %s4099 = scalar_lea.vmem %s11, 7
        %v4100 = vld [vmem:[%s4099] sm:$0x1]
        %v4102 = vlaneseq
        %v4103 = vshrl.u32 %v4102, 7
        %v4104 = vsub.s32 0, %v4103
        %v4105 = vrot.slane %v4100, %v4104
        %v4115 = vunpack.c.l.b16 %v4091
        %v4116 = vunpack.c.l.b16 %v4092
        %v4117 = vunpack.c.l.b16 %v4093
        %v4118 = vunpack.c.l.b16 %v4094
        %v4119 = vunpack.c.l.b16 %v4095
        %v4120 = vunpack.c.l.b16 %v4096
        %v4121 = vunpack.c.l.b16 %v4097
        %v4122 = vunpack.c.l.b16 %v4098
        %v4123 = vpack.c.b16 %v4116, %v4115
        %v4124 = vpack.c.b16 %v4118, %v4117
        %v4125 = vpack.c.b16 %v4120, %v4119
        %v4126 = vpack.c.b16 %v4122, %v4121
        %4131 = vmatprep.subr.bf16.mxu0 0
        %4132 = vmatpush1.bf16.msra.mxu0 %v4123
        %4133 = vmatprep.subr.bf16.mxu0 0
        %4134 = vmatpush1.bf16.msra.mxu0 %v4124
        %4135 = vmatprep.subr.bf16.mxu0 0
        %4136 = vmatpush1.bf16.msra.mxu0 %v4125
        %4137 = vmatprep.subr.bf16.mxu0 0
        %4138 = vmatpush1.bf16.msra.mxu0 %v4126
        %4139 = vmatprep.subr.bf16.mxu0 0
        %4140 = vmatpush1.bf16.msra.mxu0 0
        %4141 = vmatprep.subr.bf16.mxu0 0
        %4142 = vmatpush1.bf16.msra.mxu0 0
        %4143 = vmatprep.subr.bf16.mxu0 0
        %4144 = vmatpush1.bf16.msra.mxu0 0
        %4145 = vmatprep.subr.bf16.mxu0 0
        %4146 = vmatpush1.bf16.msra.mxu0 0
        %4147 = vmatprep.subr.bf16.mxu0 0
        %4148 = vmatpush1.bf16.msra.mxu0 0
        %4149 = vmatprep.subr.bf16.mxu0 0
        %4150 = vmatpush1.bf16.msra.mxu0 0
        %4151 = vmatprep.subr.bf16.mxu0 0
        %4152 = vmatpush1.bf16.msra.mxu0 0
        %4153 = vmatprep.subr.bf16.mxu0 0
        %4154 = vmatpush1.bf16.msra.mxu0 0
        %4155 = vmatprep.subr.bf16.mxu0 0
        %4156 = vmatpush1.bf16.msra.mxu0 0
        %4157 = vmatprep.subr.bf16.mxu0 0
        %4158 = vmatpush1.bf16.msra.mxu0 0
        %4159 = vmatprep.subr.bf16.mxu0 0
        %4160 = vmatpush1.bf16.msra.mxu0 0
        %4161 = vmatprep.subr.bf16.mxu0 0
        %4162 = vmatpush1.bf16.msra.mxu0 0
        %4163 = vmatprep.mubr.bf16.mxu0 0
        %4164 = vmatmul.mubr.bf16.gmra.mrb[0].mxu0 %v2837
        %v4165 = vpop.f32.mrb[0].mxu0
        %v4166 = vadd.f32 %v4105, %v4165
        %v4167 = vpop.f32.mrb[0].mxu0
        %v4168 = vpop.f32.mrb[0].mxu0
        %v4169 = vpop.f32.mrb[0].mxu0
        %4170 = vdwg.mxu0
        %v4171 = vpack.c.bf16 %v4166, %v4166
        %s4172 = scalar_lea.vmem %s12, 224
        %v4173 = vld [vmem:[%s4172] sm:$0xf]
        %v4174 = vld [vmem:[%s4172 + $0x4] sm:$0xf]
        %v4175 = vld [vmem:[%s4172 + $0x8] sm:$0xf]
        %v4176 = vld [vmem:[%s4172 + $0xc] sm:$0xf]
        %v4177 = vld [vmem:[%s4172 + $0x10] sm:$0xf]
        %v4178 = vld [vmem:[%s4172 + $0x14] sm:$0xf]
        %v4179 = vld [vmem:[%s4172 + $0x18] sm:$0xf]
        %v4180 = vld [vmem:[%s4172 + $0x1c] sm:$0xf]
        %s4181 = scalar_lea.vmem %s13, 7
        %v4182 = vld [vmem:[%s4181] sm:$0x1]
        %v4184 = vlaneseq
        %v4185 = vshrl.u32 %v4184, 7
        %v4186 = vsub.s32 0, %v4185
        %v4187 = vrot.slane %v4182, %v4186
        %v4197 = vunpack.c.l.b16 %v4173
        %v4198 = vunpack.c.l.b16 %v4174
        %v4199 = vunpack.c.l.b16 %v4175
        %v4200 = vunpack.c.l.b16 %v4176
        %v4201 = vunpack.c.l.b16 %v4177
        %v4202 = vunpack.c.l.b16 %v4178
        %v4203 = vunpack.c.l.b16 %v4179
        %v4204 = vunpack.c.l.b16 %v4180
        %v4205 = vpack.c.b16 %v4198, %v4197
        %v4206 = vpack.c.b16 %v4200, %v4199
        %v4207 = vpack.c.b16 %v4202, %v4201
        %v4208 = vpack.c.b16 %v4204, %v4203
        %4213 = vmatprep.subr.bf16.mxu0 0
        %4214 = vmatpush1.bf16.msra.mxu0 %v4205
        %4215 = vmatprep.subr.bf16.mxu0 0
        %4216 = vmatpush1.bf16.msra.mxu0 %v4206
        %4217 = vmatprep.subr.bf16.mxu0 0
        %4218 = vmatpush1.bf16.msra.mxu0 %v4207
        %4219 = vmatprep.subr.bf16.mxu0 0
        %4220 = vmatpush1.bf16.msra.mxu0 %v4208
        %4221 = vmatprep.subr.bf16.mxu0 0
        %4222 = vmatpush1.bf16.msra.mxu0 0
        %4223 = vmatprep.subr.bf16.mxu0 0
        %4224 = vmatpush1.bf16.msra.mxu0 0
        %4225 = vmatprep.subr.bf16.mxu0 0
        %4226 = vmatpush1.bf16.msra.mxu0 0
        %4227 = vmatprep.subr.bf16.mxu0 0
        %4228 = vmatpush1.bf16.msra.mxu0 0
        %4229 = vmatprep.subr.bf16.mxu0 0
        %4230 = vmatpush1.bf16.msra.mxu0 0
        %4231 = vmatprep.subr.bf16.mxu0 0
        %4232 = vmatpush1.bf16.msra.mxu0 0
        %4233 = vmatprep.subr.bf16.mxu0 0
        %4234 = vmatpush1.bf16.msra.mxu0 0
        %4235 = vmatprep.subr.bf16.mxu0 0
        %4236 = vmatpush1.bf16.msra.mxu0 0
        %4237 = vmatprep.subr.bf16.mxu0 0
        %4238 = vmatpush1.bf16.msra.mxu0 0
        %4239 = vmatprep.subr.bf16.mxu0 0
        %4240 = vmatpush1.bf16.msra.mxu0 0
        %4241 = vmatprep.subr.bf16.mxu0 0
        %4242 = vmatpush1.bf16.msra.mxu0 0
        %4243 = vmatprep.subr.bf16.mxu0 0
        %4244 = vmatpush1.bf16.msra.mxu0 0
        %4245 = vmatprep.mubr.bf16.mxu0 0
        %4246 = vmatmul.mubr.bf16.gmra.mrb[0].mxu0 %v2837
        %v4247 = vpop.f32.mrb[0].mxu0
        %v4248 = vadd.f32 %v4187, %v4247
        %v4249 = vpop.f32.mrb[0].mxu0
        %v4250 = vpop.f32.mrb[0].mxu0
        %v4251 = vpop.f32.mrb[0].mxu0
        %4252 = vdwg.mxu0
        %v4253 = vpack.c.bf16 %v4248, %v4248
        %v4255 = vsel %vm1146, %v4089, 0
        %v4258 = vsel %vm1146, %v4171, 0
        %4260 = vmatprep.subr.bf16.mxu0 0
        %4261 = vmatpush1.bf16.xpose.msra.mxu0 %v4258
        %4262 = vmatprep.subr.bf16.mxu0 0
        %4263 = vmatpush1.bf16.xpose.msra.mxu0 0
        %4264 = vmatprep.subr.bf16.mxu0 0
        %4265 = vmatpush1.bf16.xpose.msra.mxu0 0
        %4266 = vmatprep.subr.bf16.mxu0 0
        %4267 = vmatpush1.bf16.xpose.msra.mxu0 0
        %4268 = vmatprep.subr.bf16.mxu0 0
        %4269 = vmatpush1.bf16.xpose.msra.mxu0 0
        %4270 = vmatprep.subr.bf16.mxu0 0
        %4271 = vmatpush1.bf16.xpose.msra.mxu0 0
        %4272 = vmatprep.subr.bf16.mxu0 0
        %4273 = vmatpush1.bf16.xpose.msra.mxu0 0
        %4274 = vmatprep.subr.bf16.mxu0 0
        %4275 = vmatpush1.bf16.xpose.msra.mxu0 0
        %4276 = vmatprep.subr.bf16.mxu0 0
        %4277 = vmatpush1.bf16.xpose.msra.mxu0 0
        %4278 = vmatprep.subr.bf16.mxu0 0
        %4279 = vmatpush1.bf16.xpose.msra.mxu0 0
        %4280 = vmatprep.subr.bf16.mxu0 0
        %4281 = vmatpush1.bf16.xpose.msra.mxu0 0
        %4282 = vmatprep.subr.bf16.mxu0 0
        %4283 = vmatpush1.bf16.xpose.msra.mxu0 0
        %4284 = vmatprep.subr.bf16.mxu0 0
        %4285 = vmatpush1.bf16.xpose.msra.mxu0 0
        %4286 = vmatprep.subr.bf16.mxu0 0
        %4287 = vmatpush1.bf16.xpose.msra.mxu0 0
        %4288 = vmatprep.subr.bf16.mxu0 0
        %4289 = vmatpush1.bf16.xpose.msra.mxu0 0
        %4290 = vmatprep.subr.bf16.mxu0 0
        %4291 = vmatpush1.bf16.xpose.msra.mxu0 0
        %4292 = vmatprep.mubr.bf16.mxu0 0
        %4293 = vmatmul.mubr.bf16.gmra.mrb[0].mxu0 %v4255
        %v4294 = vpop.f32.mrb[0].mxu0
        %v4295 = vadd.f32 0.0, %v4294
        %v4296 = vpop.f32.mrb[0].mxu0
        %v4297 = vpop.f32.mrb[0].mxu0
        %v4298 = vpop.f32.mrb[0].mxu0
        %4299 = vdwg.mxu0
        %v4300 = vsel %vm1193, %v4295, -inf
        %4301 = vmax.xlane.f32.xlu0 %v4300
        %v4302 = vpop.xlane.xlu0 %4301
        %v4303 = vsub.f32 %v4295, %v4302
        %v4304 = vmul.f32 %v4303, 1.442695
        %v4305 = vpow.pop %v4304
        %v4306 = vsel %vm1193, %v4305, 0.0
        %4307 = vadd.xlane.f32.xlu0 %v4306
        %v4308 = vpop.xlane.xlu0 %4307
        %v4309 = vrcp.pop %v4308
        %v4310 = vmul.f32 %v4305, %v4309
        %v4311 = vpack.c.bf16 %v4310, %v4310
        %v4313 = vsel %vm1206, %v4311, 0
        %v4316 = vand.u32 %v4253, %v1213
        %4318 = vmatprep.subr.bf16.mxu0 0
        %4319 = vmatpush1.bf16.msra.mxu0 %v4316
        %4320 = vmatprep.subr.bf16.mxu0 0
        %4321 = vmatpush1.bf16.msra.mxu0 0
        %4322 = vmatprep.subr.bf16.mxu0 0
        %4323 = vmatpush1.bf16.msra.mxu0 0
        %4324 = vmatprep.subr.bf16.mxu0 0
        %4325 = vmatpush1.bf16.msra.mxu0 0
        %4326 = vmatprep.subr.bf16.mxu0 0
        %4327 = vmatpush1.bf16.msra.mxu0 0
        %4328 = vmatprep.subr.bf16.mxu0 0
        %4329 = vmatpush1.bf16.msra.mxu0 0
        %4330 = vmatprep.subr.bf16.mxu0 0
        %4331 = vmatpush1.bf16.msra.mxu0 0
        %4332 = vmatprep.subr.bf16.mxu0 0
        %4333 = vmatpush1.bf16.msra.mxu0 0
        %4334 = vmatprep.subr.bf16.mxu0 0
        %4335 = vmatpush1.bf16.msra.mxu0 0
        %4336 = vmatprep.subr.bf16.mxu0 0
        %4337 = vmatpush1.bf16.msra.mxu0 0
        %4338 = vmatprep.subr.bf16.mxu0 0
        %4339 = vmatpush1.bf16.msra.mxu0 0
        %4340 = vmatprep.subr.bf16.mxu0 0
        %4341 = vmatpush1.bf16.msra.mxu0 0
        %4342 = vmatprep.subr.bf16.mxu0 0
        %4343 = vmatpush1.bf16.msra.mxu0 0
        %4344 = vmatprep.subr.bf16.mxu0 0
        %4345 = vmatpush1.bf16.msra.mxu0 0
        %4346 = vmatprep.subr.bf16.mxu0 0
        %4347 = vmatpush1.bf16.msra.mxu0 0
        %4348 = vmatprep.subr.bf16.mxu0 0
        %4349 = vmatpush1.bf16.msra.mxu0 0
        %4350 = vmatprep.mubr.bf16.mxu0 0
        %4351 = vmatmul.mubr.bf16.gmra.mrb[0].mxu0 %v4313
        %v4352 = vpop.f32.mrb[0].mxu0
        %v4353 = vadd.f32 0.0, %v4352
        %v4354 = vpop.f32.mrb[0].mxu0
        %v4355 = vpop.f32.mrb[0].mxu0
        %v4356 = vpop.f32.mrb[0].mxu0
        %4357 = vdwg.mxu0
        %v4358 = vpack.c.bf16 %v4353, %v4353
        %s4359 = scalar_lea.vmem %s14, 56
        %v4360 = vld [vmem:[%s4359] sm:$0xf]
        %v4361 = vld [vmem:[%s4359 + $0x4] sm:$0xf]
        %v4364 = vunpack.c.l.b16 %v4360
        %v4365 = vunpack.c.l.b16 %v4361
        %v4366 = vpack.c.b16 %v4365, %v4364
        %v4369 = vsel %vm1146, %v4358, 0
        %4371 = vmatprep.subr.bf16.mxu0 0
        %4372 = vmatpush1.bf16.msra.mxu0 %v4366
        %4373 = vmatprep.subr.bf16.mxu0 0
        %4374 = vmatpush1.bf16.msra.mxu0 0
        %4375 = vmatprep.subr.bf16.mxu0 0
        %4376 = vmatpush1.bf16.msra.mxu0 0
        %4377 = vmatprep.subr.bf16.mxu0 0
        %4378 = vmatpush1.bf16.msra.mxu0 0
        %4379 = vmatprep.subr.bf16.mxu0 0
        %4380 = vmatpush1.bf16.msra.mxu0 0
        %4381 = vmatprep.subr.bf16.mxu0 0
        %4382 = vmatpush1.bf16.msra.mxu0 0
        %4383 = vmatprep.subr.bf16.mxu0 0
        %4384 = vmatpush1.bf16.msra.mxu0 0
        %4385 = vmatprep.subr.bf16.mxu0 0
        %4386 = vmatpush1.bf16.msra.mxu0 0
        %4387 = vmatprep.subr.bf16.mxu0 0
        %4388 = vmatpush1.bf16.msra.mxu0 0
        %4389 = vmatprep.subr.bf16.mxu0 0
        %4390 = vmatpush1.bf16.msra.mxu0 0
        %4391 = vmatprep.subr.bf16.mxu0 0
        %4392 = vmatpush1.bf16.msra.mxu0 0
        %4393 = vmatprep.subr.bf16.mxu0 0
        %4394 = vmatpush1.bf16.msra.mxu0 0
        %4395 = vmatprep.subr.bf16.mxu0 0
        %4396 = vmatpush1.bf16.msra.mxu0 0
        %4397 = vmatprep.subr.bf16.mxu0 0
        %4398 = vmatpush1.bf16.msra.mxu0 0
        %4399 = vmatprep.subr.bf16.mxu0 0
        %4400 = vmatpush1.bf16.msra.mxu0 0
        %4401 = vmatprep.subr.bf16.mxu0 0
        %4402 = vmatpush1.bf16.msra.mxu0 0
        %4403 = vmatprep.mubr.bf16.mxu0 0
        %4404 = vmatmul.mubr.bf16.gmra.mrb[0].mxu0 %v4369
        %v4405 = vpop.f32.mrb[0].mxu0
        %v4406 = vadd.f32 0.0, %v4405
        %v4407 = vpop.f32.mrb[0].mxu0
        %v4408 = vpop.f32.mrb[0].mxu0
        %v4409 = vpop.f32.mrb[0].mxu0
        %4410 = vdwg.mxu0
        %v4411 = vadd.f32 %v4007, %v4406
        %v4412 = vadd.f32 %v2762, %v4411
        %s4413 = scalar_lea.vmem %s15, 1
        %v4414 = vld [vmem:[%s4413] sm:$0x1]
        %v4416 = vlaneseq
        %v4417 = vshrl.u32 %v4416, 7
        %v4418 = vsub.s32 0, %v4417
        %v4419 = vrot.slane %v4414, %v4418
        %v4421 = vadd.f32 %v4412, %v4419
        %s4422 = scalar_lea.vmem %s16, 1
        %v4423 = vld [vmem:[%s4422] sm:$0x1]
        %s4424 = scalar_lea.vmem %s17, 1
        %v4425 = vld [vmem:[%s4424] sm:$0x1]
        %v4426 = vsel %vm844, %v4421, 0.0
        %4427 = vadd.xlane.f32.xlu0 %v4426
        %v4428 = vpop.xlane.xlu0 %4427
        %v4429 = vmul.f32 %v4428, %v848
        %v4430 = vsub.f32 %v4421, %v4429
        %v4431 = vmul.f32 %v4430, %v4430
        %v4432 = vsel %vm844, %v4431, 0.0
        %4433 = vadd.xlane.f32.xlu0 %v4432
        %v4434 = vpop.xlane.xlu0 %4433
        %v4435 = vmul.f32 %v4434, %v848
        %v4436 = vadd.f32 %v4435, 1e-05
        %v4437 = vrsqrt.pop %v4436
        %v4438 = vmul.f32 %v4430, %v4437
        %v4440 = vlaneseq
        %v4441 = vshrl.u32 %v4440, 7
        %v4442 = vsub.s32 0, %v4441
        %v4443 = vrot.slane %v4423, %v4442
        %v4445 = vmul.f32 %v4438, %v4443
        %v4447 = vlaneseq
        %v4448 = vshrl.u32 %v4447, 7
        %v4449 = vsub.s32 0, %v4448
        %v4450 = vrot.slane %v4425, %v4449
        %v4452 = vadd.f32 %v4445, %v4450
        %v4453 = vpack.c.bf16 %v4452, %v4452
        %s4454 = scalar_lea.vmem %s18, 32
        %v4455 = vld [vmem:[%s4454] sm:$0xf]
        %v4456 = vld [vmem:[%s4454 + $0x4] sm:$0xf]
        %v4457 = vld [vmem:[%s4454 + $0x8] sm:$0xf]
        %v4458 = vld [vmem:[%s4454 + $0xc] sm:$0xf]
        %v4459 = vld [vmem:[%s4454 + $0x10] sm:$0xf]
        %v4460 = vld [vmem:[%s4454 + $0x14] sm:$0xf]
        %v4461 = vld [vmem:[%s4454 + $0x18] sm:$0xf]
        %v4462 = vld [vmem:[%s4454 + $0x1c] sm:$0xf]
        %s4463 = scalar_lea.vmem %s19, 1
        %v4464 = vld [vmem:[%s4463] sm:$0x1]
        %v4466 = vlaneseq
        %v4467 = vshrl.u32 %v4466, 7
        %v4468 = vsub.s32 0, %v4467
        %v4469 = vrot.slane %v4464, %v4468
        %v4479 = vunpack.c.l.b16 %v4455
        %v4480 = vunpack.c.l.b16 %v4456
        %v4481 = vunpack.c.l.b16 %v4457
        %v4482 = vunpack.c.l.b16 %v4458
        %v4483 = vunpack.c.l.b16 %v4459
        %v4484 = vunpack.c.l.b16 %v4460
        %v4485 = vunpack.c.l.b16 %v4461
        %v4486 = vunpack.c.l.b16 %v4462
        %v4487 = vpack.c.b16 %v4480, %v4479
        %v4488 = vpack.c.b16 %v4482, %v4481
        %v4489 = vpack.c.b16 %v4484, %v4483
        %v4490 = vpack.c.b16 %v4486, %v4485
        %v4496 = vsel %vm790, %v4453, 0
        %4498 = vmatprep.subr.bf16.mxu0 0
        %4499 = vmatpush1.bf16.msra.mxu0 %v4487
        %4500 = vmatprep.subr.bf16.mxu0 0
        %4501 = vmatpush1.bf16.msra.mxu0 %v4488
        %4502 = vmatprep.subr.bf16.mxu0 0
        %4503 = vmatpush1.bf16.msra.mxu0 %v4489
        %4504 = vmatprep.subr.bf16.mxu0 0
        %4505 = vmatpush1.bf16.msra.mxu0 %v4490
        %4506 = vmatprep.subr.bf16.mxu0 0
        %4507 = vmatpush1.bf16.msra.mxu0 0
        %4508 = vmatprep.subr.bf16.mxu0 0
        %4509 = vmatpush1.bf16.msra.mxu0 0
        %4510 = vmatprep.subr.bf16.mxu0 0
        %4511 = vmatpush1.bf16.msra.mxu0 0
        %4512 = vmatprep.subr.bf16.mxu0 0
        %4513 = vmatpush1.bf16.msra.mxu0 0
        %4514 = vmatprep.subr.bf16.mxu0 0
        %4515 = vmatpush1.bf16.msra.mxu0 0
        %4516 = vmatprep.subr.bf16.mxu0 0
        %4517 = vmatpush1.bf16.msra.mxu0 0
        %4518 = vmatprep.subr.bf16.mxu0 0
        %4519 = vmatpush1.bf16.msra.mxu0 0
        %4520 = vmatprep.subr.bf16.mxu0 0
        %4521 = vmatpush1.bf16.msra.mxu0 0
        %4522 = vmatprep.subr.bf16.mxu0 0
        %4523 = vmatpush1.bf16.msra.mxu0 0
        %4524 = vmatprep.subr.bf16.mxu0 0
        %4525 = vmatpush1.bf16.msra.mxu0 0
        %4526 = vmatprep.subr.bf16.mxu0 0
        %4527 = vmatpush1.bf16.msra.mxu0 0
        %4528 = vmatprep.subr.bf16.mxu0 0
        %4529 = vmatpush1.bf16.msra.mxu0 0
        %4530 = vmatprep.mubr.bf16.mxu0 0
        %4531 = vmatmul.mubr.bf16.gmra.mrb[0].mxu0 %v4496
        %v4532 = vpop.f32.mrb[0].mxu0
        %v4533 = vadd.f32 %v4469, %v4532
        %v4534 = vpop.f32.mrb[0].mxu0
        %v4535 = vpop.f32.mrb[0].mxu0
        %v4536 = vpop.f32.mrb[0].mxu0
        %4537 = vdwg.mxu0
        %v4538 = vmul.f32 %v4533, 1.702
        %v4539 = vxor.u32 %v4538, 2147483648
        %v4540 = vmul.f32 %v4539, 1.442695
        %v4541 = vpow.pop %v4540
        %v4542 = vadd.f32 %v4541, 1.0
        %v4543 = vrcp.pop %v4542
        %v4544 = vmul.f32 1.0, %v4543
        %v4545 = vmul.f32 %v4533, %v4544
        %v4546 = vpack.c.bf16 %v4545, %v4545
        %s4547 = scalar_lea.vmem %s20, 64
        %v4548 = vld [vmem:[%s4547] sm:$0xf]
        %v4549 = vld [vmem:[%s4547 + $0x4] sm:$0xf]
        %v4550 = vld [vmem:[%s4547 + $0x8] sm:$0xf]
        %v4551 = vld [vmem:[%s4547 + $0xc] sm:$0xf]
        %v4552 = vld [vmem:[%s4547 + $0x10] sm:$0xf]
        %v4553 = vld [vmem:[%s4547 + $0x14] sm:$0xf]
        %v4554 = vld [vmem:[%s4547 + $0x18] sm:$0xf]
        %v4555 = vld [vmem:[%s4547 + $0x1c] sm:$0xf]
        %v4556 = vld [vmem:[%s4547 + $0x20] sm:$0xf]
        %v4557 = vld [vmem:[%s4547 + $0x24] sm:$0xf]
        %v4558 = vld [vmem:[%s4547 + $0x28] sm:$0xf]
        %v4559 = vld [vmem:[%s4547 + $0x2c] sm:$0xf]
        %v4560 = vld [vmem:[%s4547 + $0x30] sm:$0xf]
        %v4561 = vld [vmem:[%s4547 + $0x34] sm:$0xf]
        %v4562 = vld [vmem:[%s4547 + $0x38] sm:$0xf]
        %v4563 = vld [vmem:[%s4547 + $0x3c] sm:$0xf]
        %v4580 = vunpack.c.l.b16 %v4548
        %v4581 = vunpack.c.l.b16 %v4549
        %v4582 = vunpack.c.l.b16 %v4550
        %v4583 = vunpack.c.l.b16 %v4551
        %v4584 = vunpack.c.l.b16 %v4552
        %v4585 = vunpack.c.l.b16 %v4553
        %v4586 = vunpack.c.l.b16 %v4554
        %v4587 = vunpack.c.l.b16 %v4555
        %v4588 = vunpack.c.l.b16 %v4556
        %v4589 = vunpack.c.l.b16 %v4557
        %v4590 = vunpack.c.l.b16 %v4558
        %v4591 = vunpack.c.l.b16 %v4559
        %v4592 = vunpack.c.l.b16 %v4560
        %v4593 = vunpack.c.l.b16 %v4561
        %v4594 = vunpack.c.l.b16 %v4562
        %v4595 = vunpack.c.l.b16 %v4563
        %v4596 = vpack.c.b16 %v4581, %v4580
        %v4597 = vpack.c.b16 %v4583, %v4582
        %v4598 = vpack.c.b16 %v4585, %v4584
        %v4599 = vpack.c.b16 %v4587, %v4586
        %v4600 = vpack.c.b16 %v4589, %v4588
        %v4601 = vpack.c.b16 %v4591, %v4590
        %v4602 = vpack.c.b16 %v4593, %v4592
        %v4603 = vpack.c.b16 %v4595, %v4594
        %4612 = vmatprep.subr.bf16.mxu0 0
        %4613 = vmatpush1.bf16.msra.mxu0 %v4596
        %4614 = vmatprep.subr.bf16.mxu0 0
        %4615 = vmatpush1.bf16.msra.mxu0 %v4597
        %4616 = vmatprep.subr.bf16.mxu0 0
        %4617 = vmatpush1.bf16.msra.mxu0 %v4598
        %4618 = vmatprep.subr.bf16.mxu0 0
        %4619 = vmatpush1.bf16.msra.mxu0 %v4599
        %4620 = vmatprep.subr.bf16.mxu0 0
        %4621 = vmatpush1.bf16.msra.mxu0 %v4600
        %4622 = vmatprep.subr.bf16.mxu0 0
        %4623 = vmatpush1.bf16.msra.mxu0 %v4601
        %4624 = vmatprep.subr.bf16.mxu0 0
        %4625 = vmatpush1.bf16.msra.mxu0 %v4602
        %4626 = vmatprep.subr.bf16.mxu0 0
        %4627 = vmatpush1.bf16.msra.mxu0 %v4603
        %4628 = vmatprep.subr.bf16.mxu0 0
        %4629 = vmatpush1.bf16.msra.mxu0 0
        %4630 = vmatprep.subr.bf16.mxu0 0
        %4631 = vmatpush1.bf16.msra.mxu0 0
        %4632 = vmatprep.subr.bf16.mxu0 0
        %4633 = vmatpush1.bf16.msra.mxu0 0
        %4634 = vmatprep.subr.bf16.mxu0 0
        %4635 = vmatpush1.bf16.msra.mxu0 0
        %4636 = vmatprep.subr.bf16.mxu0 0
        %4637 = vmatpush1.bf16.msra.mxu0 0
        %4638 = vmatprep.subr.bf16.mxu0 0
        %4639 = vmatpush1.bf16.msra.mxu0 0
        %4640 = vmatprep.subr.bf16.mxu0 0
        %4641 = vmatpush1.bf16.msra.mxu0 0
        %4642 = vmatprep.subr.bf16.mxu0 0
        %4643 = vmatpush1.bf16.msra.mxu0 0
        %4644 = vmatprep.mubr.bf16.mxu0 0
        %4645 = vmatmul.mubr.bf16.gmra.mrb[0].mxu0 %v4546
        %v4646 = vpop.f32.mrb[0].mxu0
        %v4647 = vadd.f32 0.0, %v4646
        %v4648 = vpop.f32.mrb[0].mxu0
        %v4649 = vpop.f32.mrb[0].mxu0
        %v4650 = vpop.f32.mrb[0].mxu0
        %4651 = vdwg.mxu0
        %v4652 = vadd.f32 %v4421, %v4647
        %s4653 = scalar_lea.vmem %s21, 1
        %v4654 = vld [vmem:[%s4653] sm:$0x1]
        %v4656 = vlaneseq
        %v4657 = vshrl.u32 %v4656, 7
        %v4658 = vsub.s32 0, %v4657
        %v4659 = vrot.slane %v4654, %v4658
        %v4661 = vadd.f32 %v4652, %v4659
        %vm4662 = vcmask 520193
        %4663 = vst.msk [vmem:[%s676 - $0x1] sm:$0x1e] %vm4662, %v4661
        %s4664 = sand.u32 %s511, 1
        %s4665 = scalar_lea.sflag [#allocation3], %s4664
        %s4666 = sand.u32 %s511, 1
        %s4667 = smul.addr %s4666, 4
        %s4668 = scalar_lea.vmem [#allocation2], %s4667
        // Predicated region
        $region109: #{clip_vision_tower_forward.1} parent=107 // pred_check
          %p4669 = pneg %p521
        $region110: #{clip_vision_tower_forward.1} parent=107 // pred_check_branch
          %4671 = sbr.rel (%p4669) target = $region112
        $region111: #{clip_vision_tower_forward.1} parent=107 // pred_region
          %s4673 = ssub.s32 64, 64
          %4674 = vsyncadd %s4665, %s4673
          %s4675 = smul.addr %s36, 64
          %s4676 = scalar_lea.hbm %s22, %s4675
          %s4678 = sshll.u32 %s4668, 4
          %s4679 = int_to_ptr.vmem [resolvable:$true] %s4678
          %4681 = dma.vmem_to_hbm [thread:$0]  %s4679, 64, %s4676, %s4665
        $region112: #{clip_vision_tower_forward.1} parent=107 // pred_fallthru
          _
      $region108: #{clip_vision_tower_forward.1} parent=5 // pred_fallthru
        _
      %p4682 = scmp.le.s32.totalorder 2, %s31
      // Predicated region
      $region113: #{clip_vision_tower_forward.1} parent=5 // pred_check
        %p4683 = pneg %p4682
      $region114: #{clip_vision_tower_forward.1} parent=5 // pred_check_branch
        %4685 = sbr.rel (%p4683) target = $region116
      $region115: #{clip_vision_tower_forward.1} parent=5 // pred_region
        %s4686 = ssub.s32 %s31, 2
        // Predicated region
        $region117: #{clip_vision_tower_forward.1} parent=115 // pred_check
          %p4687 = pneg %p527
        $region118: #{clip_vision_tower_forward.1} parent=115 // pred_check_branch
          %4689 = sbr.rel (%p4687) target = $region120
        $region119: #{clip_vision_tower_forward.1} parent=115 // pred_region
          %s4690 = sand.u32 %s512, 1
          %s4691 = scalar_lea.sflag [#allocation3], %s4690
          %s4692 = sand.u32 %s512, 1
          %s4693 = smul.addr %s4692, 4
          %s4694 = scalar_lea.vmem [#allocation2], %s4693
          %4695 = dma.done %s4691, 64
        $region120: #{clip_vision_tower_forward.1} parent=115 // pred_fallthru
          _
      $region116: #{clip_vision_tower_forward.1} parent=5 // pred_fallthru
        _
    $region6: #{clip_vision_tower_forward.1} parent=1 // loop_footer
      %s35 = sadd.s32 1, %s31
    $region7: #{clip_vision_tower_forward.1} parent=1 // loop_footer_branch
      %30 = sbr.rel target = $region3
    $region8: #{clip_vision_tower_forward.1} parent=1 // loop_exit
      _
    %4696 = vsyncpa [#allocation3], 1
    %s4697 = scalar_lea.sflag [#allocation3], 1
    %4698 = vsyncpa %s4697, 1

</llo_original>
